<compile_context>
chip_gen: v7x
topology: tpu7x:2x2x1
jax: 0.10.0
libtpu: 0.0.40
codegen_flags: <defaults>
</compile_context>

<pallas_src>
import jax
import jax.numpy as jnp
from jax.experimental import pallas as pl
from jax.experimental.pallas import tpu as pltpu


def _round_up(x, m):
    return -(-x // m) * m


def _bilstm_head_kernel(x_f_ref, x_b_ref,
                        wih_f_ref, whh_f_ref, b_f_ref,
                        wih_b_ref, whh_b_ref, b_b_ref,
                        wout_f_ref, wout_b_ref, bout_ref,
                        o_ref,
                        gx_f_ref, gx_b_ref,
                        h_f_ref, c_f_ref, h_b_ref, c_b_ref):
    """One (batch block, time block) step of the fused BiLSTM + linear head.

    x_f_ref  : [Tb, Bb, E]  forward-direction time block  (time blocks 0 .. nt-1)
    x_b_ref  : [Tb, Bb, E]  backward-direction time block (time blocks nt-1 .. 0)
    wih_*    : [E, 4Hp]     input->gates weights (pre-transposed, PyTorch gate order i,f,g,o)
    whh_*    : [Hp, 4Hp]    hidden->gates weights (pre-transposed)
    b_*      : [1, 4Hp]     b_ih + b_hh fused (f32)
    wout_f/b : [Hp, O_pad]  output weight split into fwd/bwd halves, lane-padded
    bout     : [1, O_pad]
    o_ref    : [Bb, O_pad]  written only on the last time block
    gx_*_ref : [Tb, Bb, 4Hp] f32 scratch for the hoisted input projections
    h/c refs : [Bb, Hp]     f32 carries, persistent across the time-block sweep
    """
    Tb, Bb, E = x_f_ref.shape
    Hp = whh_f_ref.shape[0]
    t = pl.program_id(1)
    nt = pl.num_programs(1)

    # ---- init carries at the start of this batch block's time sweep ----
    @pl.when(t == 0)
    def _():
        h_f_ref[...] = jnp.zeros_like(h_f_ref)
        c_f_ref[...] = jnp.zeros_like(c_f_ref)
        h_b_ref[...] = jnp.zeros_like(h_b_ref)
        c_b_ref[...] = jnp.zeros_like(c_b_ref)

    # ---- per-time-block input projection: one big matmul per direction, off the
    #      serial path (pipelines against the previous block's recurrence) ----
    x_f = x_f_ref[...].reshape(Tb * Bb, E)
    x_b = x_b_ref[...].reshape(Tb * Bb, E)
    gx_f_ref[...] = (jnp.dot(x_f, wih_f_ref[...], preferred_element_type=jnp.float32)
                     + b_f_ref[...]).reshape(Tb, Bb, 4 * Hp)
    gx_b_ref[...] = (jnp.dot(x_b, wih_b_ref[...], preferred_element_type=jnp.float32)
                     + b_b_ref[...]).reshape(Tb, Bb, 4 * Hp)

    whh_f = whh_f_ref[...]
    whh_b = whh_b_ref[...]
    rdt = whh_f.dtype

    def gate_update(gates, c):
        # PyTorch LSTM gate order i, f, g, o.  Gate math kept in f32.
        # Hp is a multiple of 128, so every slice is 128-lane aligned.
        i = jax.nn.sigmoid(gates[:, 0 * Hp:1 * Hp])
        f = jax.nn.sigmoid(gates[:, 1 * Hp:2 * Hp])
        g = jnp.tanh(gates[:, 2 * Hp:3 * Hp])
        o = jax.nn.sigmoid(gates[:, 3 * Hp:4 * Hp])
        c_new = f * c + i * g
        h_new = o * jnp.tanh(c_new)
        return h_new, c_new

    # ---- interleaved fwd/bwd recurrence over this time block (bounded unroll) ----
    # Backward direction consumes its block's time steps in reverse (Tb-1-i).
    def step(i, carry):
        h_f, c_f, h_b, c_b = carry
        gates_f = gx_f_ref[i] + jnp.dot(h_f.astype(rdt), whh_f,
                                        preferred_element_type=jnp.float32)
        gates_b = gx_b_ref[Tb - 1 - i] + jnp.dot(h_b.astype(rdt), whh_b,
                                                 preferred_element_type=jnp.float32)
        h_f, c_f = gate_update(gates_f, c_f)
        h_b, c_b = gate_update(gates_b, c_b)
        return h_f, c_f, h_b, c_b

    carry0 = (h_f_ref[...], c_f_ref[...], h_b_ref[...], c_b_ref[...])
    h_f, c_f, h_b, c_b = jax.lax.fori_loop(0, Tb, step, carry0,
                                           unroll=min(Tb, 8))

    h_f_ref[...] = h_f
    c_f_ref[...] = c_f
    h_b_ref[...] = h_b
    c_b_ref[...] = c_b

    # ---- lane-dense head on the last time block (dropout is identity in eval) ----
    @pl.when(t == nt - 1)
    def _():
        o_ref[...] = (jnp.dot(h_f.astype(wout_f_ref.dtype), wout_f_ref[...],
                              preferred_element_type=jnp.float32)
                      + jnp.dot(h_b.astype(wout_b_ref.dtype), wout_b_ref[...],
                                preferred_element_type=jnp.float32)
                      + bout_ref[...])


def phobert_lstm_sentiment_forward(text, params, *,
                                   compute_dtype=jnp.float32,
                                   recurrent_dtype=None,
                                   t_block=16):
    """Wrapper: phobert embedding stub + layout plumbing + fused Pallas kernel.

    compute_dtype   : dtype of x / wih / wout matmul inputs (bf16 recommended on v6e/v7x).
    recurrent_dtype : dtype of whh and the per-step h cast.  Defaults to compute_dtype;
                      pass jnp.float32 on v5e (no bf16 VPU -> keep the serial path f32).
    t_block         : target time-block length (the largest divisor of T <= t_block is
                      used).  Use larger blocks on v5e/v6e (128 MiB VMEM) than on v7x.
    """
    # TODO(synk): the real PhoBERT transformer encoder has no clean single-kernel Pallas
    # equivalent here; stand-in is a deterministic embedding-table lookup.
    embedded = params["phobert_embedding"][text].astype(jnp.float32)     # [B, T, E]
    B, T, E = embedded.shape
    H = params["whh_f"].shape[0]
    O = params["wout"].shape[1]
    if recurrent_dtype is None:
        recurrent_dtype = compute_dtype

    # ---- tile-size selection ----
    # Batch: multiples of 16 sublanes (bf16 min tile); >=2 blocks when B allows so the
    # 'parallel' axis can feed both TensorCores on v7x.
    if B > 16:
        B_BLOCK = min(128, _round_up(-(-B // 2), 16))
    else:
        B_BLOCK = 16
    B_pad = _round_up(B, B_BLOCK)
    # Time: T_BLOCK must divide T exactly (padding T would change the final LSTM state).
    t_block = max(1, int(t_block))
    T_BLOCK = max(d for d in range(1, min(t_block, T) + 1) if T % d == 0)
    num_t_blocks = T // T_BLOCK
    # Hidden: pad to 128 lanes so gate slices are lane-aligned (padded units stay 0).
    Hp = _round_up(H, 128)
    # Output: pad to 128 lanes so the final store is unmasked and lane-dense.
    O_pad = _round_up(O, 128)

    # ---- layout plumbing (one-time, outside the kernel) ----
    x = jnp.transpose(embedded, (1, 0, 2))                                # [T, B, E] time-major
    if B_pad != B:
        x = jnp.pad(x, ((0, 0), (0, B_pad - B), (0, 0)))

    def pad_gate_cols(w):
        # [..., 4H] with gate order (i,f,g,o) -> [..., 4Hp]; each gate chunk zero-padded.
        chunks = [w[..., k * H:(k + 1) * H] for k in range(4)]
        pad = [(0, 0)] * (w.ndim - 1) + [(0, Hp - H)]
        return jnp.concatenate([jnp.pad(c, pad) for c in chunks], axis=-1)

    wih_f = pad_gate_cols(params["wih_f"])                                # [E, 4Hp]
    wih_b = pad_gate_cols(params["wih_b"])
    whh_f = pad_gate_cols(jnp.pad(params["whh_f"], ((0, Hp - H), (0, 0))))  # [Hp, 4Hp]
    whh_b = pad_gate_cols(jnp.pad(params["whh_b"], ((0, Hp - H), (0, 0))))
    b_f = pad_gate_cols(params["b_f"])                                    # [1, 4Hp]
    b_b = pad_gate_cols(params["b_b"])

    wout = params["wout"]                                                 # [2H, O]
    wout_f = jnp.pad(wout[:H], ((0, Hp - H), (0, O_pad - O)))             # [Hp, O_pad]
    wout_b = jnp.pad(wout[H:], ((0, Hp - H), (0, O_pad - O)))             # [Hp, O_pad]
    bout = jnp.pad(params["bout"], ((0, 0), (0, O_pad - O)))              # [1, O_pad]

    cd, rd = compute_dtype, recurrent_dtype
    x = x.astype(cd)
    wih_f, wih_b = wih_f.astype(cd), wih_b.astype(cd)
    whh_f, whh_b = whh_f.astype(rd), whh_b.astype(rd)
    wout_f, wout_b = wout_f.astype(cd), wout_b.astype(cd)
    b_f, b_b = b_f.astype(jnp.float32), b_b.astype(jnp.float32)
    bout = bout.astype(jnp.float32)

    # ---- VMEM budget from the actual tile footprint (not a hardcoded default) ----
    cbytes = jnp.dtype(cd).itemsize
    rbytes = jnp.dtype(rd).itemsize
    x_block_bytes = T_BLOCK * B_BLOCK * E * cbytes
    weight_bytes = (2 * E * 4 * Hp * cbytes                 # wih_f, wih_b
                    + 2 * Hp * 4 * Hp * rbytes              # whh_f, whh_b
                    + 2 * 4 * Hp * 4 + O_pad * 4            # biases (f32)
                    + 2 * Hp * O_pad * cbytes)              # wout halves
    scratch_bytes = (2 * T_BLOCK * B_BLOCK * 4 * Hp * 4     # gx_f, gx_b
                     + 4 * B_BLOCK * Hp * 4)                # h/c carries
    out_bytes = B_BLOCK * O_pad * 4
    footprint = 2 * (2 * x_block_bytes + out_bytes) + 2 * weight_bytes + scratch_bytes
    try:
        vmem_cap = int(pltpu.get_tpu_info().vmem_capacity_bytes)
    except Exception:
        vmem_cap = 64 * 1024 * 1024          # conservative (v7x per-core)
    vmem_limit = int(min(max(2 * footprint, 32 * 1024 * 1024), 0.75 * vmem_cap))

    def wspec(shape):
        return pl.BlockSpec(shape, lambda b, t: (0, 0))

    out = pl.pallas_call(
        _bilstm_head_kernel,
        out_shape=jax.ShapeDtypeStruct((B_pad, O_pad), jnp.float32),
        grid=(B_pad // B_BLOCK, num_t_blocks),
        in_specs=[
            # forward direction walks time blocks 0 .. nt-1
            pl.BlockSpec((T_BLOCK, B_BLOCK, E), lambda b, t: (t, b, 0)),
            # backward direction walks time blocks nt-1 .. 0 (same HBM array, 2nd window)
            pl.BlockSpec((T_BLOCK, B_BLOCK, E),
                         lambda b, t: (num_t_blocks - 1 - t, b, 0)),
            wspec(wih_f.shape), wspec(whh_f.shape), wspec(b_f.shape),
            wspec(wih_b.shape), wspec(whh_b.shape), wspec(b_b.shape),
            wspec(wout_f.shape), wspec(wout_b.shape), wspec(bout.shape),
        ],
        out_specs=pl.BlockSpec((B_BLOCK, O_pad), lambda b, t: (b, 0)),
        scratch_shapes=[
            pltpu.VMEM((T_BLOCK, B_BLOCK, 4 * Hp), jnp.float32),   # gx_f
            pltpu.VMEM((T_BLOCK, B_BLOCK, 4 * Hp), jnp.float32),   # gx_b
            pltpu.VMEM((B_BLOCK, Hp), jnp.float32),                # h_f
            pltpu.VMEM((B_BLOCK, Hp), jnp.float32),                # c_f
            pltpu.VMEM((B_BLOCK, Hp), jnp.float32),                # h_b
            pltpu.VMEM((B_BLOCK, Hp), jnp.float32),                # c_b
        ],
        compiler_params=pltpu.CompilerParams(
            dimension_semantics=("parallel", "arbitrary"),
            vmem_limit_bytes=vmem_limit,
        ),
    )(x, x, wih_f, whh_f, b_f, wih_b, whh_b, b_b, wout_f, wout_b, bout)

    return out[:B, :O]


def init_params(key, vocab_size, embedding_dim, hidden_dim, output_dim):
    ks = jax.random.split(key, 10)
    E, H, O = embedding_dim, hidden_dim, output_dim

    def u(k, shape, scale=0.1):
        return jax.random.uniform(k, shape, jnp.float32, -scale, scale)

    return {
        "phobert_embedding": u(ks[0], (vocab_size, E), 1.0),
        # forward direction (PyTorch weight_ih_l0 is [4H, E]; stored transposed here)
        "wih_f": u(ks[1], (E, 4 * H)),
        "whh_f": u(ks[2], (H, 4 * H)),
        "b_f": u(ks[3], (1, 4 * H)),      # b_ih + b_hh fused
        # backward direction
        "wih_b": u(ks[4], (E, 4 * H)),
        "whh_b": u(ks[5], (H, 4 * H)),
        "b_b": u(ks[6], (1, 4 * H)),
        # output linear: Linear(2H, O), stored transposed
        "wout": u(ks[7], (2 * H, O)),
        "bout": u(ks[8], (1, O)),
    }


def _reference_forward(text, params):
    """Pure-JAX f32 reference (mirrors PyTorch LSTM gate math) for the correctness check."""
    embedded = params["phobert_embedding"][text]
    B, T, E = embedded.shape
    H = params["whh_f"].shape[0]

    def run(xs, wih, whh, b):
        def step(carry, x_t):
            h, c = carry
            gates = x_t @ wih + h @ whh + b
            i = jax.nn.sigmoid(gates[:, :H])
            f = jax.nn.sigmoid(gates[:, H:2 * H])
            g = jnp.tanh(gates[:, 2 * H:3 * H])
            o = jax.nn.sigmoid(gates[:, 3 * H:])
            c = f * c + i * g
            h = o * jnp.tanh(c)
            return (h, c), None
        (h, _), _ = jax.lax.scan(step, (jnp.zeros((B, H)), jnp.zeros((B, H))), xs)
        return h

    xf = jnp.transpose(embedded, (1, 0, 2))
    xb = jnp.flip(xf, axis=0)
    h_fwd = run(xf, params["wih_f"], params["whh_f"], params["b_f"])
    h_bwd = run(xb, params["wih_b"], params["whh_b"], params["b_b"])
    hidden = jnp.concatenate([h_fwd, h_bwd], axis=1)
    return hidden @ params["wout"] + params["bout"]


if __name__ == "__main__":
    key = jax.random.PRNGKey(0)
    k_param, k_text = jax.random.split(key)

    # Small, self-consistent config: phobert hidden_size (embedding_dim)=32,
    # hidden_dim=32, output_dim=3, n_layers=1, bidirectional=True, eval-mode dropout.
    B, T, VOCAB = 2, 8, 100
    EMBEDDING_DIM, HIDDEN_DIM, OUTPUT_DIM = 32, 32, 3

    params = init_params(k_param, VOCAB, EMBEDDING_DIM, HIDDEN_DIM, OUTPUT_DIM)
    text = jax.random.randint(k_text, (B, T), 0, VOCAB, dtype=jnp.int32)

    ref = _reference_forward(text, params)

    # f32, two time blocks (nt = 2): exercises the h/c VMEM carry across the time grid.
    logits = jax.block_until_ready(
        phobert_lstm_sentiment_forward(text, params, t_block=4))
    assert logits.shape == (B, OUTPUT_DIM)
    assert jnp.allclose(logits, ref, atol=1e-4, rtol=1e-4), "f32 (nt=2) mismatch vs reference"

    # f32, single time block (nt = 1): init + finalize fire on the same grid step.
    logits1 = jax.block_until_ready(
        phobert_lstm_sentiment_forward(text, params, t_block=8))
    assert jnp.allclose(logits1, ref, atol=1e-4, rtol=1e-4), "f32 (nt=1) mismatch vs reference"

    # bf16 matmul-input path (v6e/v7x recommendation; on v5e pass recurrent_dtype=f32):
    # f32 accumulation + f32 gate math, so it should track the f32 reference loosely.
    logits_bf16 = jax.block_until_ready(
        phobert_lstm_sentiment_forward(text, params,
                                       compute_dtype=jnp.bfloat16, t_block=4))
    assert logits_bf16.shape == (B, OUTPUT_DIM)
    assert bool(jnp.all(jnp.isfinite(logits_bf16)))
    assert jnp.allclose(logits_bf16, ref, atol=2e-1, rtol=2e-1), "bf16 drifted too far"

    print("KERNEL_OK")
</pallas_src>

<mosaic_0001>
module attributes {stable_mosaic.version = 11 : i64} {
  func.func @_bilstm_head_kernel(%arg0: i32, %arg1: i32, %arg2: memref<4x16x32xf32, #tpu.memory_space<vmem>>, %arg3: memref<4x16x32xf32, #tpu.memory_space<vmem>>, %arg4: memref<32x512xf32, #tpu.memory_space<vmem>>, %arg5: memref<128x512xf32, #tpu.memory_space<vmem>>, %arg6: memref<1x512xf32, #tpu.memory_space<vmem>>, %arg7: memref<32x512xf32, #tpu.memory_space<vmem>>, %arg8: memref<128x512xf32, #tpu.memory_space<vmem>>, %arg9: memref<1x512xf32, #tpu.memory_space<vmem>>, %arg10: memref<128x128xf32, #tpu.memory_space<vmem>>, %arg11: memref<128x128xf32, #tpu.memory_space<vmem>>, %arg12: memref<1x128xf32, #tpu.memory_space<vmem>>, %arg13: memref<16x128xf32, #tpu.memory_space<vmem>>, %arg14: memref<4x16x512xf32, #tpu.memory_space<vmem>>, %arg15: memref<4x16x512xf32, #tpu.memory_space<vmem>>, %arg16: memref<16x128xf32, #tpu.memory_space<vmem>>, %arg17: memref<16x128xf32, #tpu.memory_space<vmem>>, %arg18: memref<16x128xf32, #tpu.memory_space<vmem>>, %arg19: memref<16x128xf32, #tpu.memory_space<vmem>>) attributes {dimension_semantics = [#tpu.dimension_semantics<parallel>, #tpu.dimension_semantics<arbitrary>], iteration_bounds = array<i64: 1, 2>, scalar_prefetch = 0 : i64, scratch_operands = 6 : i64, tpu.core_type = #tpu.core_type<tc>, window_params = [{transform_indices = @transform_0, window_bounds = array<i64: 4, 16, 32>}, {transform_indices = @transform_1, window_bounds = array<i64: 4, 16, 32>}, {pipeline_mode = #tpu.pipeline_mode<synchronous>, transform_indices = @transform_2, window_bounds = array<i64: 32, 512>}, {pipeline_mode = #tpu.pipeline_mode<synchronous>, transform_indices = @transform_3, window_bounds = array<i64: 128, 512>}, {pipeline_mode = #tpu.pipeline_mode<synchronous>, transform_indices = @transform_4, window_bounds = array<i64: 1, 512>}, {pipeline_mode = #tpu.pipeline_mode<synchronous>, transform_indices = @transform_5, window_bounds = array<i64: 32, 512>}, {pipeline_mode = #tpu.pipeline_mode<synchronous>, transform_indices = @transform_6, window_bounds = array<i64: 128, 512>}, {pipeline_mode = #tpu.pipeline_mode<synchronous>, transform_indices = @transform_7, window_bounds = array<i64: 1, 512>}, {pipeline_mode = #tpu.pipeline_mode<synchronous>, transform_indices = @transform_8, window_bounds = array<i64: 128, 128>}, {pipeline_mode = #tpu.pipeline_mode<synchronous>, transform_indices = @transform_9, window_bounds = array<i64: 128, 128>}, {pipeline_mode = #tpu.pipeline_mode<synchronous>, transform_indices = @transform_10, window_bounds = array<i64: 1, 128>}, {transform_indices = @transform_11, window_bounds = array<i64: 16, 128>}]} {
    %c0_i32 = arith.constant 0 : i32
    %0 = arith.cmpi eq, %arg1, %c0_i32 : i32
    %1 = arith.extui %0 : i1 to i32
    %c0_i32_0 = arith.constant 0 : i32
    %2 = arith.cmpi ne, %1, %c0_i32_0 : i32
    scf.if %2 {
      %cst_96 = arith.constant 0.000000e+00 : f32
      %278 = vector.broadcast %cst_96 : f32 to vector<16x128xf32>
      %c0_97 = arith.constant 0 : index
      %c0_98 = arith.constant 0 : index
      %279 = vector.load %arg16[%c0_97, %c0_98] : memref<16x128xf32, #tpu.memory_space<vmem>>, vector<16x128xf32>
      tpu.vector_store %arg16[%c0_97, %c0_98], %278 {strides = array<i32>} : memref<16x128xf32, #tpu.memory_space<vmem>>, vector<16x128xf32>,
      %cst_99 = arith.constant 0.000000e+00 : f32
      %280 = vector.broadcast %cst_99 : f32 to vector<16x128xf32>
      %c0_100 = arith.constant 0 : index
      %c0_101 = arith.constant 0 : index
      %281 = vector.load %arg17[%c0_100, %c0_101] : memref<16x128xf32, #tpu.memory_space<vmem>>, vector<16x128xf32>
      tpu.vector_store %arg17[%c0_100, %c0_101], %280 {strides = array<i32>} : memref<16x128xf32, #tpu.memory_space<vmem>>, vector<16x128xf32>,
      %cst_102 = arith.constant 0.000000e+00 : f32
      %282 = vector.broadcast %cst_102 : f32 to vector<16x128xf32>
      %c0_103 = arith.constant 0 : index
      %c0_104 = arith.constant 0 : index
      %283 = vector.load %arg18[%c0_103, %c0_104] : memref<16x128xf32, #tpu.memory_space<vmem>>, vector<16x128xf32>
      tpu.vector_store %arg18[%c0_103, %c0_104], %282 {strides = array<i32>} : memref<16x128xf32, #tpu.memory_space<vmem>>, vector<16x128xf32>,
      %cst_105 = arith.constant 0.000000e+00 : f32
      %284 = vector.broadcast %cst_105 : f32 to vector<16x128xf32>
      %c0_106 = arith.constant 0 : index
      %c0_107 = arith.constant 0 : index
      %285 = vector.load %arg19[%c0_106, %c0_107] : memref<16x128xf32, #tpu.memory_space<vmem>>, vector<16x128xf32>
      tpu.vector_store %arg19[%c0_106, %c0_107], %284 {strides = array<i32>} : memref<16x128xf32, #tpu.memory_space<vmem>>, vector<16x128xf32>,
    } else {
    }
    %c0 = arith.constant 0 : index
    %c0_1 = arith.constant 0 : index
    %c0_2 = arith.constant 0 : index
    %3 = vector.load %arg2[%c0, %c0_1, %c0_2] : memref<4x16x32xf32, #tpu.memory_space<vmem>>, vector<4x16x32xf32>
    %4 = vector.shape_cast %3 : vector<4x16x32xf32> to vector<64x32xf32>
    %c0_3 = arith.constant 0 : index
    %c0_4 = arith.constant 0 : index
    %c0_5 = arith.constant 0 : index
    %5 = vector.load %arg3[%c0_3, %c0_4, %c0_5] : memref<4x16x32xf32, #tpu.memory_space<vmem>>, vector<4x16x32xf32>
    %6 = vector.shape_cast %5 : vector<4x16x32xf32> to vector<64x32xf32>
    %c0_6 = arith.constant 0 : index
    %c0_7 = arith.constant 0 : index
    %7 = vector.load %arg4[%c0_6, %c0_7] : memref<32x512xf32, #tpu.memory_space<vmem>>, vector<32x512xf32>
    %cst = arith.constant dense<0.000000e+00> : vector<64x512xf32>
    %8 = tpu.matmul %4, %7, %cst {dimension_numbers = #tpu.dot_dimension_numbers<[1], [0], [0], [1], [0, 0, 1, 1], [], []>} : vector<64x32xf32>, vector<32x512xf32>, vector<64x512xf32> -> vector<64x512xf32>
    %c0_8 = arith.constant 0 : index
    %c0_9 = arith.constant 0 : index
    %9 = vector.load %arg6[%c0_8, %c0_9] : memref<1x512xf32, #tpu.memory_space<vmem>>, vector<1x512xf32>
    %10 = vector.broadcast %9 : vector<1x512xf32> to vector<64x512xf32>
    %11 = arith.addf %8, %10 : vector<64x512xf32>
    %12 = vector.shape_cast %11 : vector<64x512xf32> to vector<4x16x512xf32>
    %c0_10 = arith.constant 0 : index
    %c0_11 = arith.constant 0 : index
    %c0_12 = arith.constant 0 : index
    %13 = vector.load %arg14[%c0_10, %c0_11, %c0_12] : memref<4x16x512xf32, #tpu.memory_space<vmem>>, vector<4x16x512xf32>
    tpu.vector_store %arg14[%c0_10, %c0_11, %c0_12], %12 {strides = array<i32>} : memref<4x16x512xf32, #tpu.memory_space<vmem>>, vector<4x16x512xf32>,
    %c0_13 = arith.constant 0 : index
    %c0_14 = arith.constant 0 : index
    %14 = vector.load %arg7[%c0_13, %c0_14] : memref<32x512xf32, #tpu.memory_space<vmem>>, vector<32x512xf32>
    %cst_15 = arith.constant dense<0.000000e+00> : vector<64x512xf32>
    %15 = tpu.matmul %6, %14, %cst_15 {dimension_numbers = #tpu.dot_dimension_numbers<[1], [0], [0], [1], [0, 0, 1, 1], [], []>} : vector<64x32xf32>, vector<32x512xf32>, vector<64x512xf32> -> vector<64x512xf32>
    %c0_16 = arith.constant 0 : index
    %c0_17 = arith.constant 0 : index
    %16 = vector.load %arg9[%c0_16, %c0_17] : memref<1x512xf32, #tpu.memory_space<vmem>>, vector<1x512xf32>
    %17 = vector.broadcast %16 : vector<1x512xf32> to vector<64x512xf32>
    %18 = arith.addf %15, %17 : vector<64x512xf32>
    %19 = vector.shape_cast %18 : vector<64x512xf32> to vector<4x16x512xf32>
    %c0_18 = arith.constant 0 : index
    %c0_19 = arith.constant 0 : index
    %c0_20 = arith.constant 0 : index
    %20 = vector.load %arg15[%c0_18, %c0_19, %c0_20] : memref<4x16x512xf32, #tpu.memory_space<vmem>>, vector<4x16x512xf32>
    tpu.vector_store %arg15[%c0_18, %c0_19, %c0_20], %19 {strides = array<i32>} : memref<4x16x512xf32, #tpu.memory_space<vmem>>, vector<4x16x512xf32>,
    %c0_21 = arith.constant 0 : index
    %c0_22 = arith.constant 0 : index
    %21 = vector.load %arg5[%c0_21, %c0_22] : memref<128x512xf32, #tpu.memory_space<vmem>>, vector<128x512xf32>
    %c0_23 = arith.constant 0 : index
    %c0_24 = arith.constant 0 : index
    %22 = vector.load %arg8[%c0_23, %c0_24] : memref<128x512xf32, #tpu.memory_space<vmem>>, vector<128x512xf32>
    %c0_25 = arith.constant 0 : index
    %c0_26 = arith.constant 0 : index
    %23 = vector.load %arg16[%c0_25, %c0_26] : memref<16x128xf32, #tpu.memory_space<vmem>>, vector<16x128xf32>
    %c0_27 = arith.constant 0 : index
    %c0_28 = arith.constant 0 : index
    %24 = vector.load %arg17[%c0_27, %c0_28] : memref<16x128xf32, #tpu.memory_space<vmem>>, vector<16x128xf32>
    %c0_29 = arith.constant 0 : index
    %c0_30 = arith.constant 0 : index
    %25 = vector.load %arg18[%c0_29, %c0_30] : memref<16x128xf32, #tpu.memory_space<vmem>>, vector<16x128xf32>
    %c0_31 = arith.constant 0 : index
    %c0_32 = arith.constant 0 : index
    %26 = vector.load %arg19[%c0_31, %c0_32] : memref<16x128xf32, #tpu.memory_space<vmem>>, vector<16x128xf32>
    %c0_i32_33 = arith.constant 0 : i32
    %27 = arith.index_cast %c0_i32_33 : i32 to index
    %c0_34 = arith.constant 0 : index
    %c0_35 = arith.constant 0 : index
    %28 = vector.load %arg14[%27, %c0_34, %c0_35] : memref<4x16x512xf32, #tpu.memory_space<vmem>>, vector<1x16x512xf32>
    %29 = vector.shape_cast %28 : vector<1x16x512xf32> to vector<16x512xf32>
    %cst_36 = arith.constant dense<0.000000e+00> : vector<16x512xf32>
    %30 = tpu.matmul %23, %21, %cst_36 {dimension_numbers = #tpu.dot_dimension_numbers<[1], [0], [0], [1], [0, 0, 1, 1], [], []>} : vector<16x128xf32>, vector<128x512xf32>, vector<16x512xf32> -> vector<16x512xf32>
    %31 = arith.addf %29, %30 : vector<16x512xf32>
    %c3_i32 = arith.constant 3 : i32
    %32 = arith.subi %c3_i32, %c0_i32_33 : i32
    %33 = arith.index_cast %32 : i32 to index
    %c0_37 = arith.constant 0 : index
    %c0_38 = arith.constant 0 : index
    %34 = vector.load %arg15[%33, %c0_37, %c0_38] : memref<4x16x512xf32, #tpu.memory_space<vmem>>, vector<1x16x512xf32>
    %35 = vector.shape_cast %34 : vector<1x16x512xf32> to vector<16x512xf32>
    %cst_39 = arith.constant dense<0.000000e+00> : vector<16x512xf32>
    %36 = tpu.matmul %25, %22, %cst_39 {dimension_numbers = #tpu.dot_dimension_numbers<[1], [0], [0], [1], [0, 0, 1, 1], [], []>} : vector<16x128xf32>, vector<128x512xf32>, vector<16x512xf32> -> vector<16x512xf32>
    %37 = arith.addf %35, %36 : vector<16x512xf32>
    %38 = vector.extract_strided_slice %31 {offsets = [0, 0], sizes = [16, 128], strides = [1, 1]} : vector<16x512xf32> to vector<16x128xf32>
    %39 = arith.negf %38 : vector<16x128xf32>
    %40 = math.exp %39 : vector<16x128xf32>
    %cst_40 = arith.constant 1.000000e+00 : f32
    %41 = vector.broadcast %cst_40 : f32 to vector<16x128xf32>
    %42 = arith.addf %41, %40 : vector<16x128xf32>
    %43 = arith.divf %41, %42 : vector<16x128xf32>
    %44 = vector.extract_strided_slice %31 {offsets = [0, 128], sizes = [16, 128], strides = [1, 1]} : vector<16x512xf32> to vector<16x128xf32>
    %45 = arith.negf %44 : vector<16x128xf32>
    %46 = math.exp %45 : vector<16x128xf32>
    %cst_41 = arith.constant 1.000000e+00 : f32
    %47 = vector.broadcast %cst_41 : f32 to vector<16x128xf32>
    %48 = arith.addf %47, %46 : vector<16x128xf32>
    %49 = arith.divf %47, %48 : vector<16x128xf32>
    %50 = vector.extract_strided_slice %31 {offsets = [0, 256], sizes = [16, 128], strides = [1, 1]} : vector<16x512xf32> to vector<16x128xf32>
    %51 = math.tanh %50 : vector<16x128xf32>
    %52 = vector.extract_strided_slice %31 {offsets = [0, 384], sizes = [16, 128], strides = [1, 1]} : vector<16x512xf32> to vector<16x128xf32>
    %53 = arith.negf %52 : vector<16x128xf32>
    %54 = math.exp %53 : vector<16x128xf32>
    %cst_42 = arith.constant 1.000000e+00 : f32
    %55 = vector.broadcast %cst_42 : f32 to vector<16x128xf32>
    %56 = arith.addf %55, %54 : vector<16x128xf32>
    %57 = arith.divf %55, %56 : vector<16x128xf32>
    %58 = arith.mulf %49, %24 : vector<16x128xf32>
    %59 = arith.mulf %43, %51 : vector<16x128xf32>
    %60 = arith.addf %58, %59 : vector<16x128xf32>
    %61 = math.tanh %60 : vector<16x128xf32>
    %62 = arith.mulf %57, %61 : vector<16x128xf32>
    %63 = vector.extract_strided_slice %37 {offsets = [0, 0], sizes = [16, 128], strides = [1, 1]} : vector<16x512xf32> to vector<16x128xf32>
    %64 = arith.negf %63 : vector<16x128xf32>
    %65 = math.exp %64 : vector<16x128xf32>
    %cst_43 = arith.constant 1.000000e+00 : f32
    %66 = vector.broadcast %cst_43 : f32 to vector<16x128xf32>
    %67 = arith.addf %66, %65 : vector<16x128xf32>
    %68 = arith.divf %66, %67 : vector<16x128xf32>
    %69 = vector.extract_strided_slice %37 {offsets = [0, 128], sizes = [16, 128], strides = [1, 1]} : vector<16x512xf32> to vector<16x128xf32>
    %70 = arith.negf %69 : vector<16x128xf32>
    %71 = math.exp %70 : vector<16x128xf32>
    %cst_44 = arith.constant 1.000000e+00 : f32
    %72 = vector.broadcast %cst_44 : f32 to vector<16x128xf32>
    %73 = arith.addf %72, %71 : vector<16x128xf32>
    %74 = arith.divf %72, %73 : vector<16x128xf32>
    %75 = vector.extract_strided_slice %37 {offsets = [0, 256], sizes = [16, 128], strides = [1, 1]} : vector<16x512xf32> to vector<16x128xf32>
    %76 = math.tanh %75 : vector<16x128xf32>
    %77 = vector.extract_strided_slice %37 {offsets = [0, 384], sizes = [16, 128], strides = [1, 1]} : vector<16x512xf32> to vector<16x128xf32>
    %78 = arith.negf %77 : vector<16x128xf32>
    %79 = math.exp %78 : vector<16x128xf32>
    %cst_45 = arith.constant 1.000000e+00 : f32
    %80 = vector.broadcast %cst_45 : f32 to vector<16x128xf32>
    %81 = arith.addf %80, %79 : vector<16x128xf32>
    %82 = arith.divf %80, %81 : vector<16x128xf32>
    %83 = arith.mulf %74, %26 : vector<16x128xf32>
    %84 = arith.mulf %68, %76 : vector<16x128xf32>
    %85 = arith.addf %83, %84 : vector<16x128xf32>
    %86 = math.tanh %85 : vector<16x128xf32>
    %87 = arith.mulf %82, %86 : vector<16x128xf32>
    %c1_i32 = arith.constant 1 : i32
    %88 = arith.index_cast %c1_i32 : i32 to index
    %c0_46 = arith.constant 0 : index
    %c0_47 = arith.constant 0 : index
    %89 = vector.load %arg14[%88, %c0_46, %c0_47] : memref<4x16x512xf32, #tpu.memory_space<vmem>>, vector<1x16x512xf32>
    %90 = vector.shape_cast %89 : vector<1x16x512xf32> to vector<16x512xf32>
    %cst_48 = arith.constant dense<0.000000e+00> : vector<16x512xf32>
    %91 = tpu.matmul %62, %21, %cst_48 {dimension_numbers = #tpu.dot_dimension_numbers<[1], [0], [0], [1], [0, 0, 1, 1], [], []>} : vector<16x128xf32>, vector<128x512xf32>, vector<16x512xf32> -> vector<16x512xf32>
    %92 = arith.addf %90, %91 : vector<16x512xf32>
    %c3_i32_49 = arith.constant 3 : i32
    %93 = arith.subi %c3_i32_49, %c1_i32 : i32
    %94 = arith.index_cast %93 : i32 to index
    %c0_50 = arith.constant 0 : index
    %c0_51 = arith.constant 0 : index
    %95 = vector.load %arg15[%94, %c0_50, %c0_51] : memref<4x16x512xf32, #tpu.memory_space<vmem>>, vector<1x16x512xf32>
    %96 = vector.shape_cast %95 : vector<1x16x512xf32> to vector<16x512xf32>
    %cst_52 = arith.constant dense<0.000000e+00> : vector<16x512xf32>
    %97 = tpu.matmul %87, %22, %cst_52 {dimension_numbers = #tpu.dot_dimension_numbers<[1], [0], [0], [1], [0, 0, 1, 1], [], []>} : vector<16x128xf32>, vector<128x512xf32>, vector<16x512xf32> -> vector<16x512xf32>
    %98 = arith.addf %96, %97 : vector<16x512xf32>
    %99 = vector.extract_strided_slice %92 {offsets = [0, 0], sizes = [16, 128], strides = [1, 1]} : vector<16x512xf32> to vector<16x128xf32>
    %100 = arith.negf %99 : vector<16x128xf32>
    %101 = math.exp %100 : vector<16x128xf32>
    %cst_53 = arith.constant 1.000000e+00 : f32
    %102 = vector.broadcast %cst_53 : f32 to vector<16x128xf32>
    %103 = arith.addf %102, %101 : vector<16x128xf32>
    %104 = arith.divf %102, %103 : vector<16x128xf32>
    %105 = vector.extract_strided_slice %92 {offsets = [0, 128], sizes = [16, 128], strides = [1, 1]} : vector<16x512xf32> to vector<16x128xf32>
    %106 = arith.negf %105 : vector<16x128xf32>
    %107 = math.exp %106 : vector<16x128xf32>
    %cst_54 = arith.constant 1.000000e+00 : f32
    %108 = vector.broadcast %cst_54 : f32 to vector<16x128xf32>
    %109 = arith.addf %108, %107 : vector<16x128xf32>
    %110 = arith.divf %108, %109 : vector<16x128xf32>
    %111 = vector.extract_strided_slice %92 {offsets = [0, 256], sizes = [16, 128], strides = [1, 1]} : vector<16x512xf32> to vector<16x128xf32>
    %112 = math.tanh %111 : vector<16x128xf32>
    %113 = vector.extract_strided_slice %92 {offsets = [0, 384], sizes = [16, 128], strides = [1, 1]} : vector<16x512xf32> to vector<16x128xf32>
    %114 = arith.negf %113 : vector<16x128xf32>
    %115 = math.exp %114 : vector<16x128xf32>
    %cst_55 = arith.constant 1.000000e+00 : f32
    %116 = vector.broadcast %cst_55 : f32 to vector<16x128xf32>
    %117 = arith.addf %116, %115 : vector<16x128xf32>
    %118 = arith.divf %116, %117 : vector<16x128xf32>
    %119 = arith.mulf %110, %60 : vector<16x128xf32>
    %120 = arith.mulf %104, %112 : vector<16x128xf32>
    %121 = arith.addf %119, %120 : vector<16x128xf32>
    %122 = math.tanh %121 : vector<16x128xf32>
    %123 = arith.mulf %118, %122 : vector<16x128xf32>
    %124 = vector.extract_strided_slice %98 {offsets = [0, 0], sizes = [16, 128], strides = [1, 1]} : vector<16x512xf32> to vector<16x128xf32>
    %125 = arith.negf %124 : vector<16x128xf32>
    %126 = math.exp %125 : vector<16x128xf32>
    %cst_56 = arith.constant 1.000000e+00 : f32
    %127 = vector.broadcast %cst_56 : f32 to vector<16x128xf32>
    %128 = arith.addf %127, %126 : vector<16x128xf32>
    %129 = arith.divf %127, %128 : vector<16x128xf32>
    %130 = vector.extract_strided_slice %98 {offsets = [0, 128], sizes = [16, 128], strides = [1, 1]} : vector<16x512xf32> to vector<16x128xf32>
    %131 = arith.negf %130 : vector<16x128xf32>
    %132 = math.exp %131 : vector<16x128xf32>
    %cst_57 = arith.constant 1.000000e+00 : f32
    %133 = vector.broadcast %cst_57 : f32 to vector<16x128xf32>
    %134 = arith.addf %133, %132 : vector<16x128xf32>
    %135 = arith.divf %133, %134 : vector<16x128xf32>
    %136 = vector.extract_strided_slice %98 {offsets = [0, 256], sizes = [16, 128], strides = [1, 1]} : vector<16x512xf32> to vector<16x128xf32>
    %137 = math.tanh %136 : vector<16x128xf32>
    %138 = vector.extract_strided_slice %98 {offsets = [0, 384], sizes = [16, 128], strides = [1, 1]} : vector<16x512xf32> to vector<16x128xf32>
    %139 = arith.negf %138 : vector<16x128xf32>
    %140 = math.exp %139 : vector<16x128xf32>
    %cst_58 = arith.constant 1.000000e+00 : f32
    %141 = vector.broadcast %cst_58 : f32 to vector<16x128xf32>
    %142 = arith.addf %141, %140 : vector<16x128xf32>
    %143 = arith.divf %141, %142 : vector<16x128xf32>
    %144 = arith.mulf %135, %85 : vector<16x128xf32>
    %145 = arith.mulf %129, %137 : vector<16x128xf32>
    %146 = arith.addf %144, %145 : vector<16x128xf32>
    %147 = math.tanh %146 : vector<16x128xf32>
    %148 = arith.mulf %143, %147 : vector<16x128xf32>
    %c2_i32 = arith.constant 2 : i32
    %149 = arith.index_cast %c2_i32 : i32 to index
    %c0_59 = arith.constant 0 : index
    %c0_60 = arith.constant 0 : index
    %150 = vector.load %arg14[%149, %c0_59, %c0_60] : memref<4x16x512xf32, #tpu.memory_space<vmem>>, vector<1x16x512xf32>
    %151 = vector.shape_cast %150 : vector<1x16x512xf32> to vector<16x512xf32>
    %cst_61 = arith.constant dense<0.000000e+00> : vector<16x512xf32>
    %152 = tpu.matmul %123, %21, %cst_61 {dimension_numbers = #tpu.dot_dimension_numbers<[1], [0], [0], [1], [0, 0, 1, 1], [], []>} : vector<16x128xf32>, vector<128x512xf32>, vector<16x512xf32> -> vector<16x512xf32>
    %153 = arith.addf %151, %152 : vector<16x512xf32>
    %c3_i32_62 = arith.constant 3 : i32
    %154 = arith.subi %c3_i32_62, %c2_i32 : i32
    %155 = arith.index_cast %154 : i32 to index
    %c0_63 = arith.constant 0 : index
    %c0_64 = arith.constant 0 : index
    %156 = vector.load %arg15[%155, %c0_63, %c0_64] : memref<4x16x512xf32, #tpu.memory_space<vmem>>, vector<1x16x512xf32>
    %157 = vector.shape_cast %156 : vector<1x16x512xf32> to vector<16x512xf32>
    %cst_65 = arith.constant dense<0.000000e+00> : vector<16x512xf32>
    %158 = tpu.matmul %148, %22, %cst_65 {dimension_numbers = #tpu.dot_dimension_numbers<[1], [0], [0], [1], [0, 0, 1, 1], [], []>} : vector<16x128xf32>, vector<128x512xf32>, vector<16x512xf32> -> vector<16x512xf32>
    %159 = arith.addf %157, %158 : vector<16x512xf32>
    %160 = vector.extract_strided_slice %153 {offsets = [0, 0], sizes = [16, 128], strides = [1, 1]} : vector<16x512xf32> to vector<16x128xf32>
    %161 = arith.negf %160 : vector<16x128xf32>
    %162 = math.exp %161 : vector<16x128xf32>
    %cst_66 = arith.constant 1.000000e+00 : f32
    %163 = vector.broadcast %cst_66 : f32 to vector<16x128xf32>
    %164 = arith.addf %163, %162 : vector<16x128xf32>
    %165 = arith.divf %163, %164 : vector<16x128xf32>
    %166 = vector.extract_strided_slice %153 {offsets = [0, 128], sizes = [16, 128], strides = [1, 1]} : vector<16x512xf32> to vector<16x128xf32>
    %167 = arith.negf %166 : vector<16x128xf32>
    %168 = math.exp %167 : vector<16x128xf32>
    %cst_67 = arith.constant 1.000000e+00 : f32
    %169 = vector.broadcast %cst_67 : f32 to vector<16x128xf32>
    %170 = arith.addf %169, %168 : vector<16x128xf32>
    %171 = arith.divf %169, %170 : vector<16x128xf32>
    %172 = vector.extract_strided_slice %153 {offsets = [0, 256], sizes = [16, 128], strides = [1, 1]} : vector<16x512xf32> to vector<16x128xf32>
    %173 = math.tanh %172 : vector<16x128xf32>
    %174 = vector.extract_strided_slice %153 {offsets = [0, 384], sizes = [16, 128], strides = [1, 1]} : vector<16x512xf32> to vector<16x128xf32>
    %175 = arith.negf %174 : vector<16x128xf32>
    %176 = math.exp %175 : vector<16x128xf32>
    %cst_68 = arith.constant 1.000000e+00 : f32
    %177 = vector.broadcast %cst_68 : f32 to vector<16x128xf32>
    %178 = arith.addf %177, %176 : vector<16x128xf32>
    %179 = arith.divf %177, %178 : vector<16x128xf32>
    %180 = arith.mulf %171, %121 : vector<16x128xf32>
    %181 = arith.mulf %165, %173 : vector<16x128xf32>
    %182 = arith.addf %180, %181 : vector<16x128xf32>
    %183 = math.tanh %182 : vector<16x128xf32>
    %184 = arith.mulf %179, %183 : vector<16x128xf32>
    %185 = vector.extract_strided_slice %159 {offsets = [0, 0], sizes = [16, 128], strides = [1, 1]} : vector<16x512xf32> to vector<16x128xf32>
    %186 = arith.negf %185 : vector<16x128xf32>
    %187 = math.exp %186 : vector<16x128xf32>
    %cst_69 = arith.constant 1.000000e+00 : f32
    %188 = vector.broadcast %cst_69 : f32 to vector<16x128xf32>
    %189 = arith.addf %188, %187 : vector<16x128xf32>
    %190 = arith.divf %188, %189 : vector<16x128xf32>
    %191 = vector.extract_strided_slice %159 {offsets = [0, 128], sizes = [16, 128], strides = [1, 1]} : vector<16x512xf32> to vector<16x128xf32>
    %192 = arith.negf %191 : vector<16x128xf32>
    %193 = math.exp %192 : vector<16x128xf32>
    %cst_70 = arith.constant 1.000000e+00 : f32
    %194 = vector.broadcast %cst_70 : f32 to vector<16x128xf32>
    %195 = arith.addf %194, %193 : vector<16x128xf32>
    %196 = arith.divf %194, %195 : vector<16x128xf32>
    %197 = vector.extract_strided_slice %159 {offsets = [0, 256], sizes = [16, 128], strides = [1, 1]} : vector<16x512xf32> to vector<16x128xf32>
    %198 = math.tanh %197 : vector<16x128xf32>
    %199 = vector.extract_strided_slice %159 {offsets = [0, 384], sizes = [16, 128], strides = [1, 1]} : vector<16x512xf32> to vector<16x128xf32>
    %200 = arith.negf %199 : vector<16x128xf32>
    %201 = math.exp %200 : vector<16x128xf32>
    %cst_71 = arith.constant 1.000000e+00 : f32
    %202 = vector.broadcast %cst_71 : f32 to vector<16x128xf32>
    %203 = arith.addf %202, %201 : vector<16x128xf32>
    %204 = arith.divf %202, %203 : vector<16x128xf32>
    %205 = arith.mulf %196, %146 : vector<16x128xf32>
    %206 = arith.mulf %190, %198 : vector<16x128xf32>
    %207 = arith.addf %205, %206 : vector<16x128xf32>
    %208 = math.tanh %207 : vector<16x128xf32>
    %209 = arith.mulf %204, %208 : vector<16x128xf32>
    %c3_i32_72 = arith.constant 3 : i32
    %210 = arith.index_cast %c3_i32_72 : i32 to index
    %c0_73 = arith.constant 0 : index
    %c0_74 = arith.constant 0 : index
    %211 = vector.load %arg14[%210, %c0_73, %c0_74] : memref<4x16x512xf32, #tpu.memory_space<vmem>>, vector<1x16x512xf32>
    %212 = vector.shape_cast %211 : vector<1x16x512xf32> to vector<16x512xf32>
    %cst_75 = arith.constant dense<0.000000e+00> : vector<16x512xf32>
    %213 = tpu.matmul %184, %21, %cst_75 {dimension_numbers = #tpu.dot_dimension_numbers<[1], [0], [0], [1], [0, 0, 1, 1], [], []>} : vector<16x128xf32>, vector<128x512xf32>, vector<16x512xf32> -> vector<16x512xf32>
    %214 = arith.addf %212, %213 : vector<16x512xf32>
    %c3_i32_76 = arith.constant 3 : i32
    %215 = arith.subi %c3_i32_76, %c3_i32_72 : i32
    %216 = arith.index_cast %215 : i32 to index
    %c0_77 = arith.constant 0 : index
    %c0_78 = arith.constant 0 : index
    %217 = vector.load %arg15[%216, %c0_77, %c0_78] : memref<4x16x512xf32, #tpu.memory_space<vmem>>, vector<1x16x512xf32>
    %218 = vector.shape_cast %217 : vector<1x16x512xf32> to vector<16x512xf32>
    %cst_79 = arith.constant dense<0.000000e+00> : vector<16x512xf32>
    %219 = tpu.matmul %209, %22, %cst_79 {dimension_numbers = #tpu.dot_dimension_numbers<[1], [0], [0], [1], [0, 0, 1, 1], [], []>} : vector<16x128xf32>, vector<128x512xf32>, vector<16x512xf32> -> vector<16x512xf32>
    %220 = arith.addf %218, %219 : vector<16x512xf32>
    %221 = vector.extract_strided_slice %214 {offsets = [0, 0], sizes = [16, 128], strides = [1, 1]} : vector<16x512xf32> to vector<16x128xf32>
    %222 = arith.negf %221 : vector<16x128xf32>
    %223 = math.exp %222 : vector<16x128xf32>
    %cst_80 = arith.constant 1.000000e+00 : f32
    %224 = vector.broadcast %cst_80 : f32 to vector<16x128xf32>
    %225 = arith.addf %224, %223 : vector<16x128xf32>
    %226 = arith.divf %224, %225 : vector<16x128xf32>
    %227 = vector.extract_strided_slice %214 {offsets = [0, 128], sizes = [16, 128], strides = [1, 1]} : vector<16x512xf32> to vector<16x128xf32>
    %228 = arith.negf %227 : vector<16x128xf32>
    %229 = math.exp %228 : vector<16x128xf32>
    %cst_81 = arith.constant 1.000000e+00 : f32
    %230 = vector.broadcast %cst_81 : f32 to vector<16x128xf32>
    %231 = arith.addf %230, %229 : vector<16x128xf32>
    %232 = arith.divf %230, %231 : vector<16x128xf32>
    %233 = vector.extract_strided_slice %214 {offsets = [0, 256], sizes = [16, 128], strides = [1, 1]} : vector<16x512xf32> to vector<16x128xf32>
    %234 = math.tanh %233 : vector<16x128xf32>
    %235 = vector.extract_strided_slice %214 {offsets = [0, 384], sizes = [16, 128], strides = [1, 1]} : vector<16x512xf32> to vector<16x128xf32>
    %236 = arith.negf %235 : vector<16x128xf32>
    %237 = math.exp %236 : vector<16x128xf32>
    %cst_82 = arith.constant 1.000000e+00 : f32
    %238 = vector.broadcast %cst_82 : f32 to vector<16x128xf32>
    %239 = arith.addf %238, %237 : vector<16x128xf32>
    %240 = arith.divf %238, %239 : vector<16x128xf32>
    %241 = arith.mulf %232, %182 : vector<16x128xf32>
    %242 = arith.mulf %226, %234 : vector<16x128xf32>
    %243 = arith.addf %241, %242 : vector<16x128xf32>
    %244 = math.tanh %243 : vector<16x128xf32>
    %245 = arith.mulf %240, %244 : vector<16x128xf32>
    %246 = vector.extract_strided_slice %220 {offsets = [0, 0], sizes = [16, 128], strides = [1, 1]} : vector<16x512xf32> to vector<16x128xf32>
    %247 = arith.negf %246 : vector<16x128xf32>
    %248 = math.exp %247 : vector<16x128xf32>
    %cst_83 = arith.constant 1.000000e+00 : f32
    %249 = vector.broadcast %cst_83 : f32 to vector<16x128xf32>
    %250 = arith.addf %249, %248 : vector<16x128xf32>
    %251 = arith.divf %249, %250 : vector<16x128xf32>
    %252 = vector.extract_strided_slice %220 {offsets = [0, 128], sizes = [16, 128], strides = [1, 1]} : vector<16x512xf32> to vector<16x128xf32>
    %253 = arith.negf %252 : vector<16x128xf32>
    %254 = math.exp %253 : vector<16x128xf32>
    %cst_84 = arith.constant 1.000000e+00 : f32
    %255 = vector.broadcast %cst_84 : f32 to vector<16x128xf32>
    %256 = arith.addf %255, %254 : vector<16x128xf32>
    %257 = arith.divf %255, %256 : vector<16x128xf32>
    %258 = vector.extract_strided_slice %220 {offsets = [0, 256], sizes = [16, 128], strides = [1, 1]} : vector<16x512xf32> to vector<16x128xf32>
    %259 = math.tanh %258 : vector<16x128xf32>
    %260 = vector.extract_strided_slice %220 {offsets = [0, 384], sizes = [16, 128], strides = [1, 1]} : vector<16x512xf32> to vector<16x128xf32>
    %261 = arith.negf %260 : vector<16x128xf32>
    %262 = math.exp %261 : vector<16x128xf32>
    %cst_85 = arith.constant 1.000000e+00 : f32
    %263 = vector.broadcast %cst_85 : f32 to vector<16x128xf32>
    %264 = arith.addf %263, %262 : vector<16x128xf32>
    %265 = arith.divf %263, %264 : vector<16x128xf32>
    %266 = arith.mulf %257, %207 : vector<16x128xf32>
    %267 = arith.mulf %251, %259 : vector<16x128xf32>
    %268 = arith.addf %266, %267 : vector<16x128xf32>
    %269 = math.tanh %268 : vector<16x128xf32>
    %270 = arith.mulf %265, %269 : vector<16x128xf32>
    %c4_i32 = arith.constant 4 : i32
    %c0_86 = arith.constant 0 : index
    %c0_87 = arith.constant 0 : index
    %271 = vector.load %arg16[%c0_86, %c0_87] : memref<16x128xf32, #tpu.memory_space<vmem>>, vector<16x128xf32>
    tpu.vector_store %arg16[%c0_86, %c0_87], %245 {strides = array<i32>} : memref<16x128xf32, #tpu.memory_space<vmem>>, vector<16x128xf32>,
    %c0_88 = arith.constant 0 : index
    %c0_89 = arith.constant 0 : index
    %272 = vector.load %arg17[%c0_88, %c0_89] : memref<16x128xf32, #tpu.memory_space<vmem>>, vector<16x128xf32>
    tpu.vector_store %arg17[%c0_88, %c0_89], %243 {strides = array<i32>} : memref<16x128xf32, #tpu.memory_space<vmem>>, vector<16x128xf32>,
    %c0_90 = arith.constant 0 : index
    %c0_91 = arith.constant 0 : index
    %273 = vector.load %arg18[%c0_90, %c0_91] : memref<16x128xf32, #tpu.memory_space<vmem>>, vector<16x128xf32>
    tpu.vector_store %arg18[%c0_90, %c0_91], %270 {strides = array<i32>} : memref<16x128xf32, #tpu.memory_space<vmem>>, vector<16x128xf32>,
    %c0_92 = arith.constant 0 : index
    %c0_93 = arith.constant 0 : index
    %274 = vector.load %arg19[%c0_92, %c0_93] : memref<16x128xf32, #tpu.memory_space<vmem>>, vector<16x128xf32>
    tpu.vector_store %arg19[%c0_92, %c0_93], %268 {strides = array<i32>} : memref<16x128xf32, #tpu.memory_space<vmem>>, vector<16x128xf32>,
    %c1_i32_94 = arith.constant 1 : i32
    %275 = arith.cmpi eq, %arg1, %c1_i32_94 : i32
    %276 = arith.extui %275 : i1 to i32
    %c0_i32_95 = arith.constant 0 : i32
    %277 = arith.cmpi ne, %276, %c0_i32_95 : i32
    scf.if %277 {
      %c0_96 = arith.constant 0 : index
      %c0_97 = arith.constant 0 : index
      %278 = vector.load %arg10[%c0_96, %c0_97] : memref<128x128xf32, #tpu.memory_space<vmem>>, vector<128x128xf32>
      %cst_98 = arith.constant dense<0.000000e+00> : vector<16x128xf32>
      %279 = tpu.matmul %245, %278, %cst_98 {dimension_numbers = #tpu.dot_dimension_numbers<[1], [0], [0], [1], [0, 0, 1, 1], [], []>} : vector<16x128xf32>, vector<128x128xf32>, vector<16x128xf32> -> vector<16x128xf32>
      %c0_99 = arith.constant 0 : index
      %c0_100 = arith.constant 0 : index
      %280 = vector.load %arg11[%c0_99, %c0_100] : memref<128x128xf32, #tpu.memory_space<vmem>>, vector<128x128xf32>
      %cst_101 = arith.constant dense<0.000000e+00> : vector<16x128xf32>
      %281 = tpu.matmul %270, %280, %cst_101 {dimension_numbers = #tpu.dot_dimension_numbers<[1], [0], [0], [1], [0, 0, 1, 1], [], []>} : vector<16x128xf32>, vector<128x128xf32>, vector<16x128xf32> -> vector<16x128xf32>
      %282 = arith.addf %279, %281 : vector<16x128xf32>
      %c0_102 = arith.constant 0 : index
      %c0_103 = arith.constant 0 : index
      %283 = vector.load %arg12[%c0_102, %c0_103] : memref<1x128xf32, #tpu.memory_space<vmem>>, vector<1x128xf32>
      %284 = vector.broadcast %283 : vector<1x128xf32> to vector<16x128xf32>
      %285 = arith.addf %282, %284 : vector<16x128xf32>
      %c0_104 = arith.constant 0 : index
      %c0_105 = arith.constant 0 : index
      %286 = vector.load %arg13[%c0_104, %c0_105] : memref<16x128xf32, #tpu.memory_space<vmem>>, vector<16x128xf32>
      tpu.vector_store %arg13[%c0_104, %c0_105], %285 {strides = array<i32>} : memref<16x128xf32, #tpu.memory_space<vmem>>, vector<16x128xf32>,
    } else {
    }
    return
  }
  func.func @transform_0(%arg0: i32, %arg1: i32) -> (i32, i32, i32) {
    %c0_i32 = arith.constant 0 : i32
    %c0_i32_0 = arith.constant 0 : i32
    return %arg1, %arg0, %c0_i32 : i32, i32, i32
  }
  func.func @transform_1(%arg0: i32, %arg1: i32) -> (i32, i32, i32) {
    %c1_i32 = arith.constant 1 : i32
    %0 = arith.subi %c1_i32, %arg1 : i32
    %c0_i32 = arith.constant 0 : i32
    %c0_i32_0 = arith.constant 0 : i32
    return %0, %arg0, %c0_i32 : i32, i32, i32
  }
  func.func @transform_2(%arg0: i32, %arg1: i32) -> (i32, i32) {
    %c0_i32 = arith.constant 0 : i32
    %c0_i32_0 = arith.constant 0 : i32
    %c0_i32_1 = arith.constant 0 : i32
    return %c0_i32, %c0_i32_0 : i32, i32
  }
  func.func @transform_3(%arg0: i32, %arg1: i32) -> (i32, i32) {
    %c0_i32 = arith.constant 0 : i32
    %c0_i32_0 = arith.constant 0 : i32
    %c0_i32_1 = arith.constant 0 : i32
    return %c0_i32, %c0_i32_0 : i32, i32
  }
  func.func @transform_4(%arg0: i32, %arg1: i32) -> (i32, i32) {
    %c0_i32 = arith.constant 0 : i32
    %c0_i32_0 = arith.constant 0 : i32
    %c0_i32_1 = arith.constant 0 : i32
    return %c0_i32, %c0_i32_0 : i32, i32
  }
  func.func @transform_5(%arg0: i32, %arg1: i32) -> (i32, i32) {
    %c0_i32 = arith.constant 0 : i32
    %c0_i32_0 = arith.constant 0 : i32
    %c0_i32_1 = arith.constant 0 : i32
    return %c0_i32, %c0_i32_0 : i32, i32
  }
  func.func @transform_6(%arg0: i32, %arg1: i32) -> (i32, i32) {
    %c0_i32 = arith.constant 0 : i32
    %c0_i32_0 = arith.constant 0 : i32
    %c0_i32_1 = arith.constant 0 : i32
    return %c0_i32, %c0_i32_0 : i32, i32
  }
  func.func @transform_7(%arg0: i32, %arg1: i32) -> (i32, i32) {
    %c0_i32 = arith.constant 0 : i32
    %c0_i32_0 = arith.constant 0 : i32
    %c0_i32_1 = arith.constant 0 : i32
    return %c0_i32, %c0_i32_0 : i32, i32
  }
  func.func @transform_8(%arg0: i32, %arg1: i32) -> (i32, i32) {
    %c0_i32 = arith.constant 0 : i32
    %c0_i32_0 = arith.constant 0 : i32
    %c0_i32_1 = arith.constant 0 : i32
    return %c0_i32, %c0_i32_0 : i32, i32
  }
  func.func @transform_9(%arg0: i32, %arg1: i32) -> (i32, i32) {
    %c0_i32 = arith.constant 0 : i32
    %c0_i32_0 = arith.constant 0 : i32
    %c0_i32_1 = arith.constant 0 : i32
    return %c0_i32, %c0_i32_0 : i32, i32
  }
  func.func @transform_10(%arg0: i32, %arg1: i32) -> (i32, i32) {
    %c0_i32 = arith.constant 0 : i32
    %c0_i32_0 = arith.constant 0 : i32
    %c0_i32_1 = arith.constant 0 : i32
    return %c0_i32, %c0_i32_0 : i32, i32
  }
  func.func @transform_11(%arg0: i32, %arg1: i32) -> (i32, i32) {
    %c0_i32 = arith.constant 0 : i32
    %c0_i32_0 = arith.constant 0 : i32
    return %arg0, %c0_i32 : i32, i32
  }
}

</mosaic_0001>

<llo_original>
// kernel: tpu_custom_call.1
$region0: #{tpu_custom_call.1}
  #allocation0 [shape = 'u32[]', space=smem, size = 0x4, offset = 0x4, fixed_abs, tag = 'smem constant byte address 0x4 - core index']
  #allocation1 [shape = 'u32[144,128]{1,0:T(1,128)}', space=vmem, size = 0x12000, scoped, tag = 'internal scratch']
  #allocation2 [shape = 'f32[4,16,512]{2,1,0:T(8,128)}', space=vmem, size = 0x20000, scoped, tag = 'scratch operand']
  #allocation3 [shape = 'f32[4,16,512]{2,1,0:T(8,128)}', space=vmem, size = 0x20000, scoped, tag = 'scratch operand']
  #allocation4 [shape = 'f32[16,128]{1,0:T(8,128)}', space=vmem, size = 0x2000, scoped, tag = 'scratch operand']
  #allocation5 [shape = 'f32[16,128]{1,0:T(8,128)}', space=vmem, size = 0x2000, scoped, tag = 'scratch operand']
  #allocation6 [shape = 'f32[16,128]{1,0:T(8,128)}', space=vmem, size = 0x2000, scoped, tag = 'scratch operand']
  #allocation7 [shape = 'f32[16,128]{1,0:T(8,128)}', space=vmem, size = 0x2000, scoped, tag = 'scratch operand']
  %s0 = inlined_call_operand.hbm [shape: f32[8,16,32], index: 0, kind: input, shape index: {}]
  %s1 = inlined_call_operand.hbm [shape: f32[8,16,32], index: 1, kind: input, shape index: {}]
  %s2 = inlined_call_operand.hbm [shape: f32[32,512], index: 2, kind: input, shape index: {}]
  %s3 = inlined_call_operand.hbm [shape: f32[128,512], index: 3, kind: input, shape index: {}]
  %s4 = inlined_call_operand.vmem [shape: f32[1,512], index: 4, kind: input, shape index: {}]
  %s5 = inlined_call_operand.hbm [shape: f32[32,512], index: 5, kind: input, shape index: {}]
  %s6 = inlined_call_operand.hbm [shape: f32[128,512], index: 6, kind: input, shape index: {}]
  %s7 = inlined_call_operand.vmem [shape: f32[1,512], index: 7, kind: input, shape index: {}]
  %s8 = inlined_call_operand.hbm [shape: f32[128,128], index: 8, kind: input, shape index: {}]
  %s9 = inlined_call_operand.hbm [shape: f32[128,128], index: 9, kind: input, shape index: {}]
  %s10 = inlined_call_operand.vmem [shape: f32[1,128], index: 10, kind: input, shape index: {}]
  %s11 = inlined_call_operand.hbm [shape: f32[16,128], index: 11, kind: output, shape index: {}]
  %s12 = sld [smem:[#allocation0]]
  $region117: #{tpu_custom_call.1} parent=0
    _
  %s14 = ssub.s32 1, %s12
  %s15 = scalar_select 0, %s14, %s12
  $region1: #{tpu_custom_call.1} parent=0
    #allocation8 [shape = 'u8[65536]{0}', space=vmem, size = 0x10000, scoped, tag = 'input window, operand 0']
    #allocation9 [shape = 's32[2]{0}', space=sflag, size = 0x8, scoped, tag = 'scoped memory for tpu_custom_call.1']
    #allocation10 [shape = 's32[2]{0}', space=sflag, size = 0x8, scoped, tag = 'scoped memory for tpu_custom_call.1']
    #allocation11 [shape = 'u8[65536]{0}', space=vmem, size = 0x10000, scoped, tag = 'input window, operand 1']
    #allocation12 [shape = 's32[2]{0}', space=sflag, size = 0x8, scoped, tag = 'scoped memory for tpu_custom_call.1']
    #allocation13 [shape = 'u8[65536]{0}', space=vmem, size = 0x10000, scoped, tag = 'input window, operand 2, single buffered']
    #allocation14 [shape = 'u8[262144]{0}', space=vmem, size = 0x40000, scoped, tag = 'input window, operand 3, single buffered']
    #allocation15 [shape = 's32[1]{0}', space=sflag, size = 0x4, scoped, tag = 'scoped memory for tpu_custom_call.1']
    #allocation16 [shape = 'u8[65536]{0}', space=vmem, size = 0x10000, scoped, tag = 'input window, operand 5, single buffered']
    #allocation17 [shape = 'u8[262144]{0}', space=vmem, size = 0x40000, scoped, tag = 'input window, operand 6, single buffered']
    #allocation18 [shape = 's32[1]{0}', space=sflag, size = 0x4, scoped, tag = 'scoped memory for tpu_custom_call.1']
    #allocation19 [shape = 'u8[65536]{0}', space=vmem, size = 0x10000, scoped, tag = 'input window, operand 8, single buffered']
    #allocation20 [shape = 'u8[65536]{0}', space=vmem, size = 0x10000, scoped, tag = 'input window, operand 9, single buffered']
    #allocation21 [shape = 's32[1]{0}', space=sflag, size = 0x4, scoped, tag = 'scoped memory for tpu_custom_call.1']
    #allocation22 [shape = 'u8[8192]{0}', space=vmem, size = 0x2000, scoped, tag = 'output window, operand 0, single buffered']
    %16 = vsyncpa [#allocation9], 0
    %s17 = scalar_lea.sflag [#allocation9], 1
    %18 = vsyncpa %s17, 0
    %19 = vsyncpa [#allocation12], 0
    %s20 = scalar_lea.sflag [#allocation12], 1
    %21 = vsyncpa %s20, 0
    %22 = vsyncpa [#allocation15], 0
    %23 = vsyncpa [#allocation18], 0
    %24 = vsyncpa [#allocation21], 0
    %25 = vsyncpa [#allocation10], 0
    loop: start=0, step=1, limit=4
    $region2: #{tpu_custom_call.1} parent=1 // loop_pre_header
      _
    $region3: #{tpu_custom_call.1} parent=1 // loop_header
      %s27 = sphi 0, %s31
      %p28 = scmp.ge.s32.totalorder %s27, 4
      %s34 = sphi 0, %s46
      %s35 = sphi 0, %s42
      %s36 = sphi 0, %s34
      %s37 = sphi 0, %s35
      %s38 = sphi 0, %s36
      %s39 = sphi 0, %s37
      %s51 = sphi 0, %s53
      %s54 = sphi 0, %s51
      %s55 = sphi 0, %s54
      %s71 = sphi 0, %s55
      %s81 = sphi 0, %s83
      %s84 = sphi 0, %s81
      %s85 = sphi 0, %s84
      %s101 = sphi 0, %s85
      %s105 = sphi 0, %s105
      %s107 = sphi 0, %s105
      %s108 = sphi 0, %s107
      %s122 = sphi 0, %s108
      %s126 = sphi 0, %s126
      %s128 = sphi 0, %s126
      %s129 = sphi 0, %s128
      %s143 = sphi 0, %s129
      %s147 = sphi 0, %s147
      %s149 = sphi 0, %s147
      %s150 = sphi 0, %s149
      %s164 = sphi 0, %s150
      %s168 = sphi 0, %s168
      %s170 = sphi 0, %s168
      %s171 = sphi 0, %s170
      %s185 = sphi 0, %s171
      %s189 = sphi 0, %s189
      %s191 = sphi 0, %s189
      %s192 = sphi 0, %s191
      %s206 = sphi 0, %s192
      %s210 = sphi 0, %s210
      %s212 = sphi 0, %s210
      %s213 = sphi 0, %s212
      %s227 = sphi 0, %s213
      %s231 = sphi 0, %s231
      %s233 = sphi 0, %s231
      %s234 = sphi 0, %s233
      %s248 = sphi 0, %s234
      %s252 = sphi 0, %s252
      %s254 = sphi 0, %s252
      %s255 = sphi 0, %s254
      %s269 = sphi 0, %s255
      %s273 = sphi 0, %s273
      %s275 = sphi 0, %s273
      %s276 = sphi 0, %s275
      %s290 = sphi 0, %s276
      %s296 = sphi 0, %s298
      %s299 = sphi 0, %s296
      %s300 = sphi 0, %s299
      %s316 = sphi 0, %s300
    $region4: #{tpu_custom_call.1} parent=1 // loop_header_branch
      %30 = sbr.rel (%p28) target = $region8
    $region5: #{tpu_custom_call.1} parent=1 // loop_body
      %s32 = ssub.s32 %s27, 1
      %s33 = ssub.s32 %s27, 2
      %s40 = sadd.s32 1, %s35
      %p41 = scmp.ge.s32.totalorder %s40, 2
      %s42 = scalar_select %p41, 0, %s40
      %s43 = sadd.s32 1, %s34
      %s44 = scalar_select %p41, %s43, %s34
      %p45 = scmp.ge.s32.totalorder %s44, 1
      %s46 = scalar_select %p45, 0, %s44
      %s47 = ssub.s32 %s35, %s42
      %s48 = ssub.s32 %s34, %s46
      %s49 = sor.u32 %s47, %s48
      %p50 = scmp.eq.s32.totalorder %s49, 0
      %s52 = sadd.s32 %s51, 1
      %s53 = scalar_select %p50, %s51, %s52
      %p56 = pneg %p50
      %p57 = scmp.eq.s32.totalorder %s27, 1
      %p58 = por %p56, %p57
      %p59 = scmp.ne.s32.totalorder %s51, %s54
      %p60 = scmp.eq.s32.totalorder %s27, 0
      %p61 = por %p59, %p60
      %p62 = scmp.ne.s32.totalorder %s51, %s54
      %p63 = scmp.eq.s32.totalorder %s32, 1
      %p64 = por %p62, %p63
      %p65 = scmp.ne.s32.totalorder %s54, %s55
      %p66 = scmp.eq.s32.totalorder %s32, 0
      %p67 = por %p65, %p66
      %p68 = scmp.ne.s32.totalorder %s54, %s55
      %p69 = scmp.eq.s32.totalorder %s33, 1
      %p70 = por %p68, %p69
      %p72 = scmp.ne.s32.totalorder %s55, %s71
      %p73 = scmp.eq.s32.totalorder %s33, 0
      %p74 = por %p72, %p73
      %s75 = ssub.s32 1, %s35
      %s76 = ssub.s32 1, %s42
      %s77 = ssub.s32 %s75, %s76
      %s78 = ssub.s32 %s34, %s46
      %s79 = sor.u32 %s77, %s78
      %p80 = scmp.eq.s32.totalorder %s79, 0
      %s82 = sadd.s32 %s81, 1
      %s83 = scalar_select %p80, %s81, %s82
      %p86 = pneg %p80
      %p87 = scmp.eq.s32.totalorder %s27, 1
      %p88 = por %p86, %p87
      %p89 = scmp.ne.s32.totalorder %s81, %s84
      %p90 = scmp.eq.s32.totalorder %s27, 0
      %p91 = por %p89, %p90
      %p92 = scmp.ne.s32.totalorder %s81, %s84
      %p93 = scmp.eq.s32.totalorder %s32, 1
      %p94 = por %p92, %p93
      %p95 = scmp.ne.s32.totalorder %s84, %s85
      %p96 = scmp.eq.s32.totalorder %s32, 0
      %p97 = por %p95, %p96
      %p98 = scmp.ne.s32.totalorder %s84, %s85
      %p99 = scmp.eq.s32.totalorder %s33, 1
      %p100 = por %p98, %p99
      %p102 = scmp.ne.s32.totalorder %s85, %s101
      %p103 = scmp.eq.s32.totalorder %s33, 0
      %p104 = por %p102, %p103
      %s106 = sadd.s32 %s105, 1
      %p109 = scmp.eq.s32.totalorder %s27, 1
      %p110 = scmp.ne.s32.totalorder %s105, %s107
      %p111 = scmp.eq.s32.totalorder %s27, 0
      %p112 = por %p110, %p111
      %p113 = scmp.ne.s32.totalorder %s105, %s107
      %p114 = scmp.eq.s32.totalorder %s32, 1
      %p115 = por %p113, %p114
      %p116 = scmp.ne.s32.totalorder %s107, %s108
      %p117 = scmp.eq.s32.totalorder %s32, 0
      %p118 = por %p116, %p117
      %p119 = scmp.ne.s32.totalorder %s107, %s108
      %p120 = scmp.eq.s32.totalorder %s33, 1
      %p121 = por %p119, %p120
      %p123 = scmp.ne.s32.totalorder %s108, %s122
      %p124 = scmp.eq.s32.totalorder %s33, 0
      %p125 = por %p123, %p124
      %s127 = sadd.s32 %s126, 1
      %p130 = scmp.eq.s32.totalorder %s27, 1
      %p131 = scmp.ne.s32.totalorder %s126, %s128
      %p132 = scmp.eq.s32.totalorder %s27, 0
      %p133 = por %p131, %p132
      %p134 = scmp.ne.s32.totalorder %s126, %s128
      %p135 = scmp.eq.s32.totalorder %s32, 1
      %p136 = por %p134, %p135
      %p137 = scmp.ne.s32.totalorder %s128, %s129
      %p138 = scmp.eq.s32.totalorder %s32, 0
      %p139 = por %p137, %p138
      %p140 = scmp.ne.s32.totalorder %s128, %s129
      %p141 = scmp.eq.s32.totalorder %s33, 1
      %p142 = por %p140, %p141
      %p144 = scmp.ne.s32.totalorder %s129, %s143
      %p145 = scmp.eq.s32.totalorder %s33, 0
      %p146 = por %p144, %p145
      %s148 = sadd.s32 %s147, 1
      %p151 = scmp.eq.s32.totalorder %s27, 1
      %p152 = scmp.ne.s32.totalorder %s147, %s149
      %p153 = scmp.eq.s32.totalorder %s27, 0
      %p154 = por %p152, %p153
      %p155 = scmp.ne.s32.totalorder %s147, %s149
      %p156 = scmp.eq.s32.totalorder %s32, 1
      %p157 = por %p155, %p156
      %p158 = scmp.ne.s32.totalorder %s149, %s150
      %p159 = scmp.eq.s32.totalorder %s32, 0
      %p160 = por %p158, %p159
      %p161 = scmp.ne.s32.totalorder %s149, %s150
      %p162 = scmp.eq.s32.totalorder %s33, 1
      %p163 = por %p161, %p162
      %p165 = scmp.ne.s32.totalorder %s150, %s164
      %p166 = scmp.eq.s32.totalorder %s33, 0
      %p167 = por %p165, %p166
      %s169 = sadd.s32 %s168, 1
      %p172 = scmp.eq.s32.totalorder %s27, 1
      %p173 = scmp.ne.s32.totalorder %s168, %s170
      %p174 = scmp.eq.s32.totalorder %s27, 0
      %p175 = por %p173, %p174
      %p176 = scmp.ne.s32.totalorder %s168, %s170
      %p177 = scmp.eq.s32.totalorder %s32, 1
      %p178 = por %p176, %p177
      %p179 = scmp.ne.s32.totalorder %s170, %s171
      %p180 = scmp.eq.s32.totalorder %s32, 0
      %p181 = por %p179, %p180
      %p182 = scmp.ne.s32.totalorder %s170, %s171
      %p183 = scmp.eq.s32.totalorder %s33, 1
      %p184 = por %p182, %p183
      %p186 = scmp.ne.s32.totalorder %s171, %s185
      %p187 = scmp.eq.s32.totalorder %s33, 0
      %p188 = por %p186, %p187
      %s190 = sadd.s32 %s189, 1
      %p193 = scmp.eq.s32.totalorder %s27, 1
      %p194 = scmp.ne.s32.totalorder %s189, %s191
      %p195 = scmp.eq.s32.totalorder %s27, 0
      %p196 = por %p194, %p195
      %p197 = scmp.ne.s32.totalorder %s189, %s191
      %p198 = scmp.eq.s32.totalorder %s32, 1
      %p199 = por %p197, %p198
      %p200 = scmp.ne.s32.totalorder %s191, %s192
      %p201 = scmp.eq.s32.totalorder %s32, 0
      %p202 = por %p200, %p201
      %p203 = scmp.ne.s32.totalorder %s191, %s192
      %p204 = scmp.eq.s32.totalorder %s33, 1
      %p205 = por %p203, %p204
      %p207 = scmp.ne.s32.totalorder %s192, %s206
      %p208 = scmp.eq.s32.totalorder %s33, 0
      %p209 = por %p207, %p208
      %s211 = sadd.s32 %s210, 1
      %p214 = scmp.eq.s32.totalorder %s27, 1
      %p215 = scmp.ne.s32.totalorder %s210, %s212
      %p216 = scmp.eq.s32.totalorder %s27, 0
      %p217 = por %p215, %p216
      %p218 = scmp.ne.s32.totalorder %s210, %s212
      %p219 = scmp.eq.s32.totalorder %s32, 1
      %p220 = por %p218, %p219
      %p221 = scmp.ne.s32.totalorder %s212, %s213
      %p222 = scmp.eq.s32.totalorder %s32, 0
      %p223 = por %p221, %p222
      %p224 = scmp.ne.s32.totalorder %s212, %s213
      %p225 = scmp.eq.s32.totalorder %s33, 1
      %p226 = por %p224, %p225
      %p228 = scmp.ne.s32.totalorder %s213, %s227
      %p229 = scmp.eq.s32.totalorder %s33, 0
      %p230 = por %p228, %p229
      %s232 = sadd.s32 %s231, 1
      %p235 = scmp.eq.s32.totalorder %s27, 1
      %p236 = scmp.ne.s32.totalorder %s231, %s233
      %p237 = scmp.eq.s32.totalorder %s27, 0
      %p238 = por %p236, %p237
      %p239 = scmp.ne.s32.totalorder %s231, %s233
      %p240 = scmp.eq.s32.totalorder %s32, 1
      %p241 = por %p239, %p240
      %p242 = scmp.ne.s32.totalorder %s233, %s234
      %p243 = scmp.eq.s32.totalorder %s32, 0
      %p244 = por %p242, %p243
      %p245 = scmp.ne.s32.totalorder %s233, %s234
      %p246 = scmp.eq.s32.totalorder %s33, 1
      %p247 = por %p245, %p246
      %p249 = scmp.ne.s32.totalorder %s234, %s248
      %p250 = scmp.eq.s32.totalorder %s33, 0
      %p251 = por %p249, %p250
      %s253 = sadd.s32 %s252, 1
      %p256 = scmp.eq.s32.totalorder %s27, 1
      %p257 = scmp.ne.s32.totalorder %s252, %s254
      %p258 = scmp.eq.s32.totalorder %s27, 0
      %p259 = por %p257, %p258
      %p260 = scmp.ne.s32.totalorder %s252, %s254
      %p261 = scmp.eq.s32.totalorder %s32, 1
      %p262 = por %p260, %p261
      %p263 = scmp.ne.s32.totalorder %s254, %s255
      %p264 = scmp.eq.s32.totalorder %s32, 0
      %p265 = por %p263, %p264
      %p266 = scmp.ne.s32.totalorder %s254, %s255
      %p267 = scmp.eq.s32.totalorder %s33, 1
      %p268 = por %p266, %p267
      %p270 = scmp.ne.s32.totalorder %s255, %s269
      %p271 = scmp.eq.s32.totalorder %s33, 0
      %p272 = por %p270, %p271
      %s274 = sadd.s32 %s273, 1
      %p277 = scmp.eq.s32.totalorder %s27, 1
      %p278 = scmp.ne.s32.totalorder %s273, %s275
      %p279 = scmp.eq.s32.totalorder %s27, 0
      %p280 = por %p278, %p279
      %p281 = scmp.ne.s32.totalorder %s273, %s275
      %p282 = scmp.eq.s32.totalorder %s32, 1
      %p283 = por %p281, %p282
      %p284 = scmp.ne.s32.totalorder %s275, %s276
      %p285 = scmp.eq.s32.totalorder %s32, 0
      %p286 = por %p284, %p285
      %p287 = scmp.ne.s32.totalorder %s275, %s276
      %p288 = scmp.eq.s32.totalorder %s33, 1
      %p289 = por %p287, %p288
      %p291 = scmp.ne.s32.totalorder %s276, %s290
      %p292 = scmp.eq.s32.totalorder %s33, 0
      %p293 = por %p291, %p292
      %s294 = ssub.s32 %s34, %s46
      %p295 = scmp.eq.s32.totalorder %s294, 0
      %s297 = sadd.s32 %s296, 1
      %s298 = scalar_select %p295, %s296, %s297
      %p301 = pneg %p295
      %p302 = scmp.eq.s32.totalorder %s27, 1
      %p303 = por %p301, %p302
      %p304 = scmp.ne.s32.totalorder %s296, %s299
      %p305 = scmp.eq.s32.totalorder %s27, 0
      %p306 = por %p304, %p305
      %p307 = scmp.ne.s32.totalorder %s296, %s299
      %p308 = scmp.eq.s32.totalorder %s32, 1
      %p309 = por %p307, %p308
      %p310 = scmp.ne.s32.totalorder %s299, %s300
      %p311 = scmp.eq.s32.totalorder %s32, 0
      %p312 = por %p310, %p311
      %p313 = scmp.ne.s32.totalorder %s299, %s300
      %p314 = scmp.eq.s32.totalorder %s33, 1
      %p315 = por %p313, %p314
      %p317 = scmp.ne.s32.totalorder %s300, %s316
      %p318 = scmp.eq.s32.totalorder %s33, 0
      %p319 = por %p317, %p318
      %p320 = scmp.le.s32.totalorder 1, %s27
      %p321 = scmp.lt.s32.totalorder %s27, 3
      %p322 = pnand %p320, %p321
      %p323 = pneg %p322
      // Predicated region
      $region9: #{tpu_custom_call.1} parent=5 // pred_check
        _
      $region10: #{tpu_custom_call.1} parent=5 // pred_check_branch
        %325 = sbr.rel (%p322) target = $region12
      $region11: #{tpu_custom_call.1} parent=5 // pred_region
        %s326 = ssub.s32 %s27, 1
        // Predicated region
        $region13: #{tpu_custom_call.1} parent=11 // pred_check
          %p327 = pneg %p118
        $region14: #{tpu_custom_call.1} parent=11 // pred_check_branch
          %329 = sbr.rel (%p327) target = $region16
        $region15: #{tpu_custom_call.1} parent=11 // pred_region
          %s331 = ssub.s32 2048, 2048
          %332 = vsyncadd [#allocation12], %s331
          %s333 = sshll.u32 [#allocation13], 4
          %s334 = int_to_ptr.vmem [resolvable:$true] %s333
          %339 = dma.hbm_to_vmem [thread:$0]  %s2, 2048, %s334, [#allocation12], 512, 512, 32
        $region16: #{tpu_custom_call.1} parent=11 // pred_fallthru
          _
        // Predicated region
        $region17: #{tpu_custom_call.1} parent=11 // pred_check
          %p340 = pneg %p139
        $region18: #{tpu_custom_call.1} parent=11 // pred_check_branch
          %342 = sbr.rel (%p340) target = $region20
        $region19: #{tpu_custom_call.1} parent=11 // pred_region
          %s344 = ssub.s32 8192, 8192
          %345 = vsyncadd [#allocation15], %s344
          %s346 = sshll.u32 [#allocation14], 4
          %s347 = int_to_ptr.vmem [resolvable:$true] %s346
          %352 = dma.hbm_to_vmem [thread:$0]  %s3, 8192, %s347, [#allocation15], 512, 512, 32
        $region20: #{tpu_custom_call.1} parent=11 // pred_fallthru
          _
        // Predicated region
        $region21: #{tpu_custom_call.1} parent=11 // pred_check
          %p353 = pneg %p160
        $region22: #{tpu_custom_call.1} parent=11 // pred_check_branch
          %355 = sbr.rel (%p353) target = $region24
        $region23: #{tpu_custom_call.1} parent=11 // pred_region
          _
        $region24: #{tpu_custom_call.1} parent=11 // pred_fallthru
          _
        // Predicated region
        $region25: #{tpu_custom_call.1} parent=11 // pred_check
          %p356 = pneg %p181
        $region26: #{tpu_custom_call.1} parent=11 // pred_check_branch
          %358 = sbr.rel (%p356) target = $region28
        $region27: #{tpu_custom_call.1} parent=11 // pred_region
          %s360 = ssub.s32 2048, 2048
          %361 = vsyncadd [#allocation15], %s360
          %s362 = sshll.u32 [#allocation16], 4
          %s363 = int_to_ptr.vmem [resolvable:$true] %s362
          %368 = dma.hbm_to_vmem [thread:$0]  %s5, 2048, %s363, [#allocation15], 512, 512, 32
        $region28: #{tpu_custom_call.1} parent=11 // pred_fallthru
          _
        // Predicated region
        $region29: #{tpu_custom_call.1} parent=11 // pred_check
          %p369 = pneg %p202
        $region30: #{tpu_custom_call.1} parent=11 // pred_check_branch
          %371 = sbr.rel (%p369) target = $region32
        $region31: #{tpu_custom_call.1} parent=11 // pred_region
          %s373 = ssub.s32 8192, 8192
          %374 = vsyncadd [#allocation18], %s373
          %s375 = sshll.u32 [#allocation17], 4
          %s376 = int_to_ptr.vmem [resolvable:$true] %s375
          %381 = dma.hbm_to_vmem [thread:$0]  %s6, 8192, %s376, [#allocation18], 512, 512, 32
        $region32: #{tpu_custom_call.1} parent=11 // pred_fallthru
          _
        // Predicated region
        $region33: #{tpu_custom_call.1} parent=11 // pred_check
          %p382 = pneg %p223
        $region34: #{tpu_custom_call.1} parent=11 // pred_check_branch
          %384 = sbr.rel (%p382) target = $region36
        $region35: #{tpu_custom_call.1} parent=11 // pred_region
          _
        $region36: #{tpu_custom_call.1} parent=11 // pred_fallthru
          _
        // Predicated region
        $region37: #{tpu_custom_call.1} parent=11 // pred_check
          %p385 = pneg %p244
        $region38: #{tpu_custom_call.1} parent=11 // pred_check_branch
          %387 = sbr.rel (%p385) target = $region40
        $region39: #{tpu_custom_call.1} parent=11 // pred_region
          %s389 = ssub.s32 2048, 2048
          %390 = vsyncadd [#allocation18], %s389
          %s391 = sshll.u32 [#allocation19], 4
          %s392 = int_to_ptr.vmem [resolvable:$true] %s391
          %397 = dma.hbm_to_vmem [thread:$0]  %s8, 2048, %s392, [#allocation18], 128, 128, 8
        $region40: #{tpu_custom_call.1} parent=11 // pred_fallthru
          _
        // Predicated region
        $region41: #{tpu_custom_call.1} parent=11 // pred_check
          %p398 = pneg %p265
        $region42: #{tpu_custom_call.1} parent=11 // pred_check_branch
          %400 = sbr.rel (%p398) target = $region44
        $region43: #{tpu_custom_call.1} parent=11 // pred_region
          %s402 = ssub.s32 2048, 2048
          %403 = vsyncadd [#allocation21], %s402
          %s404 = sshll.u32 [#allocation20], 4
          %s405 = int_to_ptr.vmem [resolvable:$true] %s404
          %410 = dma.hbm_to_vmem [thread:$0]  %s9, 2048, %s405, [#allocation21], 128, 128, 8
        $region44: #{tpu_custom_call.1} parent=11 // pred_fallthru
          _
        // Predicated region
        $region45: #{tpu_custom_call.1} parent=11 // pred_check
          %p411 = pneg %p286
        $region46: #{tpu_custom_call.1} parent=11 // pred_check_branch
          %413 = sbr.rel (%p411) target = $region48
        $region47: #{tpu_custom_call.1} parent=11 // pred_region
          _
        $region48: #{tpu_custom_call.1} parent=11 // pred_fallthru
          _
      $region12: #{tpu_custom_call.1} parent=5 // pred_fallthru
        _
      %p414 = scmp.lt.s32.totalorder %s27, 2
      // Predicated region
      $region49: #{tpu_custom_call.1} parent=5 // pred_check
        %p415 = pneg %p414
      $region50: #{tpu_custom_call.1} parent=5 // pred_check_branch
        %417 = sbr.rel (%p415) target = $region52
      $region51: #{tpu_custom_call.1} parent=5 // pred_region
        // Predicated region
        $region53: #{tpu_custom_call.1} parent=51 // pred_check
          %p418 = pneg %p61
        $region54: #{tpu_custom_call.1} parent=51 // pred_check_branch
          %420 = sbr.rel (%p418) target = $region56
        $region55: #{tpu_custom_call.1} parent=51 // pred_region
          %s421 = sand.u32 %s51, 1
          %s422 = scalar_lea.sflag [#allocation9], %s421
          %s423 = sand.u32 %s51, 1
          %s424 = smul.addr %s423, 64
          %s425 = scalar_lea.vmem [#allocation8], %s424
          %s426 = smul.u32 4, %s35
          %s427 = smul.u32 2, %s34
          %s429 = ssub.s32 1024, 1024
          %430 = vsyncadd %s422, %s429
          %s431 = smul.addr %s426, 2
          %s432 = sadd.s32 %s427, %s431
          %s433 = smul.addr %s432, 128
          %s434 = scalar_lea.hbm %s0, %s433
          %s435 = sshll.u32 %s425, 4
          %s436 = int_to_ptr.vmem [resolvable:$true] %s435
          %441 = dma.hbm_to_vmem [thread:$0]  %s434, 1024, %s436, %s422, 128, 128, 8
        $region56: #{tpu_custom_call.1} parent=51 // pred_fallthru
          _
        // Predicated region
        $region57: #{tpu_custom_call.1} parent=51 // pred_check
          %p442 = pneg %p91
        $region58: #{tpu_custom_call.1} parent=51 // pred_check_branch
          %444 = sbr.rel (%p442) target = $region60
        $region59: #{tpu_custom_call.1} parent=51 // pred_region
          %s445 = sand.u32 %s27, 1
          %s446 = scalar_lea.sflag [#allocation12], %s445
          %s447 = sand.u32 %s81, 1
          %s448 = smul.addr %s447, 64
          %s449 = scalar_lea.vmem [#allocation11], %s448
          %s450 = ssub.s32 1, %s35
          %s451 = smul.u32 4, %s450
          %s452 = smul.u32 2, %s34
          %s454 = ssub.s32 1024, 1024
          %455 = vsyncadd %s446, %s454
          %s456 = smul.addr %s451, 2
          %s457 = sadd.s32 %s452, %s456
          %s458 = smul.addr %s457, 128
          %s459 = scalar_lea.hbm %s1, %s458
          %s460 = sshll.u32 %s449, 4
          %s461 = int_to_ptr.vmem [resolvable:$true] %s460
          %466 = dma.hbm_to_vmem [thread:$0]  %s459, 1024, %s461, %s446, 128, 128, 8
        $region60: #{tpu_custom_call.1} parent=51 // pred_fallthru
          _
      $region52: #{tpu_custom_call.1} parent=5 // pred_fallthru
        _
      %p467 = scmp.le.s32.totalorder 1, %s27
      %p468 = scmp.lt.s32.totalorder %s27, 3
      %p469 = pnand %p467, %p468
      %p470 = pneg %p469
      // Predicated region
      $region61: #{tpu_custom_call.1} parent=5 // pred_check
        _
      $region62: #{tpu_custom_call.1} parent=5 // pred_check_branch
        %472 = sbr.rel (%p469) target = $region64
      $region63: #{tpu_custom_call.1} parent=5 // pred_region
        %s473 = ssub.s32 %s27, 1
        %s474 = sand.u32 %s54, 1
        %s475 = scalar_lea.sflag [#allocation9], %s474
        %s476 = sand.u32 %s54, 1
        %s477 = smul.addr %s476, 64
        %s478 = scalar_lea.vmem [#allocation8], %s477
        // Predicated region
        $region65: #{tpu_custom_call.1} parent=63 // pred_check
          %p479 = pneg %p67
        $region66: #{tpu_custom_call.1} parent=63 // pred_check_branch
          %481 = sbr.rel (%p479) target = $region68
        $region67: #{tpu_custom_call.1} parent=63 // pred_region
          %482 = dma.done %s475, 1024
        $region68: #{tpu_custom_call.1} parent=63 // pred_fallthru
          _
        %s483 = sand.u32 %s32, 1
        %s484 = scalar_lea.sflag [#allocation12], %s483
        %s485 = sand.u32 %s84, 1
        %s486 = smul.addr %s485, 64
        %s487 = scalar_lea.vmem [#allocation11], %s486
        // Predicated region
        $region69: #{tpu_custom_call.1} parent=63 // pred_check
          %p488 = pneg %p97
        $region70: #{tpu_custom_call.1} parent=63 // pred_check_branch
          %490 = sbr.rel (%p488) target = $region72
        $region71: #{tpu_custom_call.1} parent=63 // pred_region
          %491 = dma.done %s484, 1024
        $region72: #{tpu_custom_call.1} parent=63 // pred_fallthru
          _
        // Predicated region
        $region73: #{tpu_custom_call.1} parent=63 // pred_check
          %p492 = pneg %p118
        $region74: #{tpu_custom_call.1} parent=63 // pred_check_branch
          %494 = sbr.rel (%p492) target = $region76
        $region75: #{tpu_custom_call.1} parent=63 // pred_region
          %495 = dma.done [#allocation12], 2048
        $region76: #{tpu_custom_call.1} parent=63 // pred_fallthru
          _
        // Predicated region
        $region77: #{tpu_custom_call.1} parent=63 // pred_check
          %p496 = pneg %p139
        $region78: #{tpu_custom_call.1} parent=63 // pred_check_branch
          %498 = sbr.rel (%p496) target = $region80
        $region79: #{tpu_custom_call.1} parent=63 // pred_region
          %499 = dma.done [#allocation15], 8192
        $region80: #{tpu_custom_call.1} parent=63 // pred_fallthru
          _
        // Predicated region
        $region81: #{tpu_custom_call.1} parent=63 // pred_check
          %p500 = pneg %p181
        $region82: #{tpu_custom_call.1} parent=63 // pred_check_branch
          %502 = sbr.rel (%p500) target = $region84
        $region83: #{tpu_custom_call.1} parent=63 // pred_region
          %503 = dma.done [#allocation15], 2048
        $region84: #{tpu_custom_call.1} parent=63 // pred_fallthru
          _
        // Predicated region
        $region85: #{tpu_custom_call.1} parent=63 // pred_check
          %p504 = pneg %p202
        $region86: #{tpu_custom_call.1} parent=63 // pred_check_branch
          %506 = sbr.rel (%p504) target = $region88
        $region87: #{tpu_custom_call.1} parent=63 // pred_region
          %507 = dma.done [#allocation18], 8192
        $region88: #{tpu_custom_call.1} parent=63 // pred_fallthru
          _
        // Predicated region
        $region89: #{tpu_custom_call.1} parent=63 // pred_check
          %p508 = pneg %p244
        $region90: #{tpu_custom_call.1} parent=63 // pred_check_branch
          %510 = sbr.rel (%p508) target = $region92
        $region91: #{tpu_custom_call.1} parent=63 // pred_region
          %511 = dma.done [#allocation18], 2048
        $region92: #{tpu_custom_call.1} parent=63 // pred_fallthru
          _
        // Predicated region
        $region93: #{tpu_custom_call.1} parent=63 // pred_check
          %p512 = pneg %p265
        $region94: #{tpu_custom_call.1} parent=63 // pred_check_branch
          %514 = sbr.rel (%p512) target = $region96
        $region95: #{tpu_custom_call.1} parent=63 // pred_region
          %515 = dma.done [#allocation21], 2048
        $region96: #{tpu_custom_call.1} parent=63 // pred_fallthru
          _
        %s516 = sand.u32 %s54, 1
        %s517 = scalar_lea.sflag [#allocation9], %s516
        %s518 = sand.u32 %s54, 1
        %s519 = smul.addr %s518, 64
        %s520 = scalar_lea.vmem [#allocation8], %s519
        %p521 = pneg %p67
        %p522 = pneg %p64
        %s523 = sand.u32 %s32, 1
        %s524 = scalar_lea.sflag [#allocation12], %s523
        %s525 = sand.u32 %s84, 1
        %s526 = smul.addr %s525, 64
        %s527 = scalar_lea.vmem [#allocation11], %s526
        %p528 = pneg %p97
        %p529 = pneg %p94
        %p530 = pneg %p118
        %p531 = pneg %p115
        %p532 = pneg %p139
        %p533 = pneg %p136
        %p534 = pneg %p160
        %p535 = pneg %p157
        %p536 = pneg %p181
        %p537 = pneg %p178
        %p538 = pneg %p202
        %p539 = pneg %p199
        %p540 = pneg %p223
        %p541 = pneg %p220
        %p542 = pneg %p244
        %p543 = pneg %p241
        %p544 = pneg %p265
        %p545 = pneg %p262
        %p546 = pneg %p286
        %p547 = pneg %p283
        %p548 = pneg %p312
        %p549 = pneg %p309
        %s550 = smul.u32 4, %s37
        %s551 = smul.u32 2, %s36
        %s552 = ssub.s32 1, %s37
        %s553 = smul.u32 4, %s552
        %s554 = smul.u32 2, %s36
        %s555 = smul.u32 2, %s36
        %p556 = scmp.eq.s32.totalorder %s37, 0
        // Predicated region
        $region97: #{tpu_custom_call.1} parent=63 // pred_check
          %p557 = pneg %p556
        $region98: #{tpu_custom_call.1} parent=63 // pred_check_branch
          %559 = sbr.rel (%p557) target = $region100
        $region99: #{tpu_custom_call.1} parent=63 // pred_region
          %560 = vst [vmem:[#allocation4] sm:$0xff] 0.0
          %561 = vst [vmem:[#allocation4 + $0x8] sm:$0xff] 0.0
          %562 = vst [vmem:[#allocation5] sm:$0xff] 0.0
          %563 = vst [vmem:[#allocation5 + $0x8] sm:$0xff] 0.0
          %564 = vst [vmem:[#allocation6] sm:$0xff] 0.0
          %565 = vst [vmem:[#allocation6 + $0x8] sm:$0xff] 0.0
          %566 = vst [vmem:[#allocation7] sm:$0xff] 0.0
          %567 = vst [vmem:[#allocation7 + $0x8] sm:$0xff] 0.0
        $region100: #{tpu_custom_call.1} parent=63 // pred_fallthru
          _
        %v568 = vld [vmem:[%s478] sm:$0xff]
        %v569 = vld [vmem:[%s478 + $0x8] sm:$0xff]
        %v570 = vld [vmem:[%s478 + $0x10] sm:$0xff]
        %v571 = vld [vmem:[%s478 + $0x18] sm:$0xff]
        %v572 = vld [vmem:[%s478 + $0x20] sm:$0xff]
        %v573 = vld [vmem:[%s478 + $0x28] sm:$0xff]
        %v574 = vld [vmem:[%s478 + $0x30] sm:$0xff]
        %v575 = vld [vmem:[%s478 + $0x38] sm:$0xff]
        %v576 = vld [vmem:[%s487] sm:$0xff]
        %v577 = vld [vmem:[%s487 + $0x8] sm:$0xff]
        %v578 = vld [vmem:[%s487 + $0x10] sm:$0xff]
        %v579 = vld [vmem:[%s487 + $0x18] sm:$0xff]
        %v580 = vld [vmem:[%s487 + $0x20] sm:$0xff]
        %v581 = vld [vmem:[%s487 + $0x28] sm:$0xff]
        %v582 = vld [vmem:[%s487 + $0x30] sm:$0xff]
        %v583 = vld [vmem:[%s487 + $0x38] sm:$0xff]
        %v584 = vld [vmem:[#allocation13] sm:$0xff]
        %v585 = vld [vmem:[#allocation13 + $0x8] sm:$0xff]
        %v586 = vld [vmem:[#allocation13 + $0x10] sm:$0xff]
        %v587 = vld [vmem:[#allocation13 + $0x18] sm:$0xff]
        %v588 = vld [vmem:[#allocation13 + $0x20] sm:$0xff]
        %v589 = vld [vmem:[#allocation13 + $0x28] sm:$0xff]
        %v590 = vld [vmem:[#allocation13 + $0x30] sm:$0xff]
        %v591 = vld [vmem:[#allocation13 + $0x38] sm:$0xff]
        %v592 = vld [vmem:[#allocation13 + $0x40] sm:$0xff]
        %v593 = vld [vmem:[#allocation13 + $0x48] sm:$0xff]
        %v594 = vld [vmem:[#allocation13 + $0x50] sm:$0xff]
        %v595 = vld [vmem:[#allocation13 + $0x58] sm:$0xff]
        %v596 = vld [vmem:[#allocation13 + $0x60] sm:$0xff]
        %v597 = vld [vmem:[#allocation13 + $0x68] sm:$0xff]
        %v598 = vld [vmem:[#allocation13 + $0x70] sm:$0xff]
        %v599 = vld [vmem:[#allocation13 + $0x78] sm:$0xff]
        %v600 = vld [vmem:[%s4] sm:$0xf]
        %v602 = vlaneseq
        %v603 = vshrl.u32 %v602, 7
        %v604 = vsub.s32 0, %v603
        %v605 = vrot.slane %v600, %v604
        %v606 = vlaneseq
        %v607 = vshrl.u32 %v606, 7
        %v608 = vsub.s32 1, %v607
        %v609 = vrot.slane %v600, %v608
        %v610 = vlaneseq
        %v611 = vshrl.u32 %v610, 7
        %v612 = vsub.s32 2, %v611
        %v613 = vrot.slane %v600, %v612
        %v614 = vlaneseq
        %v615 = vshrl.u32 %v614, 7
        %v616 = vsub.s32 3, %v615
        %v617 = vrot.slane %v600, %v616
        %vm622 = vcmask 261120
        %v624 = vsel %vm622, %v568, 0
        %v627 = vsel %vm622, %v569, 0
        %v630 = vsel %vm622, %v570, 0
        %v633 = vsel %vm622, %v571, 0
        %v636 = vsel %vm622, %v572, 0
        %v639 = vsel %vm622, %v573, 0
        %v642 = vsel %vm622, %v574, 0
        %v645 = vsel %vm622, %v575, 0
        %647 = vmatprep.subr.mxu0 %v585
        %648 = vmatpush1.msra.mxu0 %v584
        %649 = vmatprep.subr.mxu0 %v589
        %650 = vmatpush1.msra.mxu0 %v588
        %651 = vmatprep.subr.mxu0 %v593
        %652 = vmatpush1.msra.mxu0 %v592
        %653 = vmatprep.subr.mxu0 %v597
        %654 = vmatpush1.msra.mxu0 %v596
        %655 = vmatprep.subr.mxu0 0.0
        %656 = vmatpush1.msra.mxu0 0.0
        %657 = vmatprep.subr.mxu0 0.0
        %658 = vmatpush1.msra.mxu0 0.0
        %659 = vmatprep.subr.mxu0 0.0
        %660 = vmatpush1.msra.mxu0 0.0
        %661 = vmatprep.subr.mxu0 0.0
        %662 = vmatpush1.msra.mxu0 0.0
        %663 = vmatprep.subr.mxu0 0.0
        %664 = vmatpush1.msra.mxu0 0.0
        %665 = vmatprep.subr.mxu0 0.0
        %666 = vmatpush1.msra.mxu0 0.0
        %667 = vmatprep.subr.mxu0 0.0
        %668 = vmatpush1.msra.mxu0 0.0
        %669 = vmatprep.subr.mxu0 0.0
        %670 = vmatpush1.msra.mxu0 0.0
        %671 = vmatprep.subr.mxu0 0.0
        %672 = vmatpush1.msra.mxu0 0.0
        %673 = vmatprep.subr.mxu0 0.0
        %674 = vmatpush1.msra.mxu0 0.0
        %675 = vmatprep.subr.mxu0 0.0
        %676 = vmatpush1.msra.mxu0 0.0
        %677 = vmatprep.subr.mxu0 0.0
        %678 = vmatpush1.msra.mxu0 0.0
        %679 = vmatprep.subr.mxu0 0.0
        %680 = vmatpush1.msra.mxu0 0.0
        %681 = vmatprep.subr.mxu0 0.0
        %682 = vmatpush1.msra.mxu0 0.0
        %683 = vmatprep.subr.mxu0 0.0
        %684 = vmatpush1.msra.mxu0 0.0
        %685 = vmatprep.subr.mxu0 0.0
        %686 = vmatpush1.msra.mxu0 0.0
        %687 = vmatprep.subr.mxu0 0.0
        %688 = vmatpush1.msra.mxu0 0.0
        %689 = vmatprep.subr.mxu0 0.0
        %690 = vmatpush1.msra.mxu0 0.0
        %691 = vmatprep.subr.mxu0 0.0
        %692 = vmatpush1.msra.mxu0 0.0
        %693 = vmatprep.subr.mxu0 0.0
        %694 = vmatpush1.msra.mxu0 0.0
        %695 = vmatprep.subr.mxu0 0.0
        %696 = vmatpush1.msra.mxu0 0.0
        %697 = vmatprep.subr.mxu0 0.0
        %698 = vmatpush1.msra.mxu0 0.0
        %699 = vmatprep.subr.mxu0 0.0
        %700 = vmatpush1.msra.mxu0 0.0
        %701 = vmatprep.subr.mxu0 0.0
        %702 = vmatpush1.msra.mxu0 0.0
        %703 = vmatprep.subr.mxu0 0.0
        %704 = vmatpush1.msra.mxu0 0.0
        %705 = vmatprep.subr.mxu0 0.0
        %706 = vmatpush1.msra.mxu0 0.0
        %707 = vmatprep.subr.mxu0 0.0
        %708 = vmatpush1.msra.mxu0 0.0
        %709 = vmatprep.subr.mxu0 0.0
        %710 = vmatpush1.msra.mxu0 0.0
        %711 = vmatprep.mubr.f32.mxu0 0.0
        %712 = vmatmul.mubr.f32.gmra.mrb[0].mxu0 %v624
        %v713 = vpop.f32.mrb[0].mxu0
        %v714 = vadd.f32 %v605, %v713
        %v715 = vpop.f32.mrb[0].mxu0
        %v716 = vadd.f32 %v609, %v715
        %717 = vmatprep.mubr.f32.mxu0 0.0
        %718 = vmatmul.mubr.f32.gmra.mrb[0].mxu0 %v627
        %v719 = vpop.f32.mrb[0].mxu0
        %v720 = vadd.f32 %v605, %v719
        %v721 = vpop.f32.mrb[0].mxu0
        %v722 = vadd.f32 %v609, %v721
        %723 = vmatprep.mubr.f32.mxu0 0.0
        %724 = vmatmul.mubr.f32.gmra.mrb[0].mxu0 %v630
        %v725 = vpop.f32.mrb[0].mxu0
        %v726 = vadd.f32 %v605, %v725
        %v727 = vpop.f32.mrb[0].mxu0
        %v728 = vadd.f32 %v609, %v727
        %729 = vmatprep.mubr.f32.mxu0 0.0
        %730 = vmatmul.mubr.f32.gmra.mrb[0].mxu0 %v633
        %v731 = vpop.f32.mrb[0].mxu0
        %v732 = vadd.f32 %v605, %v731
        %v733 = vpop.f32.mrb[0].mxu0
        %v734 = vadd.f32 %v609, %v733
        %735 = vmatprep.mubr.f32.mxu0 0.0
        %736 = vmatmul.mubr.f32.gmra.mrb[0].mxu0 %v636
        %v737 = vpop.f32.mrb[0].mxu0
        %v738 = vadd.f32 %v605, %v737
        %v739 = vpop.f32.mrb[0].mxu0
        %v740 = vadd.f32 %v609, %v739
        %741 = vmatprep.mubr.f32.mxu0 0.0
        %742 = vmatmul.mubr.f32.gmra.mrb[0].mxu0 %v639
        %v743 = vpop.f32.mrb[0].mxu0
        %v744 = vadd.f32 %v605, %v743
        %v745 = vpop.f32.mrb[0].mxu0
        %v746 = vadd.f32 %v609, %v745
        %747 = vmatprep.mubr.f32.mxu0 0.0
        %748 = vmatmul.mubr.f32.gmra.mrb[0].mxu0 %v642
        %v749 = vpop.f32.mrb[0].mxu0
        %v750 = vadd.f32 %v605, %v749
        %v751 = vpop.f32.mrb[0].mxu0
        %v752 = vadd.f32 %v609, %v751
        %753 = vmatprep.mubr.f32.mxu0 0.0
        %754 = vmatmul.mubr.f32.gmra.mrb[0].mxu0 %v645
        %v755 = vpop.f32.mrb[0].mxu0
        %v756 = vadd.f32 %v605, %v755
        %v757 = vpop.f32.mrb[0].mxu0
        %v758 = vadd.f32 %v609, %v757
        %759 = vdwg.mxu0
        %760 = vmatprep.subr.mxu0 %v587
        %761 = vmatpush1.msra.mxu0 %v586
        %762 = vmatprep.subr.mxu0 %v591
        %763 = vmatpush1.msra.mxu0 %v590
        %764 = vmatprep.subr.mxu0 %v595
        %765 = vmatpush1.msra.mxu0 %v594
        %766 = vmatprep.subr.mxu0 %v599
        %767 = vmatpush1.msra.mxu0 %v598
        %768 = vmatprep.subr.mxu0 0.0
        %769 = vmatpush1.msra.mxu0 0.0
        %770 = vmatprep.subr.mxu0 0.0
        %771 = vmatpush1.msra.mxu0 0.0
        %772 = vmatprep.subr.mxu0 0.0
        %773 = vmatpush1.msra.mxu0 0.0
        %774 = vmatprep.subr.mxu0 0.0
        %775 = vmatpush1.msra.mxu0 0.0
        %776 = vmatprep.subr.mxu0 0.0
        %777 = vmatpush1.msra.mxu0 0.0
        %778 = vmatprep.subr.mxu0 0.0
        %779 = vmatpush1.msra.mxu0 0.0
        %780 = vmatprep.subr.mxu0 0.0
        %781 = vmatpush1.msra.mxu0 0.0
        %782 = vmatprep.subr.mxu0 0.0
        %783 = vmatpush1.msra.mxu0 0.0
        %784 = vmatprep.subr.mxu0 0.0
        %785 = vmatpush1.msra.mxu0 0.0
        %786 = vmatprep.subr.mxu0 0.0
        %787 = vmatpush1.msra.mxu0 0.0
        %788 = vmatprep.subr.mxu0 0.0
        %789 = vmatpush1.msra.mxu0 0.0
        %790 = vmatprep.subr.mxu0 0.0
        %791 = vmatpush1.msra.mxu0 0.0
        %792 = vmatprep.subr.mxu0 0.0
        %793 = vmatpush1.msra.mxu0 0.0
        %794 = vmatprep.subr.mxu0 0.0
        %795 = vmatpush1.msra.mxu0 0.0
        %796 = vmatprep.subr.mxu0 0.0
        %797 = vmatpush1.msra.mxu0 0.0
        %798 = vmatprep.subr.mxu0 0.0
        %799 = vmatpush1.msra.mxu0 0.0
        %800 = vmatprep.subr.mxu0 0.0
        %801 = vmatpush1.msra.mxu0 0.0
        %802 = vmatprep.subr.mxu0 0.0
        %803 = vmatpush1.msra.mxu0 0.0
        %804 = vmatprep.subr.mxu0 0.0
        %805 = vmatpush1.msra.mxu0 0.0
        %806 = vmatprep.subr.mxu0 0.0
        %807 = vmatpush1.msra.mxu0 0.0
        %808 = vmatprep.subr.mxu0 0.0
        %809 = vmatpush1.msra.mxu0 0.0
        %810 = vmatprep.subr.mxu0 0.0
        %811 = vmatpush1.msra.mxu0 0.0
        %812 = vmatprep.subr.mxu0 0.0
        %813 = vmatpush1.msra.mxu0 0.0
        %814 = vmatprep.subr.mxu0 0.0
        %815 = vmatpush1.msra.mxu0 0.0
        %816 = vmatprep.subr.mxu0 0.0
        %817 = vmatpush1.msra.mxu0 0.0
        %818 = vmatprep.subr.mxu0 0.0
        %819 = vmatpush1.msra.mxu0 0.0
        %820 = vmatprep.subr.mxu0 0.0
        %821 = vmatpush1.msra.mxu0 0.0
        %822 = vmatprep.subr.mxu0 0.0
        %823 = vmatpush1.msra.mxu0 0.0
        %824 = vmatprep.mubr.f32.mxu0 0.0
        %825 = vmatmul.mubr.f32.gmra.mrb[0].mxu0 %v624
        %v826 = vpop.f32.mrb[0].mxu0
        %v827 = vadd.f32 %v613, %v826
        %v828 = vpop.f32.mrb[0].mxu0
        %v829 = vadd.f32 %v617, %v828
        %830 = vmatprep.mubr.f32.mxu0 0.0
        %831 = vmatmul.mubr.f32.gmra.mrb[0].mxu0 %v627
        %v832 = vpop.f32.mrb[0].mxu0
        %v833 = vadd.f32 %v613, %v832
        %v834 = vpop.f32.mrb[0].mxu0
        %v835 = vadd.f32 %v617, %v834
        %836 = vmatprep.mubr.f32.mxu0 0.0
        %837 = vmatmul.mubr.f32.gmra.mrb[0].mxu0 %v630
        %v838 = vpop.f32.mrb[0].mxu0
        %v839 = vadd.f32 %v613, %v838
        %v840 = vpop.f32.mrb[0].mxu0
        %v841 = vadd.f32 %v617, %v840
        %842 = vmatprep.mubr.f32.mxu0 0.0
        %843 = vmatmul.mubr.f32.gmra.mrb[0].mxu0 %v633
        %v844 = vpop.f32.mrb[0].mxu0
        %v845 = vadd.f32 %v613, %v844
        %v846 = vpop.f32.mrb[0].mxu0
        %v847 = vadd.f32 %v617, %v846
        %848 = vmatprep.mubr.f32.mxu0 0.0
        %849 = vmatmul.mubr.f32.gmra.mrb[0].mxu0 %v636
        %v850 = vpop.f32.mrb[0].mxu0
        %v851 = vadd.f32 %v613, %v850
        %v852 = vpop.f32.mrb[0].mxu0
        %v853 = vadd.f32 %v617, %v852
        %854 = vmatprep.mubr.f32.mxu0 0.0
        %855 = vmatmul.mubr.f32.gmra.mrb[0].mxu0 %v639
        %v856 = vpop.f32.mrb[0].mxu0
        %v857 = vadd.f32 %v613, %v856
        %v858 = vpop.f32.mrb[0].mxu0
        %v859 = vadd.f32 %v617, %v858
        %860 = vmatprep.mubr.f32.mxu0 0.0
        %861 = vmatmul.mubr.f32.gmra.mrb[0].mxu0 %v642
        %v862 = vpop.f32.mrb[0].mxu0
        %v863 = vadd.f32 %v613, %v862
        %v864 = vpop.f32.mrb[0].mxu0
        %v865 = vadd.f32 %v617, %v864
        %866 = vmatprep.mubr.f32.mxu0 0.0
        %867 = vmatmul.mubr.f32.gmra.mrb[0].mxu0 %v645
        %v868 = vpop.f32.mrb[0].mxu0
        %v869 = vadd.f32 %v613, %v868
        %v870 = vpop.f32.mrb[0].mxu0
        %v871 = vadd.f32 %v617, %v870
        %872 = vdwg.mxu0
        %873 = vst [vmem:[#allocation2] sm:$0xff] %v714
        %874 = vst [vmem:[#allocation2 + $0x8] sm:$0xff] %v716
        %875 = vst [vmem:[#allocation2 + $0x10] sm:$0xff] %v827
        %876 = vst [vmem:[#allocation2 + $0x18] sm:$0xff] %v829
        %877 = vst [vmem:[#allocation2 + $0x20] sm:$0xff] %v720
        %878 = vst [vmem:[#allocation2 + $0x28] sm:$0xff] %v722
        %879 = vst [vmem:[#allocation2 + $0x30] sm:$0xff] %v833
        %880 = vst [vmem:[#allocation2 + $0x38] sm:$0xff] %v835
        %881 = vst [vmem:[#allocation2 + $0x40] sm:$0xff] %v726
        %882 = vst [vmem:[#allocation2 + $0x48] sm:$0xff] %v728
        %883 = vst [vmem:[#allocation2 + $0x50] sm:$0xff] %v839
        %884 = vst [vmem:[#allocation2 + $0x58] sm:$0xff] %v841
        %885 = vst [vmem:[#allocation2 + $0x60] sm:$0xff] %v732
        %886 = vst [vmem:[#allocation2 + $0x68] sm:$0xff] %v734
        %887 = vst [vmem:[#allocation2 + $0x70] sm:$0xff] %v845
        %888 = vst [vmem:[#allocation2 + $0x78] sm:$0xff] %v847
        %889 = vst [vmem:[#allocation2 + $0x80] sm:$0xff] %v738
        %890 = vst [vmem:[#allocation2 + $0x88] sm:$0xff] %v740
        %891 = vst [vmem:[#allocation2 + $0x90] sm:$0xff] %v851
        %892 = vst [vmem:[#allocation2 + $0x98] sm:$0xff] %v853
        %893 = vst [vmem:[#allocation2 + $0xa0] sm:$0xff] %v744
        %894 = vst [vmem:[#allocation2 + $0xa8] sm:$0xff] %v746
        %895 = vst [vmem:[#allocation2 + $0xb0] sm:$0xff] %v857
        %896 = vst [vmem:[#allocation2 + $0xb8] sm:$0xff] %v859
        %897 = vst [vmem:[#allocation2 + $0xc0] sm:$0xff] %v750
        %898 = vst [vmem:[#allocation2 + $0xc8] sm:$0xff] %v752
        %899 = vst [vmem:[#allocation2 + $0xd0] sm:$0xff] %v863
        %900 = vst [vmem:[#allocation2 + $0xd8] sm:$0xff] %v865
        %901 = vst [vmem:[#allocation2 + $0xe0] sm:$0xff] %v756
        %902 = vst [vmem:[#allocation2 + $0xe8] sm:$0xff] %v758
        %903 = vst [vmem:[#allocation2 + $0xf0] sm:$0xff] %v869
        %904 = vst [vmem:[#allocation2 + $0xf8] sm:$0xff] %v871
        %v905 = vld [vmem:[#allocation16] sm:$0xff]
        %v906 = vld [vmem:[#allocation16 + $0x8] sm:$0xff]
        %v907 = vld [vmem:[#allocation16 + $0x10] sm:$0xff]
        %v908 = vld [vmem:[#allocation16 + $0x18] sm:$0xff]
        %v909 = vld [vmem:[#allocation16 + $0x20] sm:$0xff]
        %v910 = vld [vmem:[#allocation16 + $0x28] sm:$0xff]
        %v911 = vld [vmem:[#allocation16 + $0x30] sm:$0xff]
        %v912 = vld [vmem:[#allocation16 + $0x38] sm:$0xff]
        %v913 = vld [vmem:[#allocation16 + $0x40] sm:$0xff]
        %v914 = vld [vmem:[#allocation16 + $0x48] sm:$0xff]
        %v915 = vld [vmem:[#allocation16 + $0x50] sm:$0xff]
        %v916 = vld [vmem:[#allocation16 + $0x58] sm:$0xff]
        %v917 = vld [vmem:[#allocation16 + $0x60] sm:$0xff]
        %v918 = vld [vmem:[#allocation16 + $0x68] sm:$0xff]
        %v919 = vld [vmem:[#allocation16 + $0x70] sm:$0xff]
        %v920 = vld [vmem:[#allocation16 + $0x78] sm:$0xff]
        %v921 = vld [vmem:[%s7] sm:$0xf]
        %v923 = vlaneseq
        %v924 = vshrl.u32 %v923, 7
        %v925 = vsub.s32 0, %v924
        %v926 = vrot.slane %v921, %v925
        %v927 = vlaneseq
        %v928 = vshrl.u32 %v927, 7
        %v929 = vsub.s32 1, %v928
        %v930 = vrot.slane %v921, %v929
        %v931 = vlaneseq
        %v932 = vshrl.u32 %v931, 7
        %v933 = vsub.s32 2, %v932
        %v934 = vrot.slane %v921, %v933
        %v935 = vlaneseq
        %v936 = vshrl.u32 %v935, 7
        %v937 = vsub.s32 3, %v936
        %v938 = vrot.slane %v921, %v937
        %v944 = vsel %vm622, %v576, 0
        %v947 = vsel %vm622, %v577, 0
        %v950 = vsel %vm622, %v578, 0
        %v953 = vsel %vm622, %v579, 0
        %v956 = vsel %vm622, %v580, 0
        %v959 = vsel %vm622, %v581, 0
        %v962 = vsel %vm622, %v582, 0
        %v965 = vsel %vm622, %v583, 0
        %967 = vmatprep.subr.mxu0 %v906
        %968 = vmatpush1.msra.mxu0 %v905
        %969 = vmatprep.subr.mxu0 %v910
        %970 = vmatpush1.msra.mxu0 %v909
        %971 = vmatprep.subr.mxu0 %v914
        %972 = vmatpush1.msra.mxu0 %v913
        %973 = vmatprep.subr.mxu0 %v918
        %974 = vmatpush1.msra.mxu0 %v917
        %975 = vmatprep.subr.mxu0 0.0
        %976 = vmatpush1.msra.mxu0 0.0
        %977 = vmatprep.subr.mxu0 0.0
        %978 = vmatpush1.msra.mxu0 0.0
        %979 = vmatprep.subr.mxu0 0.0
        %980 = vmatpush1.msra.mxu0 0.0
        %981 = vmatprep.subr.mxu0 0.0
        %982 = vmatpush1.msra.mxu0 0.0
        %983 = vmatprep.subr.mxu0 0.0
        %984 = vmatpush1.msra.mxu0 0.0
        %985 = vmatprep.subr.mxu0 0.0
        %986 = vmatpush1.msra.mxu0 0.0
        %987 = vmatprep.subr.mxu0 0.0
        %988 = vmatpush1.msra.mxu0 0.0
        %989 = vmatprep.subr.mxu0 0.0
        %990 = vmatpush1.msra.mxu0 0.0
        %991 = vmatprep.subr.mxu0 0.0
        %992 = vmatpush1.msra.mxu0 0.0
        %993 = vmatprep.subr.mxu0 0.0
        %994 = vmatpush1.msra.mxu0 0.0
        %995 = vmatprep.subr.mxu0 0.0
        %996 = vmatpush1.msra.mxu0 0.0
        %997 = vmatprep.subr.mxu0 0.0
        %998 = vmatpush1.msra.mxu0 0.0
        %999 = vmatprep.subr.mxu0 0.0
        %1000 = vmatpush1.msra.mxu0 0.0
        %1001 = vmatprep.subr.mxu0 0.0
        %1002 = vmatpush1.msra.mxu0 0.0
        %1003 = vmatprep.subr.mxu0 0.0
        %1004 = vmatpush1.msra.mxu0 0.0
        %1005 = vmatprep.subr.mxu0 0.0
        %1006 = vmatpush1.msra.mxu0 0.0
        %1007 = vmatprep.subr.mxu0 0.0
        %1008 = vmatpush1.msra.mxu0 0.0
        %1009 = vmatprep.subr.mxu0 0.0
        %1010 = vmatpush1.msra.mxu0 0.0
        %1011 = vmatprep.subr.mxu0 0.0
        %1012 = vmatpush1.msra.mxu0 0.0
        %1013 = vmatprep.subr.mxu0 0.0
        %1014 = vmatpush1.msra.mxu0 0.0
        %1015 = vmatprep.subr.mxu0 0.0
        %1016 = vmatpush1.msra.mxu0 0.0
        %1017 = vmatprep.subr.mxu0 0.0
        %1018 = vmatpush1.msra.mxu0 0.0
        %1019 = vmatprep.subr.mxu0 0.0
        %1020 = vmatpush1.msra.mxu0 0.0
        %1021 = vmatprep.subr.mxu0 0.0
        %1022 = vmatpush1.msra.mxu0 0.0
        %1023 = vmatprep.subr.mxu0 0.0
        %1024 = vmatpush1.msra.mxu0 0.0
        %1025 = vmatprep.subr.mxu0 0.0
        %1026 = vmatpush1.msra.mxu0 0.0
        %1027 = vmatprep.subr.mxu0 0.0
        %1028 = vmatpush1.msra.mxu0 0.0
        %1029 = vmatprep.subr.mxu0 0.0
        %1030 = vmatpush1.msra.mxu0 0.0
        %1031 = vmatprep.mubr.f32.mxu0 0.0
        %1032 = vmatmul.mubr.f32.gmra.mrb[0].mxu0 %v944
        %v1033 = vpop.f32.mrb[0].mxu0
        %v1034 = vadd.f32 %v926, %v1033
        %v1035 = vpop.f32.mrb[0].mxu0
        %v1036 = vadd.f32 %v930, %v1035
        %1037 = vmatprep.mubr.f32.mxu0 0.0
        %1038 = vmatmul.mubr.f32.gmra.mrb[0].mxu0 %v947
        %v1039 = vpop.f32.mrb[0].mxu0
        %v1040 = vadd.f32 %v926, %v1039
        %v1041 = vpop.f32.mrb[0].mxu0
        %v1042 = vadd.f32 %v930, %v1041
        %1043 = vmatprep.mubr.f32.mxu0 0.0
        %1044 = vmatmul.mubr.f32.gmra.mrb[0].mxu0 %v950
        %v1045 = vpop.f32.mrb[0].mxu0
        %v1046 = vadd.f32 %v926, %v1045
        %v1047 = vpop.f32.mrb[0].mxu0
        %v1048 = vadd.f32 %v930, %v1047
        %1049 = vmatprep.mubr.f32.mxu0 0.0
        %1050 = vmatmul.mubr.f32.gmra.mrb[0].mxu0 %v953
        %v1051 = vpop.f32.mrb[0].mxu0
        %v1052 = vadd.f32 %v926, %v1051
        %v1053 = vpop.f32.mrb[0].mxu0
        %v1054 = vadd.f32 %v930, %v1053
        %1055 = vmatprep.mubr.f32.mxu0 0.0
        %1056 = vmatmul.mubr.f32.gmra.mrb[0].mxu0 %v956
        %v1057 = vpop.f32.mrb[0].mxu0
        %v1058 = vadd.f32 %v926, %v1057
        %v1059 = vpop.f32.mrb[0].mxu0
        %v1060 = vadd.f32 %v930, %v1059
        %1061 = vmatprep.mubr.f32.mxu0 0.0
        %1062 = vmatmul.mubr.f32.gmra.mrb[0].mxu0 %v959
        %v1063 = vpop.f32.mrb[0].mxu0
        %v1064 = vadd.f32 %v926, %v1063
        %v1065 = vpop.f32.mrb[0].mxu0
        %v1066 = vadd.f32 %v930, %v1065
        %1067 = vmatprep.mubr.f32.mxu0 0.0
        %1068 = vmatmul.mubr.f32.gmra.mrb[0].mxu0 %v962
        %v1069 = vpop.f32.mrb[0].mxu0
        %v1070 = vadd.f32 %v926, %v1069
        %v1071 = vpop.f32.mrb[0].mxu0
        %v1072 = vadd.f32 %v930, %v1071
        %1073 = vmatprep.mubr.f32.mxu0 0.0
        %1074 = vmatmul.mubr.f32.gmra.mrb[0].mxu0 %v965
        %v1075 = vpop.f32.mrb[0].mxu0
        %v1076 = vadd.f32 %v926, %v1075
        %v1077 = vpop.f32.mrb[0].mxu0
        %v1078 = vadd.f32 %v930, %v1077
        %1079 = vdwg.mxu0
        %1080 = vmatprep.subr.mxu0 %v908
        %1081 = vmatpush1.msra.mxu0 %v907
        %1082 = vmatprep.subr.mxu0 %v912
        %1083 = vmatpush1.msra.mxu0 %v911
        %1084 = vmatprep.subr.mxu0 %v916
        %1085 = vmatpush1.msra.mxu0 %v915
        %1086 = vmatprep.subr.mxu0 %v920
        %1087 = vmatpush1.msra.mxu0 %v919
        %1088 = vmatprep.subr.mxu0 0.0
        %1089 = vmatpush1.msra.mxu0 0.0
        %1090 = vmatprep.subr.mxu0 0.0
        %1091 = vmatpush1.msra.mxu0 0.0
        %1092 = vmatprep.subr.mxu0 0.0
        %1093 = vmatpush1.msra.mxu0 0.0
        %1094 = vmatprep.subr.mxu0 0.0
        %1095 = vmatpush1.msra.mxu0 0.0
        %1096 = vmatprep.subr.mxu0 0.0
        %1097 = vmatpush1.msra.mxu0 0.0
        %1098 = vmatprep.subr.mxu0 0.0
        %1099 = vmatpush1.msra.mxu0 0.0
        %1100 = vmatprep.subr.mxu0 0.0
        %1101 = vmatpush1.msra.mxu0 0.0
        %1102 = vmatprep.subr.mxu0 0.0
        %1103 = vmatpush1.msra.mxu0 0.0
        %1104 = vmatprep.subr.mxu0 0.0
        %1105 = vmatpush1.msra.mxu0 0.0
        %1106 = vmatprep.subr.mxu0 0.0
        %1107 = vmatpush1.msra.mxu0 0.0
        %1108 = vmatprep.subr.mxu0 0.0
        %1109 = vmatpush1.msra.mxu0 0.0
        %1110 = vmatprep.subr.mxu0 0.0
        %1111 = vmatpush1.msra.mxu0 0.0
        %1112 = vmatprep.subr.mxu0 0.0
        %1113 = vmatpush1.msra.mxu0 0.0
        %1114 = vmatprep.subr.mxu0 0.0
        %1115 = vmatpush1.msra.mxu0 0.0
        %1116 = vmatprep.subr.mxu0 0.0
        %1117 = vmatpush1.msra.mxu0 0.0
        %1118 = vmatprep.subr.mxu0 0.0
        %1119 = vmatpush1.msra.mxu0 0.0
        %1120 = vmatprep.subr.mxu0 0.0
        %1121 = vmatpush1.msra.mxu0 0.0
        %1122 = vmatprep.subr.mxu0 0.0
        %1123 = vmatpush1.msra.mxu0 0.0
        %1124 = vmatprep.subr.mxu0 0.0
        %1125 = vmatpush1.msra.mxu0 0.0
        %1126 = vmatprep.subr.mxu0 0.0
        %1127 = vmatpush1.msra.mxu0 0.0
        %1128 = vmatprep.subr.mxu0 0.0
        %1129 = vmatpush1.msra.mxu0 0.0
        %1130 = vmatprep.subr.mxu0 0.0
        %1131 = vmatpush1.msra.mxu0 0.0
        %1132 = vmatprep.subr.mxu0 0.0
        %1133 = vmatpush1.msra.mxu0 0.0
        %1134 = vmatprep.subr.mxu0 0.0
        %1135 = vmatpush1.msra.mxu0 0.0
        %1136 = vmatprep.subr.mxu0 0.0
        %1137 = vmatpush1.msra.mxu0 0.0
        %1138 = vmatprep.subr.mxu0 0.0
        %1139 = vmatpush1.msra.mxu0 0.0
        %1140 = vmatprep.subr.mxu0 0.0
        %1141 = vmatpush1.msra.mxu0 0.0
        %1142 = vmatprep.subr.mxu0 0.0
        %1143 = vmatpush1.msra.mxu0 0.0
        %1144 = vmatprep.mubr.f32.mxu0 0.0
        %1145 = vmatmul.mubr.f32.gmra.mrb[0].mxu0 %v944
        %v1146 = vpop.f32.mrb[0].mxu0
        %v1147 = vadd.f32 %v934, %v1146
        %v1148 = vpop.f32.mrb[0].mxu0
        %v1149 = vadd.f32 %v938, %v1148
        %1150 = vmatprep.mubr.f32.mxu0 0.0
        %1151 = vmatmul.mubr.f32.gmra.mrb[0].mxu0 %v947
        %v1152 = vpop.f32.mrb[0].mxu0
        %v1153 = vadd.f32 %v934, %v1152
        %v1154 = vpop.f32.mrb[0].mxu0
        %v1155 = vadd.f32 %v938, %v1154
        %1156 = vmatprep.mubr.f32.mxu0 0.0
        %1157 = vmatmul.mubr.f32.gmra.mrb[0].mxu0 %v950
        %v1158 = vpop.f32.mrb[0].mxu0
        %v1159 = vadd.f32 %v934, %v1158
        %v1160 = vpop.f32.mrb[0].mxu0
        %v1161 = vadd.f32 %v938, %v1160
        %1162 = vmatprep.mubr.f32.mxu0 0.0
        %1163 = vmatmul.mubr.f32.gmra.mrb[0].mxu0 %v953
        %v1164 = vpop.f32.mrb[0].mxu0
        %v1165 = vadd.f32 %v934, %v1164
        %v1166 = vpop.f32.mrb[0].mxu0
        %v1167 = vadd.f32 %v938, %v1166
        %1168 = vmatprep.mubr.f32.mxu0 0.0
        %1169 = vmatmul.mubr.f32.gmra.mrb[0].mxu0 %v956
        %v1170 = vpop.f32.mrb[0].mxu0
        %v1171 = vadd.f32 %v934, %v1170
        %v1172 = vpop.f32.mrb[0].mxu0
        %v1173 = vadd.f32 %v938, %v1172
        %1174 = vmatprep.mubr.f32.mxu0 0.0
        %1175 = vmatmul.mubr.f32.gmra.mrb[0].mxu0 %v959
        %v1176 = vpop.f32.mrb[0].mxu0
        %v1177 = vadd.f32 %v934, %v1176
        %v1178 = vpop.f32.mrb[0].mxu0
        %v1179 = vadd.f32 %v938, %v1178
        %1180 = vmatprep.mubr.f32.mxu0 0.0
        %1181 = vmatmul.mubr.f32.gmra.mrb[0].mxu0 %v962
        %v1182 = vpop.f32.mrb[0].mxu0
        %v1183 = vadd.f32 %v934, %v1182
        %v1184 = vpop.f32.mrb[0].mxu0
        %v1185 = vadd.f32 %v938, %v1184
        %1186 = vmatprep.mubr.f32.mxu0 0.0
        %1187 = vmatmul.mubr.f32.gmra.mrb[0].mxu0 %v965
        %v1188 = vpop.f32.mrb[0].mxu0
        %v1189 = vadd.f32 %v934, %v1188
        %v1190 = vpop.f32.mrb[0].mxu0
        %v1191 = vadd.f32 %v938, %v1190
        %1192 = vdwg.mxu0
        %1193 = vst [vmem:[#allocation3] sm:$0xff] %v1034
        %1194 = vst [vmem:[#allocation3 + $0x8] sm:$0xff] %v1036
        %1195 = vst [vmem:[#allocation3 + $0x10] sm:$0xff] %v1147
        %1196 = vst [vmem:[#allocation3 + $0x18] sm:$0xff] %v1149
        %1197 = vst [vmem:[#allocation3 + $0x20] sm:$0xff] %v1040
        %1198 = vst [vmem:[#allocation3 + $0x28] sm:$0xff] %v1042
        %1199 = vst [vmem:[#allocation3 + $0x30] sm:$0xff] %v1153
        %1200 = vst [vmem:[#allocation3 + $0x38] sm:$0xff] %v1155
        %1201 = vst [vmem:[#allocation3 + $0x40] sm:$0xff] %v1046
        %1202 = vst [vmem:[#allocation3 + $0x48] sm:$0xff] %v1048
        %1203 = vst [vmem:[#allocation3 + $0x50] sm:$0xff] %v1159
        %1204 = vst [vmem:[#allocation3 + $0x58] sm:$0xff] %v1161
        %1205 = vst [vmem:[#allocation3 + $0x60] sm:$0xff] %v1052
        %1206 = vst [vmem:[#allocation3 + $0x68] sm:$0xff] %v1054
        %1207 = vst [vmem:[#allocation3 + $0x70] sm:$0xff] %v1165
        %1208 = vst [vmem:[#allocation3 + $0x78] sm:$0xff] %v1167
        %1209 = vst [vmem:[#allocation3 + $0x80] sm:$0xff] %v1058
        %1210 = vst [vmem:[#allocation3 + $0x88] sm:$0xff] %v1060
        %1211 = vst [vmem:[#allocation3 + $0x90] sm:$0xff] %v1171
        %1212 = vst [vmem:[#allocation3 + $0x98] sm:$0xff] %v1173
        %1213 = vst [vmem:[#allocation3 + $0xa0] sm:$0xff] %v1064
        %1214 = vst [vmem:[#allocation3 + $0xa8] sm:$0xff] %v1066
        %1215 = vst [vmem:[#allocation3 + $0xb0] sm:$0xff] %v1177
        %1216 = vst [vmem:[#allocation3 + $0xb8] sm:$0xff] %v1179
        %1217 = vst [vmem:[#allocation3 + $0xc0] sm:$0xff] %v1070
        %1218 = vst [vmem:[#allocation3 + $0xc8] sm:$0xff] %v1072
        %1219 = vst [vmem:[#allocation3 + $0xd0] sm:$0xff] %v1183
        %1220 = vst [vmem:[#allocation3 + $0xd8] sm:$0xff] %v1185
        %1221 = vst [vmem:[#allocation3 + $0xe0] sm:$0xff] %v1076
        %1222 = vst [vmem:[#allocation3 + $0xe8] sm:$0xff] %v1078
        %1223 = vst [vmem:[#allocation3 + $0xf0] sm:$0xff] %v1189
        %1224 = vst [vmem:[#allocation3 + $0xf8] sm:$0xff] %v1191
        %v1225 = vld [vmem:[#allocation14] sm:$0xff]
        %v1226 = vld [vmem:[#allocation14 + $0x8] sm:$0xff]
        %v1227 = vld [vmem:[#allocation14 + $0x10] sm:$0xff]
        %v1228 = vld [vmem:[#allocation14 + $0x18] sm:$0xff]
        %v1229 = vld [vmem:[#allocation14 + $0x20] sm:$0xff]
        %v1230 = vld [vmem:[#allocation14 + $0x28] sm:$0xff]
        %v1231 = vld [vmem:[#allocation14 + $0x30] sm:$0xff]
        %v1232 = vld [vmem:[#allocation14 + $0x38] sm:$0xff]
        %v1233 = vld [vmem:[#allocation14 + $0x40] sm:$0xff]
        %v1234 = vld [vmem:[#allocation14 + $0x48] sm:$0xff]
        %v1235 = vld [vmem:[#allocation14 + $0x50] sm:$0xff]
        %v1236 = vld [vmem:[#allocation14 + $0x58] sm:$0xff]
        %v1237 = vld [vmem:[#allocation14 + $0x60] sm:$0xff]
        %v1238 = vld [vmem:[#allocation14 + $0x68] sm:$0xff]
        %v1239 = vld [vmem:[#allocation14 + $0x70] sm:$0xff]
        %v1240 = vld [vmem:[#allocation14 + $0x78] sm:$0xff]
        %v1241 = vld [vmem:[#allocation14 + $0x80] sm:$0xff]
        %v1242 = vld [vmem:[#allocation14 + $0x88] sm:$0xff]
        %v1243 = vld [vmem:[#allocation14 + $0x90] sm:$0xff]
        %v1244 = vld [vmem:[#allocation14 + $0x98] sm:$0xff]
        %v1245 = vld [vmem:[#allocation14 + $0xa0] sm:$0xff]
        %v1246 = vld [vmem:[#allocation14 + $0xa8] sm:$0xff]
        %v1247 = vld [vmem:[#allocation14 + $0xb0] sm:$0xff]
        %v1248 = vld [vmem:[#allocation14 + $0xb8] sm:$0xff]
        %v1249 = vld [vmem:[#allocation14 + $0xc0] sm:$0xff]
        %v1250 = vld [vmem:[#allocation14 + $0xc8] sm:$0xff]
        %v1251 = vld [vmem:[#allocation14 + $0xd0] sm:$0xff]
        %v1252 = vld [vmem:[#allocation14 + $0xd8] sm:$0xff]
        %v1253 = vld [vmem:[#allocation14 + $0xe0] sm:$0xff]
        %v1254 = vld [vmem:[#allocation14 + $0xe8] sm:$0xff]
        %v1255 = vld [vmem:[#allocation14 + $0xf0] sm:$0xff]
        %v1256 = vld [vmem:[#allocation14 + $0xf8] sm:$0xff]
        %v1257 = vld [vmem:[#allocation14 + $0x100] sm:$0xff]
        %v1258 = vld [vmem:[#allocation14 + $0x108] sm:$0xff]
        %v1259 = vld [vmem:[#allocation14 + $0x110] sm:$0xff]
        %v1260 = vld [vmem:[#allocation14 + $0x118] sm:$0xff]
        %v1261 = vld [vmem:[#allocation14 + $0x120] sm:$0xff]
        %v1262 = vld [vmem:[#allocation14 + $0x128] sm:$0xff]
        %v1263 = vld [vmem:[#allocation14 + $0x130] sm:$0xff]
        %v1264 = vld [vmem:[#allocation14 + $0x138] sm:$0xff]
        %v1265 = vld [vmem:[#allocation14 + $0x140] sm:$0xff]
        %v1266 = vld [vmem:[#allocation14 + $0x148] sm:$0xff]
        %v1267 = vld [vmem:[#allocation14 + $0x150] sm:$0xff]
        %v1268 = vld [vmem:[#allocation14 + $0x158] sm:$0xff]
        %v1269 = vld [vmem:[#allocation14 + $0x160] sm:$0xff]
        %v1270 = vld [vmem:[#allocation14 + $0x168] sm:$0xff]
        %v1271 = vld [vmem:[#allocation14 + $0x170] sm:$0xff]
        %v1272 = vld [vmem:[#allocation14 + $0x178] sm:$0xff]
        %v1273 = vld [vmem:[#allocation14 + $0x180] sm:$0xff]
        %v1274 = vld [vmem:[#allocation14 + $0x188] sm:$0xff]
        %v1275 = vld [vmem:[#allocation14 + $0x190] sm:$0xff]
        %v1276 = vld [vmem:[#allocation14 + $0x198] sm:$0xff]
        %v1277 = vld [vmem:[#allocation14 + $0x1a0] sm:$0xff]
        %v1278 = vld [vmem:[#allocation14 + $0x1a8] sm:$0xff]
        %v1279 = vld [vmem:[#allocation14 + $0x1b0] sm:$0xff]
        %v1280 = vld [vmem:[#allocation14 + $0x1b8] sm:$0xff]
        %v1281 = vld [vmem:[#allocation14 + $0x1c0] sm:$0xff]
        %v1282 = vld [vmem:[#allocation14 + $0x1c8] sm:$0xff]
        %v1283 = vld [vmem:[#allocation14 + $0x1d0] sm:$0xff]
        %v1284 = vld [vmem:[#allocation14 + $0x1d8] sm:$0xff]
        %v1285 = vld [vmem:[#allocation14 + $0x1e0] sm:$0xff]
        %v1286 = vld [vmem:[#allocation14 + $0x1e8] sm:$0xff]
        %v1287 = vld [vmem:[#allocation14 + $0x1f0] sm:$0xff]
        %v1288 = vld [vmem:[#allocation14 + $0x1f8] sm:$0xff]
        %v1289 = vld [vmem:[#allocation17] sm:$0xff]
        %v1290 = vld [vmem:[#allocation17 + $0x8] sm:$0xff]
        %v1291 = vld [vmem:[#allocation17 + $0x10] sm:$0xff]
        %v1292 = vld [vmem:[#allocation17 + $0x18] sm:$0xff]
        %v1293 = vld [vmem:[#allocation17 + $0x20] sm:$0xff]
        %v1294 = vld [vmem:[#allocation17 + $0x28] sm:$0xff]
        %v1295 = vld [vmem:[#allocation17 + $0x30] sm:$0xff]
        %v1296 = vld [vmem:[#allocation17 + $0x38] sm:$0xff]
        %v1297 = vld [vmem:[#allocation17 + $0x40] sm:$0xff]
        %v1298 = vld [vmem:[#allocation17 + $0x48] sm:$0xff]
        %v1299 = vld [vmem:[#allocation17 + $0x50] sm:$0xff]
        %v1300 = vld [vmem:[#allocation17 + $0x58] sm:$0xff]
        %v1301 = vld [vmem:[#allocation17 + $0x60] sm:$0xff]
        %v1302 = vld [vmem:[#allocation17 + $0x68] sm:$0xff]
        %v1303 = vld [vmem:[#allocation17 + $0x70] sm:$0xff]
        %v1304 = vld [vmem:[#allocation17 + $0x78] sm:$0xff]
        %v1305 = vld [vmem:[#allocation17 + $0x80] sm:$0xff]
        %v1306 = vld [vmem:[#allocation17 + $0x88] sm:$0xff]
        %v1307 = vld [vmem:[#allocation17 + $0x90] sm:$0xff]
        %v1308 = vld [vmem:[#allocation17 + $0x98] sm:$0xff]
        %v1309 = vld [vmem:[#allocation17 + $0xa0] sm:$0xff]
        %v1310 = vld [vmem:[#allocation17 + $0xa8] sm:$0xff]
        %v1311 = vld [vmem:[#allocation17 + $0xb0] sm:$0xff]
        %v1312 = vld [vmem:[#allocation17 + $0xb8] sm:$0xff]
        %v1313 = vld [vmem:[#allocation17 + $0xc0] sm:$0xff]
        %v1314 = vld [vmem:[#allocation17 + $0xc8] sm:$0xff]
        %v1315 = vld [vmem:[#allocation17 + $0xd0] sm:$0xff]
        %v1316 = vld [vmem:[#allocation17 + $0xd8] sm:$0xff]
        %v1317 = vld [vmem:[#allocation17 + $0xe0] sm:$0xff]
        %v1318 = vld [vmem:[#allocation17 + $0xe8] sm:$0xff]
        %v1319 = vld [vmem:[#allocation17 + $0xf0] sm:$0xff]
        %v1320 = vld [vmem:[#allocation17 + $0xf8] sm:$0xff]
        %v1321 = vld [vmem:[#allocation17 + $0x100] sm:$0xff]
        %v1322 = vld [vmem:[#allocation17 + $0x108] sm:$0xff]
        %v1323 = vld [vmem:[#allocation17 + $0x110] sm:$0xff]
        %v1324 = vld [vmem:[#allocation17 + $0x118] sm:$0xff]
        %v1325 = vld [vmem:[#allocation17 + $0x120] sm:$0xff]
        %v1326 = vld [vmem:[#allocation17 + $0x128] sm:$0xff]
        %v1327 = vld [vmem:[#allocation17 + $0x130] sm:$0xff]
        %v1328 = vld [vmem:[#allocation17 + $0x138] sm:$0xff]
        %v1329 = vld [vmem:[#allocation17 + $0x140] sm:$0xff]
        %v1330 = vld [vmem:[#allocation17 + $0x148] sm:$0xff]
        %v1331 = vld [vmem:[#allocation17 + $0x150] sm:$0xff]
        %v1332 = vld [vmem:[#allocation17 + $0x158] sm:$0xff]
        %v1333 = vld [vmem:[#allocation17 + $0x160] sm:$0xff]
        %v1334 = vld [vmem:[#allocation17 + $0x168] sm:$0xff]
        %v1335 = vld [vmem:[#allocation17 + $0x170] sm:$0xff]
        %v1336 = vld [vmem:[#allocation17 + $0x178] sm:$0xff]
        %v1337 = vld [vmem:[#allocation17 + $0x180] sm:$0xff]
        %v1338 = vld [vmem:[#allocation17 + $0x188] sm:$0xff]
        %v1339 = vld [vmem:[#allocation17 + $0x190] sm:$0xff]
        %v1340 = vld [vmem:[#allocation17 + $0x198] sm:$0xff]
        %v1341 = vld [vmem:[#allocation17 + $0x1a0] sm:$0xff]
        %v1342 = vld [vmem:[#allocation17 + $0x1a8] sm:$0xff]
        %v1343 = vld [vmem:[#allocation17 + $0x1b0] sm:$0xff]
        %v1344 = vld [vmem:[#allocation17 + $0x1b8] sm:$0xff]
        %v1345 = vld [vmem:[#allocation17 + $0x1c0] sm:$0xff]
        %v1346 = vld [vmem:[#allocation17 + $0x1c8] sm:$0xff]
        %v1347 = vld [vmem:[#allocation17 + $0x1d0] sm:$0xff]
        %v1348 = vld [vmem:[#allocation17 + $0x1d8] sm:$0xff]
        %v1349 = vld [vmem:[#allocation17 + $0x1e0] sm:$0xff]
        %v1350 = vld [vmem:[#allocation17 + $0x1e8] sm:$0xff]
        %v1351 = vld [vmem:[#allocation17 + $0x1f0] sm:$0xff]
        %v1352 = vld [vmem:[#allocation17 + $0x1f8] sm:$0xff]
        %v1353 = vld [vmem:[#allocation4] sm:$0xff]
        %v1354 = vld [vmem:[#allocation4 + $0x8] sm:$0xff]
        %v1355 = vld [vmem:[#allocation5] sm:$0xff]
        %v1356 = vld [vmem:[#allocation5 + $0x8] sm:$0xff]
        %v1357 = vld [vmem:[#allocation6] sm:$0xff]
        %v1358 = vld [vmem:[#allocation6 + $0x8] sm:$0xff]
        %v1359 = vld [vmem:[#allocation7] sm:$0xff]
        %v1360 = vld [vmem:[#allocation7 + $0x8] sm:$0xff]
        %v1361 = vld [vmem:[#allocation2] sm:$0xff]
        %v1362 = vld [vmem:[#allocation2 + $0x8] sm:$0xff]
        %v1363 = vld [vmem:[#allocation2 + $0x10] sm:$0xff]
        %v1364 = vld [vmem:[#allocation2 + $0x18] sm:$0xff]
        %v1365 = vld [vmem:[#allocation2 + $0x20] sm:$0xff]
        %v1366 = vld [vmem:[#allocation2 + $0x28] sm:$0xff]
        %v1367 = vld [vmem:[#allocation2 + $0x30] sm:$0xff]
        %v1368 = vld [vmem:[#allocation2 + $0x38] sm:$0xff]
        %1369 = vmatprep.subr.mxu0 %v1226
        %1370 = vmatpush1.msra.mxu0 %v1225
        %1371 = vmatprep.subr.mxu0 %v1230
        %1372 = vmatpush1.msra.mxu0 %v1229
        %1373 = vmatprep.subr.mxu0 %v1234
        %1374 = vmatpush1.msra.mxu0 %v1233
        %1375 = vmatprep.subr.mxu0 %v1238
        %1376 = vmatpush1.msra.mxu0 %v1237
        %1377 = vmatprep.subr.mxu0 %v1242
        %1378 = vmatpush1.msra.mxu0 %v1241
        %1379 = vmatprep.subr.mxu0 %v1246
        %1380 = vmatpush1.msra.mxu0 %v1245
        %1381 = vmatprep.subr.mxu0 %v1250
        %1382 = vmatpush1.msra.mxu0 %v1249
        %1383 = vmatprep.subr.mxu0 %v1254
        %1384 = vmatpush1.msra.mxu0 %v1253
        %1385 = vmatprep.subr.mxu0 %v1258
        %1386 = vmatpush1.msra.mxu0 %v1257
        %1387 = vmatprep.subr.mxu0 %v1262
        %1388 = vmatpush1.msra.mxu0 %v1261
        %1389 = vmatprep.subr.mxu0 %v1266
        %1390 = vmatpush1.msra.mxu0 %v1265
        %1391 = vmatprep.subr.mxu0 %v1270
        %1392 = vmatpush1.msra.mxu0 %v1269
        %1393 = vmatprep.subr.mxu0 %v1274
        %1394 = vmatpush1.msra.mxu0 %v1273
        %1395 = vmatprep.subr.mxu0 %v1278
        %1396 = vmatpush1.msra.mxu0 %v1277
        %1397 = vmatprep.subr.mxu0 %v1282
        %1398 = vmatpush1.msra.mxu0 %v1281
        %1399 = vmatprep.subr.mxu0 %v1286
        %1400 = vmatpush1.msra.mxu0 %v1285
        %1401 = vmatprep.subr.mxu0 0.0
        %1402 = vmatpush1.msra.mxu0 0.0
        %1403 = vmatprep.subr.mxu0 0.0
        %1404 = vmatpush1.msra.mxu0 0.0
        %1405 = vmatprep.subr.mxu0 0.0
        %1406 = vmatpush1.msra.mxu0 0.0
        %1407 = vmatprep.subr.mxu0 0.0
        %1408 = vmatpush1.msra.mxu0 0.0
        %1409 = vmatprep.subr.mxu0 0.0
        %1410 = vmatpush1.msra.mxu0 0.0
        %1411 = vmatprep.subr.mxu0 0.0
        %1412 = vmatpush1.msra.mxu0 0.0
        %1413 = vmatprep.subr.mxu0 0.0
        %1414 = vmatpush1.msra.mxu0 0.0
        %1415 = vmatprep.subr.mxu0 0.0
        %1416 = vmatpush1.msra.mxu0 0.0
        %1417 = vmatprep.subr.mxu0 0.0
        %1418 = vmatpush1.msra.mxu0 0.0
        %1419 = vmatprep.subr.mxu0 0.0
        %1420 = vmatpush1.msra.mxu0 0.0
        %1421 = vmatprep.subr.mxu0 0.0
        %1422 = vmatpush1.msra.mxu0 0.0
        %1423 = vmatprep.subr.mxu0 0.0
        %1424 = vmatpush1.msra.mxu0 0.0
        %1425 = vmatprep.subr.mxu0 0.0
        %1426 = vmatpush1.msra.mxu0 0.0
        %1427 = vmatprep.subr.mxu0 0.0
        %1428 = vmatpush1.msra.mxu0 0.0
        %1429 = vmatprep.subr.mxu0 0.0
        %1430 = vmatpush1.msra.mxu0 0.0
        %1431 = vmatprep.subr.mxu0 0.0
        %1432 = vmatpush1.msra.mxu0 0.0
        %1433 = vmatprep.mubr.f32.mxu0 0.0
        %1434 = vmatmul.mubr.f32.gmra.mrb[0].mxu0 %v1353
        %v1435 = vpop.f32.mrb[0].mxu0
        %v1436 = vadd.f32 0.0, %v1435
        %v1437 = vpop.f32.mrb[0].mxu0
        %v1438 = vadd.f32 0.0, %v1437
        %1439 = vmatprep.mubr.f32.mxu0 0.0
        %1440 = vmatmul.mubr.f32.gmra.mrb[0].mxu0 %v1354
        %v1441 = vpop.f32.mrb[0].mxu0
        %v1442 = vadd.f32 0.0, %v1441
        %v1443 = vpop.f32.mrb[0].mxu0
        %v1444 = vadd.f32 0.0, %v1443
        %1445 = vdwg.mxu0
        %1446 = vmatprep.subr.mxu0 %v1228
        %1447 = vmatpush1.msra.mxu0 %v1227
        %1448 = vmatprep.subr.mxu0 %v1232
        %1449 = vmatpush1.msra.mxu0 %v1231
        %1450 = vmatprep.subr.mxu0 %v1236
        %1451 = vmatpush1.msra.mxu0 %v1235
        %1452 = vmatprep.subr.mxu0 %v1240
        %1453 = vmatpush1.msra.mxu0 %v1239
        %1454 = vmatprep.subr.mxu0 %v1244
        %1455 = vmatpush1.msra.mxu0 %v1243
        %1456 = vmatprep.subr.mxu0 %v1248
        %1457 = vmatpush1.msra.mxu0 %v1247
        %1458 = vmatprep.subr.mxu0 %v1252
        %1459 = vmatpush1.msra.mxu0 %v1251
        %1460 = vmatprep.subr.mxu0 %v1256
        %1461 = vmatpush1.msra.mxu0 %v1255
        %1462 = vmatprep.subr.mxu0 %v1260
        %1463 = vmatpush1.msra.mxu0 %v1259
        %1464 = vmatprep.subr.mxu0 %v1264
        %1465 = vmatpush1.msra.mxu0 %v1263
        %1466 = vmatprep.subr.mxu0 %v1268
        %1467 = vmatpush1.msra.mxu0 %v1267
        %1468 = vmatprep.subr.mxu0 %v1272
        %1469 = vmatpush1.msra.mxu0 %v1271
        %1470 = vmatprep.subr.mxu0 %v1276
        %1471 = vmatpush1.msra.mxu0 %v1275
        %1472 = vmatprep.subr.mxu0 %v1280
        %1473 = vmatpush1.msra.mxu0 %v1279
        %1474 = vmatprep.subr.mxu0 %v1284
        %1475 = vmatpush1.msra.mxu0 %v1283
        %1476 = vmatprep.subr.mxu0 %v1288
        %1477 = vmatpush1.msra.mxu0 %v1287
        %1478 = vmatprep.subr.mxu0 0.0
        %1479 = vmatpush1.msra.mxu0 0.0
        %1480 = vmatprep.subr.mxu0 0.0
        %1481 = vmatpush1.msra.mxu0 0.0
        %1482 = vmatprep.subr.mxu0 0.0
        %1483 = vmatpush1.msra.mxu0 0.0
        %1484 = vmatprep.subr.mxu0 0.0
        %1485 = vmatpush1.msra.mxu0 0.0
        %1486 = vmatprep.subr.mxu0 0.0
        %1487 = vmatpush1.msra.mxu0 0.0
        %1488 = vmatprep.subr.mxu0 0.0
        %1489 = vmatpush1.msra.mxu0 0.0
        %1490 = vmatprep.subr.mxu0 0.0
        %1491 = vmatpush1.msra.mxu0 0.0
        %1492 = vmatprep.subr.mxu0 0.0
        %1493 = vmatpush1.msra.mxu0 0.0
        %1494 = vmatprep.subr.mxu0 0.0
        %1495 = vmatpush1.msra.mxu0 0.0
        %1496 = vmatprep.subr.mxu0 0.0
        %1497 = vmatpush1.msra.mxu0 0.0
        %1498 = vmatprep.subr.mxu0 0.0
        %1499 = vmatpush1.msra.mxu0 0.0
        %1500 = vmatprep.subr.mxu0 0.0
        %1501 = vmatpush1.msra.mxu0 0.0
        %1502 = vmatprep.subr.mxu0 0.0
        %1503 = vmatpush1.msra.mxu0 0.0
        %1504 = vmatprep.subr.mxu0 0.0
        %1505 = vmatpush1.msra.mxu0 0.0
        %1506 = vmatprep.subr.mxu0 0.0
        %1507 = vmatpush1.msra.mxu0 0.0
        %1508 = vmatprep.subr.mxu0 0.0
        %1509 = vmatpush1.msra.mxu0 0.0
        %1510 = vmatprep.mubr.f32.mxu0 0.0
        %1511 = vmatmul.mubr.f32.gmra.mrb[0].mxu0 %v1353
        %v1512 = vpop.f32.mrb[0].mxu0
        %v1513 = vadd.f32 0.0, %v1512
        %v1514 = vpop.f32.mrb[0].mxu0
        %v1515 = vadd.f32 0.0, %v1514
        %1516 = vmatprep.mubr.f32.mxu0 0.0
        %1517 = vmatmul.mubr.f32.gmra.mrb[0].mxu0 %v1354
        %v1518 = vpop.f32.mrb[0].mxu0
        %v1519 = vadd.f32 0.0, %v1518
        %v1520 = vpop.f32.mrb[0].mxu0
        %v1521 = vadd.f32 0.0, %v1520
        %1522 = vdwg.mxu0
        %v1523 = vadd.f32 %v1361, %v1436
        %v1524 = vadd.f32 %v1362, %v1438
        %v1525 = vadd.f32 %v1363, %v1513
        %v1526 = vadd.f32 %v1364, %v1515
        %v1527 = vadd.f32 %v1365, %v1442
        %v1528 = vadd.f32 %v1366, %v1444
        %v1529 = vadd.f32 %v1367, %v1519
        %v1530 = vadd.f32 %v1368, %v1521
        %s1531 = scalar_lea.vmem [#allocation3], 192
        %v1532 = vld [vmem:[%s1531] sm:$0xff]
        %v1533 = vld [vmem:[%s1531 + $0x8] sm:$0xff]
        %v1534 = vld [vmem:[%s1531 + $0x10] sm:$0xff]
        %v1535 = vld [vmem:[%s1531 + $0x18] sm:$0xff]
        %v1536 = vld [vmem:[%s1531 + $0x20] sm:$0xff]
        %v1537 = vld [vmem:[%s1531 + $0x28] sm:$0xff]
        %v1538 = vld [vmem:[%s1531 + $0x30] sm:$0xff]
        %v1539 = vld [vmem:[%s1531 + $0x38] sm:$0xff]
        %1540 = vmatprep.subr.mxu0 %v1290
        %1541 = vmatpush1.msra.mxu0 %v1289
        %1542 = vmatprep.subr.mxu0 %v1294
        %1543 = vmatpush1.msra.mxu0 %v1293
        %1544 = vmatprep.subr.mxu0 %v1298
        %1545 = vmatpush1.msra.mxu0 %v1297
        %1546 = vmatprep.subr.mxu0 %v1302
        %1547 = vmatpush1.msra.mxu0 %v1301
        %1548 = vmatprep.subr.mxu0 %v1306
        %1549 = vmatpush1.msra.mxu0 %v1305
        %1550 = vmatprep.subr.mxu0 %v1310
        %1551 = vmatpush1.msra.mxu0 %v1309
        %1552 = vmatprep.subr.mxu0 %v1314
        %1553 = vmatpush1.msra.mxu0 %v1313
        %1554 = vmatprep.subr.mxu0 %v1318
        %1555 = vmatpush1.msra.mxu0 %v1317
        %1556 = vmatprep.subr.mxu0 %v1322
        %1557 = vmatpush1.msra.mxu0 %v1321
        %1558 = vmatprep.subr.mxu0 %v1326
        %1559 = vmatpush1.msra.mxu0 %v1325
        %1560 = vmatprep.subr.mxu0 %v1330
        %1561 = vmatpush1.msra.mxu0 %v1329
        %1562 = vmatprep.subr.mxu0 %v1334
        %1563 = vmatpush1.msra.mxu0 %v1333
        %1564 = vmatprep.subr.mxu0 %v1338
        %1565 = vmatpush1.msra.mxu0 %v1337
        %1566 = vmatprep.subr.mxu0 %v1342
        %1567 = vmatpush1.msra.mxu0 %v1341
        %1568 = vmatprep.subr.mxu0 %v1346
        %1569 = vmatpush1.msra.mxu0 %v1345
        %1570 = vmatprep.subr.mxu0 %v1350
        %1571 = vmatpush1.msra.mxu0 %v1349
        %1572 = vmatprep.subr.mxu0 0.0
        %1573 = vmatpush1.msra.mxu0 0.0
        %1574 = vmatprep.subr.mxu0 0.0
        %1575 = vmatpush1.msra.mxu0 0.0
        %1576 = vmatprep.subr.mxu0 0.0
        %1577 = vmatpush1.msra.mxu0 0.0
        %1578 = vmatprep.subr.mxu0 0.0
        %1579 = vmatpush1.msra.mxu0 0.0
        %1580 = vmatprep.subr.mxu0 0.0
        %1581 = vmatpush1.msra.mxu0 0.0
        %1582 = vmatprep.subr.mxu0 0.0
        %1583 = vmatpush1.msra.mxu0 0.0
        %1584 = vmatprep.subr.mxu0 0.0
        %1585 = vmatpush1.msra.mxu0 0.0
        %1586 = vmatprep.subr.mxu0 0.0
        %1587 = vmatpush1.msra.mxu0 0.0
        %1588 = vmatprep.subr.mxu0 0.0
        %1589 = vmatpush1.msra.mxu0 0.0
        %1590 = vmatprep.subr.mxu0 0.0
        %1591 = vmatpush1.msra.mxu0 0.0
        %1592 = vmatprep.subr.mxu0 0.0
        %1593 = vmatpush1.msra.mxu0 0.0
        %1594 = vmatprep.subr.mxu0 0.0
        %1595 = vmatpush1.msra.mxu0 0.0
        %1596 = vmatprep.subr.mxu0 0.0
        %1597 = vmatpush1.msra.mxu0 0.0
        %1598 = vmatprep.subr.mxu0 0.0
        %1599 = vmatpush1.msra.mxu0 0.0
        %1600 = vmatprep.subr.mxu0 0.0
        %1601 = vmatpush1.msra.mxu0 0.0
        %1602 = vmatprep.subr.mxu0 0.0
        %1603 = vmatpush1.msra.mxu0 0.0
        %1604 = vmatprep.mubr.f32.mxu0 0.0
        %1605 = vmatmul.mubr.f32.gmra.mrb[0].mxu0 %v1357
        %v1606 = vpop.f32.mrb[0].mxu0
        %v1607 = vadd.f32 0.0, %v1606
        %v1608 = vpop.f32.mrb[0].mxu0
        %v1609 = vadd.f32 0.0, %v1608
        %1610 = vmatprep.mubr.f32.mxu0 0.0
        %1611 = vmatmul.mubr.f32.gmra.mrb[0].mxu0 %v1358
        %v1612 = vpop.f32.mrb[0].mxu0
        %v1613 = vadd.f32 0.0, %v1612
        %v1614 = vpop.f32.mrb[0].mxu0
        %v1615 = vadd.f32 0.0, %v1614
        %1616 = vdwg.mxu0
        %1617 = vmatprep.subr.mxu0 %v1292
        %1618 = vmatpush1.msra.mxu0 %v1291
        %1619 = vmatprep.subr.mxu0 %v1296
        %1620 = vmatpush1.msra.mxu0 %v1295
        %1621 = vmatprep.subr.mxu0 %v1300
        %1622 = vmatpush1.msra.mxu0 %v1299
        %1623 = vmatprep.subr.mxu0 %v1304
        %1624 = vmatpush1.msra.mxu0 %v1303
        %1625 = vmatprep.subr.mxu0 %v1308
        %1626 = vmatpush1.msra.mxu0 %v1307
        %1627 = vmatprep.subr.mxu0 %v1312
        %1628 = vmatpush1.msra.mxu0 %v1311
        %1629 = vmatprep.subr.mxu0 %v1316
        %1630 = vmatpush1.msra.mxu0 %v1315
        %1631 = vmatprep.subr.mxu0 %v1320
        %1632 = vmatpush1.msra.mxu0 %v1319
        %1633 = vmatprep.subr.mxu0 %v1324
        %1634 = vmatpush1.msra.mxu0 %v1323
        %1635 = vmatprep.subr.mxu0 %v1328
        %1636 = vmatpush1.msra.mxu0 %v1327
        %1637 = vmatprep.subr.mxu0 %v1332
        %1638 = vmatpush1.msra.mxu0 %v1331
        %1639 = vmatprep.subr.mxu0 %v1336
        %1640 = vmatpush1.msra.mxu0 %v1335
        %1641 = vmatprep.subr.mxu0 %v1340
        %1642 = vmatpush1.msra.mxu0 %v1339
        %1643 = vmatprep.subr.mxu0 %v1344
        %1644 = vmatpush1.msra.mxu0 %v1343
        %1645 = vmatprep.subr.mxu0 %v1348
        %1646 = vmatpush1.msra.mxu0 %v1347
        %1647 = vmatprep.subr.mxu0 %v1352
        %1648 = vmatpush1.msra.mxu0 %v1351
        %1649 = vmatprep.subr.mxu0 0.0
        %1650 = vmatpush1.msra.mxu0 0.0
        %1651 = vmatprep.subr.mxu0 0.0
        %1652 = vmatpush1.msra.mxu0 0.0
        %1653 = vmatprep.subr.mxu0 0.0
        %1654 = vmatpush1.msra.mxu0 0.0
        %1655 = vmatprep.subr.mxu0 0.0
        %1656 = vmatpush1.msra.mxu0 0.0
        %1657 = vmatprep.subr.mxu0 0.0
        %1658 = vmatpush1.msra.mxu0 0.0
        %1659 = vmatprep.subr.mxu0 0.0
        %1660 = vmatpush1.msra.mxu0 0.0
        %1661 = vmatprep.subr.mxu0 0.0
        %1662 = vmatpush1.msra.mxu0 0.0
        %1663 = vmatprep.subr.mxu0 0.0
        %1664 = vmatpush1.msra.mxu0 0.0
        %1665 = vmatprep.subr.mxu0 0.0
        %1666 = vmatpush1.msra.mxu0 0.0
        %1667 = vmatprep.subr.mxu0 0.0
        %1668 = vmatpush1.msra.mxu0 0.0
        %1669 = vmatprep.subr.mxu0 0.0
        %1670 = vmatpush1.msra.mxu0 0.0
        %1671 = vmatprep.subr.mxu0 0.0
        %1672 = vmatpush1.msra.mxu0 0.0
        %1673 = vmatprep.subr.mxu0 0.0
        %1674 = vmatpush1.msra.mxu0 0.0
        %1675 = vmatprep.subr.mxu0 0.0
        %1676 = vmatpush1.msra.mxu0 0.0
        %1677 = vmatprep.subr.mxu0 0.0
        %1678 = vmatpush1.msra.mxu0 0.0
        %1679 = vmatprep.subr.mxu0 0.0
        %1680 = vmatpush1.msra.mxu0 0.0
        %1681 = vmatprep.mubr.f32.mxu0 0.0
        %1682 = vmatmul.mubr.f32.gmra.mrb[0].mxu0 %v1357
        %v1683 = vpop.f32.mrb[0].mxu0
        %v1684 = vadd.f32 0.0, %v1683
        %v1685 = vpop.f32.mrb[0].mxu0
        %v1686 = vadd.f32 0.0, %v1685
        %1687 = vmatprep.mubr.f32.mxu0 0.0
        %1688 = vmatmul.mubr.f32.gmra.mrb[0].mxu0 %v1358
        %v1689 = vpop.f32.mrb[0].mxu0
        %v1690 = vadd.f32 0.0, %v1689
        %v1691 = vpop.f32.mrb[0].mxu0
        %v1692 = vadd.f32 0.0, %v1691
        %1693 = vdwg.mxu0
        %v1694 = vadd.f32 %v1532, %v1607
        %v1695 = vadd.f32 %v1533, %v1609
        %v1696 = vadd.f32 %v1534, %v1684
        %v1697 = vadd.f32 %v1535, %v1686
        %v1698 = vadd.f32 %v1536, %v1613
        %v1699 = vadd.f32 %v1537, %v1615
        %v1700 = vadd.f32 %v1538, %v1690
        %v1701 = vadd.f32 %v1539, %v1692
        %v1702 = vxor.u32 %v1523, 2147483648
        %v1703 = vxor.u32 %v1527, 2147483648
        %v1704 = vmul.f32 %v1702, 1.442695
        %v1705 = vpow.pop %v1704
        %v1706 = vmul.f32 %v1703, 1.442695
        %v1707 = vpow.pop %v1706
        %v1708 = vadd.f32 %v1705, 1.0
        %v1709 = vadd.f32 %v1707, 1.0
        %v1710 = vrcp.pop %v1708
        %v1711 = vmul.f32 1.0, %v1710
        %v1712 = vrcp.pop %v1709
        %v1713 = vmul.f32 1.0, %v1712
        %v1714 = vxor.u32 %v1524, 2147483648
        %v1715 = vxor.u32 %v1528, 2147483648
        %v1716 = vmul.f32 %v1714, 1.442695
        %v1717 = vpow.pop %v1716
        %v1718 = vmul.f32 %v1715, 1.442695
        %v1719 = vpow.pop %v1718
        %v1720 = vadd.f32 %v1717, 1.0
        %v1721 = vadd.f32 %v1719, 1.0
        %v1722 = vrcp.pop %v1720
        %v1723 = vmul.f32 1.0, %v1722
        %v1724 = vrcp.pop %v1721
        %v1725 = vmul.f32 1.0, %v1724
        %v1726 = vtanh.pop %v1525
        %v1727 = vtanh.pop %v1529
        %v1728 = vxor.u32 %v1526, 2147483648
        %v1729 = vxor.u32 %v1530, 2147483648
        %v1730 = vmul.f32 %v1728, 1.442695
        %v1731 = vpow.pop %v1730
        %v1732 = vmul.f32 %v1729, 1.442695
        %v1733 = vpow.pop %v1732
        %v1734 = vadd.f32 %v1731, 1.0
        %v1735 = vadd.f32 %v1733, 1.0
        %v1736 = vrcp.pop %v1734
        %v1737 = vmul.f32 1.0, %v1736
        %v1738 = vrcp.pop %v1735
        %v1739 = vmul.f32 1.0, %v1738
        %v1740 = vmul.f32 %v1723, %v1355
        %v1741 = vmul.f32 %v1725, %v1356
        %v1742 = vmul.f32 %v1711, %v1726
        %v1743 = vmul.f32 %v1713, %v1727
        %v1744 = vadd.f32 %v1740, %v1742
        %v1745 = vadd.f32 %v1741, %v1743
        %v1746 = vtanh.pop %v1744
        %v1747 = vtanh.pop %v1745
        %v1748 = vmul.f32 %v1737, %v1746
        %v1749 = vmul.f32 %v1739, %v1747
        %v1750 = vxor.u32 %v1694, 2147483648
        %v1751 = vxor.u32 %v1698, 2147483648
        %v1752 = vmul.f32 %v1750, 1.442695
        %v1753 = vpow.pop %v1752
        %v1754 = vmul.f32 %v1751, 1.442695
        %v1755 = vpow.pop %v1754
        %v1756 = vadd.f32 %v1753, 1.0
        %v1757 = vadd.f32 %v1755, 1.0
        %v1758 = vrcp.pop %v1756
        %v1759 = vmul.f32 1.0, %v1758
        %v1760 = vrcp.pop %v1757
        %v1761 = vmul.f32 1.0, %v1760
        %v1762 = vxor.u32 %v1695, 2147483648
        %v1763 = vxor.u32 %v1699, 2147483648
        %v1764 = vmul.f32 %v1762, 1.442695
        %v1765 = vpow.pop %v1764
        %v1766 = vmul.f32 %v1763, 1.442695
        %v1767 = vpow.pop %v1766
        %v1768 = vadd.f32 %v1765, 1.0
        %v1769 = vadd.f32 %v1767, 1.0
        %v1770 = vrcp.pop %v1768
        %v1771 = vmul.f32 1.0, %v1770
        %v1772 = vrcp.pop %v1769
        %v1773 = vmul.f32 1.0, %v1772
        %v1774 = vtanh.pop %v1696
        %v1775 = vtanh.pop %v1700
        %v1776 = vxor.u32 %v1697, 2147483648
        %v1777 = vxor.u32 %v1701, 2147483648
        %v1778 = vmul.f32 %v1776, 1.442695
        %v1779 = vpow.pop %v1778
        %v1780 = vmul.f32 %v1777, 1.442695
        %v1781 = vpow.pop %v1780
        %v1782 = vadd.f32 %v1779, 1.0
        %v1783 = vadd.f32 %v1781, 1.0
        %v1784 = vrcp.pop %v1782
        %v1785 = vmul.f32 1.0, %v1784
        %v1786 = vrcp.pop %v1783
        %v1787 = vmul.f32 1.0, %v1786
        %v1788 = vmul.f32 %v1771, %v1359
        %v1789 = vmul.f32 %v1773, %v1360
        %v1790 = vmul.f32 %v1759, %v1774
        %v1791 = vmul.f32 %v1761, %v1775
        %v1792 = vadd.f32 %v1788, %v1790
        %v1793 = vadd.f32 %v1789, %v1791
        %v1794 = vtanh.pop %v1792
        %v1795 = vtanh.pop %v1793
        %v1796 = vmul.f32 %v1785, %v1794
        %v1797 = vmul.f32 %v1787, %v1795
        %s1798 = scalar_lea.vmem [#allocation2], 64
        %v1799 = vld [vmem:[%s1798] sm:$0xff]
        %v1800 = vld [vmem:[%s1798 + $0x8] sm:$0xff]
        %v1801 = vld [vmem:[%s1798 + $0x10] sm:$0xff]
        %v1802 = vld [vmem:[%s1798 + $0x18] sm:$0xff]
        %v1803 = vld [vmem:[%s1798 + $0x20] sm:$0xff]
        %v1804 = vld [vmem:[%s1798 + $0x28] sm:$0xff]
        %v1805 = vld [vmem:[%s1798 + $0x30] sm:$0xff]
        %v1806 = vld [vmem:[%s1798 + $0x38] sm:$0xff]
        %1807 = vmatprep.subr.mxu0 %v1226
        %1808 = vmatpush1.msra.mxu0 %v1225
        %1809 = vmatprep.subr.mxu0 %v1230
        %1810 = vmatpush1.msra.mxu0 %v1229
        %1811 = vmatprep.subr.mxu0 %v1234
        %1812 = vmatpush1.msra.mxu0 %v1233
        %1813 = vmatprep.subr.mxu0 %v1238
        %1814 = vmatpush1.msra.mxu0 %v1237
        %1815 = vmatprep.subr.mxu0 %v1242
        %1816 = vmatpush1.msra.mxu0 %v1241
        %1817 = vmatprep.subr.mxu0 %v1246
        %1818 = vmatpush1.msra.mxu0 %v1245
        %1819 = vmatprep.subr.mxu0 %v1250
        %1820 = vmatpush1.msra.mxu0 %v1249
        %1821 = vmatprep.subr.mxu0 %v1254
        %1822 = vmatpush1.msra.mxu0 %v1253
        %1823 = vmatprep.subr.mxu0 %v1258
        %1824 = vmatpush1.msra.mxu0 %v1257
        %1825 = vmatprep.subr.mxu0 %v1262
        %1826 = vmatpush1.msra.mxu0 %v1261
        %1827 = vmatprep.subr.mxu0 %v1266
        %1828 = vmatpush1.msra.mxu0 %v1265
        %1829 = vmatprep.subr.mxu0 %v1270
        %1830 = vmatpush1.msra.mxu0 %v1269
        %1831 = vmatprep.subr.mxu0 %v1274
        %1832 = vmatpush1.msra.mxu0 %v1273
        %1833 = vmatprep.subr.mxu0 %v1278
        %1834 = vmatpush1.msra.mxu0 %v1277
        %1835 = vmatprep.subr.mxu0 %v1282
        %1836 = vmatpush1.msra.mxu0 %v1281
        %1837 = vmatprep.subr.mxu0 %v1286
        %1838 = vmatpush1.msra.mxu0 %v1285
        %1839 = vmatprep.subr.mxu0 0.0
        %1840 = vmatpush1.msra.mxu0 0.0
        %1841 = vmatprep.subr.mxu0 0.0
        %1842 = vmatpush1.msra.mxu0 0.0
        %1843 = vmatprep.subr.mxu0 0.0
        %1844 = vmatpush1.msra.mxu0 0.0
        %1845 = vmatprep.subr.mxu0 0.0
        %1846 = vmatpush1.msra.mxu0 0.0
        %1847 = vmatprep.subr.mxu0 0.0
        %1848 = vmatpush1.msra.mxu0 0.0
        %1849 = vmatprep.subr.mxu0 0.0
        %1850 = vmatpush1.msra.mxu0 0.0
        %1851 = vmatprep.subr.mxu0 0.0
        %1852 = vmatpush1.msra.mxu0 0.0
        %1853 = vmatprep.subr.mxu0 0.0
        %1854 = vmatpush1.msra.mxu0 0.0
        %1855 = vmatprep.subr.mxu0 0.0
        %1856 = vmatpush1.msra.mxu0 0.0
        %1857 = vmatprep.subr.mxu0 0.0
        %1858 = vmatpush1.msra.mxu0 0.0
        %1859 = vmatprep.subr.mxu0 0.0
        %1860 = vmatpush1.msra.mxu0 0.0
        %1861 = vmatprep.subr.mxu0 0.0
        %1862 = vmatpush1.msra.mxu0 0.0
        %1863 = vmatprep.subr.mxu0 0.0
        %1864 = vmatpush1.msra.mxu0 0.0
        %1865 = vmatprep.subr.mxu0 0.0
        %1866 = vmatpush1.msra.mxu0 0.0
        %1867 = vmatprep.subr.mxu0 0.0
        %1868 = vmatpush1.msra.mxu0 0.0
        %1869 = vmatprep.subr.mxu0 0.0
        %1870 = vmatpush1.msra.mxu0 0.0
        %1871 = vmatprep.mubr.f32.mxu0 0.0
        %1872 = vmatmul.mubr.f32.gmra.mrb[0].mxu0 %v1748
        %v1873 = vpop.f32.mrb[0].mxu0
        %v1874 = vadd.f32 0.0, %v1873
        %v1875 = vpop.f32.mrb[0].mxu0
        %v1876 = vadd.f32 0.0, %v1875
        %1877 = vmatprep.mubr.f32.mxu0 0.0
        %1878 = vmatmul.mubr.f32.gmra.mrb[0].mxu0 %v1749
        %v1879 = vpop.f32.mrb[0].mxu0
        %v1880 = vadd.f32 0.0, %v1879
        %v1881 = vpop.f32.mrb[0].mxu0
        %v1882 = vadd.f32 0.0, %v1881
        %1883 = vdwg.mxu0
        %1884 = vmatprep.subr.mxu0 %v1228
        %1885 = vmatpush1.msra.mxu0 %v1227
        %1886 = vmatprep.subr.mxu0 %v1232
        %1887 = vmatpush1.msra.mxu0 %v1231
        %1888 = vmatprep.subr.mxu0 %v1236
        %1889 = vmatpush1.msra.mxu0 %v1235
        %1890 = vmatprep.subr.mxu0 %v1240
        %1891 = vmatpush1.msra.mxu0 %v1239
        %1892 = vmatprep.subr.mxu0 %v1244
        %1893 = vmatpush1.msra.mxu0 %v1243
        %1894 = vmatprep.subr.mxu0 %v1248
        %1895 = vmatpush1.msra.mxu0 %v1247
        %1896 = vmatprep.subr.mxu0 %v1252
        %1897 = vmatpush1.msra.mxu0 %v1251
        %1898 = vmatprep.subr.mxu0 %v1256
        %1899 = vmatpush1.msra.mxu0 %v1255
        %1900 = vmatprep.subr.mxu0 %v1260
        %1901 = vmatpush1.msra.mxu0 %v1259
        %1902 = vmatprep.subr.mxu0 %v1264
        %1903 = vmatpush1.msra.mxu0 %v1263
        %1904 = vmatprep.subr.mxu0 %v1268
        %1905 = vmatpush1.msra.mxu0 %v1267
        %1906 = vmatprep.subr.mxu0 %v1272
        %1907 = vmatpush1.msra.mxu0 %v1271
        %1908 = vmatprep.subr.mxu0 %v1276
        %1909 = vmatpush1.msra.mxu0 %v1275
        %1910 = vmatprep.subr.mxu0 %v1280
        %1911 = vmatpush1.msra.mxu0 %v1279
        %1912 = vmatprep.subr.mxu0 %v1284
        %1913 = vmatpush1.msra.mxu0 %v1283
        %1914 = vmatprep.subr.mxu0 %v1288
        %1915 = vmatpush1.msra.mxu0 %v1287
        %1916 = vmatprep.subr.mxu0 0.0
        %1917 = vmatpush1.msra.mxu0 0.0
        %1918 = vmatprep.subr.mxu0 0.0
        %1919 = vmatpush1.msra.mxu0 0.0
        %1920 = vmatprep.subr.mxu0 0.0
        %1921 = vmatpush1.msra.mxu0 0.0
        %1922 = vmatprep.subr.mxu0 0.0
        %1923 = vmatpush1.msra.mxu0 0.0
        %1924 = vmatprep.subr.mxu0 0.0
        %1925 = vmatpush1.msra.mxu0 0.0
        %1926 = vmatprep.subr.mxu0 0.0
        %1927 = vmatpush1.msra.mxu0 0.0
        %1928 = vmatprep.subr.mxu0 0.0
        %1929 = vmatpush1.msra.mxu0 0.0
        %1930 = vmatprep.subr.mxu0 0.0
        %1931 = vmatpush1.msra.mxu0 0.0
        %1932 = vmatprep.subr.mxu0 0.0
        %1933 = vmatpush1.msra.mxu0 0.0
        %1934 = vmatprep.subr.mxu0 0.0
        %1935 = vmatpush1.msra.mxu0 0.0
        %1936 = vmatprep.subr.mxu0 0.0
        %1937 = vmatpush1.msra.mxu0 0.0
        %1938 = vmatprep.subr.mxu0 0.0
        %1939 = vmatpush1.msra.mxu0 0.0
        %1940 = vmatprep.subr.mxu0 0.0
        %1941 = vmatpush1.msra.mxu0 0.0
        %1942 = vmatprep.subr.mxu0 0.0
        %1943 = vmatpush1.msra.mxu0 0.0
        %1944 = vmatprep.subr.mxu0 0.0
        %1945 = vmatpush1.msra.mxu0 0.0
        %1946 = vmatprep.subr.mxu0 0.0
        %1947 = vmatpush1.msra.mxu0 0.0
        %1948 = vmatprep.mubr.f32.mxu0 0.0
        %1949 = vmatmul.mubr.f32.gmra.mrb[0].mxu0 %v1748
        %v1950 = vpop.f32.mrb[0].mxu0
        %v1951 = vadd.f32 0.0, %v1950
        %v1952 = vpop.f32.mrb[0].mxu0
        %v1953 = vadd.f32 0.0, %v1952
        %1954 = vmatprep.mubr.f32.mxu0 0.0
        %1955 = vmatmul.mubr.f32.gmra.mrb[0].mxu0 %v1749
        %v1956 = vpop.f32.mrb[0].mxu0
        %v1957 = vadd.f32 0.0, %v1956
        %v1958 = vpop.f32.mrb[0].mxu0
        %v1959 = vadd.f32 0.0, %v1958
        %1960 = vdwg.mxu0
        %v1961 = vadd.f32 %v1799, %v1874
        %v1962 = vadd.f32 %v1800, %v1876
        %v1963 = vadd.f32 %v1801, %v1951
        %v1964 = vadd.f32 %v1802, %v1953
        %v1965 = vadd.f32 %v1803, %v1880
        %v1966 = vadd.f32 %v1804, %v1882
        %v1967 = vadd.f32 %v1805, %v1957
        %v1968 = vadd.f32 %v1806, %v1959
        %s1969 = scalar_lea.vmem [#allocation3], 128
        %v1970 = vld [vmem:[%s1969] sm:$0xff]
        %v1971 = vld [vmem:[%s1969 + $0x8] sm:$0xff]
        %v1972 = vld [vmem:[%s1969 + $0x10] sm:$0xff]
        %v1973 = vld [vmem:[%s1969 + $0x18] sm:$0xff]
        %v1974 = vld [vmem:[%s1969 + $0x20] sm:$0xff]
        %v1975 = vld [vmem:[%s1969 + $0x28] sm:$0xff]
        %v1976 = vld [vmem:[%s1969 + $0x30] sm:$0xff]
        %v1977 = vld [vmem:[%s1969 + $0x38] sm:$0xff]
        %1978 = vmatprep.subr.mxu0 %v1290
        %1979 = vmatpush1.msra.mxu0 %v1289
        %1980 = vmatprep.subr.mxu0 %v1294
        %1981 = vmatpush1.msra.mxu0 %v1293
        %1982 = vmatprep.subr.mxu0 %v1298
        %1983 = vmatpush1.msra.mxu0 %v1297
        %1984 = vmatprep.subr.mxu0 %v1302
        %1985 = vmatpush1.msra.mxu0 %v1301
        %1986 = vmatprep.subr.mxu0 %v1306
        %1987 = vmatpush1.msra.mxu0 %v1305
        %1988 = vmatprep.subr.mxu0 %v1310
        %1989 = vmatpush1.msra.mxu0 %v1309
        %1990 = vmatprep.subr.mxu0 %v1314
        %1991 = vmatpush1.msra.mxu0 %v1313
        %1992 = vmatprep.subr.mxu0 %v1318
        %1993 = vmatpush1.msra.mxu0 %v1317
        %1994 = vmatprep.subr.mxu0 %v1322
        %1995 = vmatpush1.msra.mxu0 %v1321
        %1996 = vmatprep.subr.mxu0 %v1326
        %1997 = vmatpush1.msra.mxu0 %v1325
        %1998 = vmatprep.subr.mxu0 %v1330
        %1999 = vmatpush1.msra.mxu0 %v1329
        %2000 = vmatprep.subr.mxu0 %v1334
        %2001 = vmatpush1.msra.mxu0 %v1333
        %2002 = vmatprep.subr.mxu0 %v1338
        %2003 = vmatpush1.msra.mxu0 %v1337
        %2004 = vmatprep.subr.mxu0 %v1342
        %2005 = vmatpush1.msra.mxu0 %v1341
        %2006 = vmatprep.subr.mxu0 %v1346
        %2007 = vmatpush1.msra.mxu0 %v1345
        %2008 = vmatprep.subr.mxu0 %v1350
        %2009 = vmatpush1.msra.mxu0 %v1349
        %2010 = vmatprep.subr.mxu0 0.0
        %2011 = vmatpush1.msra.mxu0 0.0
        %2012 = vmatprep.subr.mxu0 0.0
        %2013 = vmatpush1.msra.mxu0 0.0
        %2014 = vmatprep.subr.mxu0 0.0
        %2015 = vmatpush1.msra.mxu0 0.0
        %2016 = vmatprep.subr.mxu0 0.0
        %2017 = vmatpush1.msra.mxu0 0.0
        %2018 = vmatprep.subr.mxu0 0.0
        %2019 = vmatpush1.msra.mxu0 0.0
        %2020 = vmatprep.subr.mxu0 0.0
        %2021 = vmatpush1.msra.mxu0 0.0
        %2022 = vmatprep.subr.mxu0 0.0
        %2023 = vmatpush1.msra.mxu0 0.0
        %2024 = vmatprep.subr.mxu0 0.0
        %2025 = vmatpush1.msra.mxu0 0.0
        %2026 = vmatprep.subr.mxu0 0.0
        %2027 = vmatpush1.msra.mxu0 0.0
        %2028 = vmatprep.subr.mxu0 0.0
        %2029 = vmatpush1.msra.mxu0 0.0
        %2030 = vmatprep.subr.mxu0 0.0
        %2031 = vmatpush1.msra.mxu0 0.0
        %2032 = vmatprep.subr.mxu0 0.0
        %2033 = vmatpush1.msra.mxu0 0.0
        %2034 = vmatprep.subr.mxu0 0.0
        %2035 = vmatpush1.msra.mxu0 0.0
        %2036 = vmatprep.subr.mxu0 0.0
        %2037 = vmatpush1.msra.mxu0 0.0
        %2038 = vmatprep.subr.mxu0 0.0
        %2039 = vmatpush1.msra.mxu0 0.0
        %2040 = vmatprep.subr.mxu0 0.0
        %2041 = vmatpush1.msra.mxu0 0.0
        %2042 = vmatprep.mubr.f32.mxu0 0.0
        %2043 = vmatmul.mubr.f32.gmra.mrb[0].mxu0 %v1796
        %v2044 = vpop.f32.mrb[0].mxu0
        %v2045 = vadd.f32 0.0, %v2044
        %v2046 = vpop.f32.mrb[0].mxu0
        %v2047 = vadd.f32 0.0, %v2046
        %2048 = vmatprep.mubr.f32.mxu0 0.0
        %2049 = vmatmul.mubr.f32.gmra.mrb[0].mxu0 %v1797
        %v2050 = vpop.f32.mrb[0].mxu0
        %v2051 = vadd.f32 0.0, %v2050
        %v2052 = vpop.f32.mrb[0].mxu0
        %v2053 = vadd.f32 0.0, %v2052
        %2054 = vdwg.mxu0
        %2055 = vmatprep.subr.mxu0 %v1292
        %2056 = vmatpush1.msra.mxu0 %v1291
        %2057 = vmatprep.subr.mxu0 %v1296
        %2058 = vmatpush1.msra.mxu0 %v1295
        %2059 = vmatprep.subr.mxu0 %v1300
        %2060 = vmatpush1.msra.mxu0 %v1299
        %2061 = vmatprep.subr.mxu0 %v1304
        %2062 = vmatpush1.msra.mxu0 %v1303
        %2063 = vmatprep.subr.mxu0 %v1308
        %2064 = vmatpush1.msra.mxu0 %v1307
        %2065 = vmatprep.subr.mxu0 %v1312
        %2066 = vmatpush1.msra.mxu0 %v1311
        %2067 = vmatprep.subr.mxu0 %v1316
        %2068 = vmatpush1.msra.mxu0 %v1315
        %2069 = vmatprep.subr.mxu0 %v1320
        %2070 = vmatpush1.msra.mxu0 %v1319
        %2071 = vmatprep.subr.mxu0 %v1324
        %2072 = vmatpush1.msra.mxu0 %v1323
        %2073 = vmatprep.subr.mxu0 %v1328
        %2074 = vmatpush1.msra.mxu0 %v1327
        %2075 = vmatprep.subr.mxu0 %v1332
        %2076 = vmatpush1.msra.mxu0 %v1331
        %2077 = vmatprep.subr.mxu0 %v1336
        %2078 = vmatpush1.msra.mxu0 %v1335
        %2079 = vmatprep.subr.mxu0 %v1340
        %2080 = vmatpush1.msra.mxu0 %v1339
        %2081 = vmatprep.subr.mxu0 %v1344
        %2082 = vmatpush1.msra.mxu0 %v1343
        %2083 = vmatprep.subr.mxu0 %v1348
        %2084 = vmatpush1.msra.mxu0 %v1347
        %2085 = vmatprep.subr.mxu0 %v1352
        %2086 = vmatpush1.msra.mxu0 %v1351
        %2087 = vmatprep.subr.mxu0 0.0
        %2088 = vmatpush1.msra.mxu0 0.0
        %2089 = vmatprep.subr.mxu0 0.0
        %2090 = vmatpush1.msra.mxu0 0.0
        %2091 = vmatprep.subr.mxu0 0.0
        %2092 = vmatpush1.msra.mxu0 0.0
        %2093 = vmatprep.subr.mxu0 0.0
        %2094 = vmatpush1.msra.mxu0 0.0
        %2095 = vmatprep.subr.mxu0 0.0
        %2096 = vmatpush1.msra.mxu0 0.0
        %2097 = vmatprep.subr.mxu0 0.0
        %2098 = vmatpush1.msra.mxu0 0.0
        %2099 = vmatprep.subr.mxu0 0.0
        %2100 = vmatpush1.msra.mxu0 0.0
        %2101 = vmatprep.subr.mxu0 0.0
        %2102 = vmatpush1.msra.mxu0 0.0
        %2103 = vmatprep.subr.mxu0 0.0
        %2104 = vmatpush1.msra.mxu0 0.0
        %2105 = vmatprep.subr.mxu0 0.0
        %2106 = vmatpush1.msra.mxu0 0.0
        %2107 = vmatprep.subr.mxu0 0.0
        %2108 = vmatpush1.msra.mxu0 0.0
        %2109 = vmatprep.subr.mxu0 0.0
        %2110 = vmatpush1.msra.mxu0 0.0
        %2111 = vmatprep.subr.mxu0 0.0
        %2112 = vmatpush1.msra.mxu0 0.0
        %2113 = vmatprep.subr.mxu0 0.0
        %2114 = vmatpush1.msra.mxu0 0.0
        %2115 = vmatprep.subr.mxu0 0.0
        %2116 = vmatpush1.msra.mxu0 0.0
        %2117 = vmatprep.subr.mxu0 0.0
        %2118 = vmatpush1.msra.mxu0 0.0
        %2119 = vmatprep.mubr.f32.mxu0 0.0
        %2120 = vmatmul.mubr.f32.gmra.mrb[0].mxu0 %v1796
        %v2121 = vpop.f32.mrb[0].mxu0
        %v2122 = vadd.f32 0.0, %v2121
        %v2123 = vpop.f32.mrb[0].mxu0
        %v2124 = vadd.f32 0.0, %v2123
        %2125 = vmatprep.mubr.f32.mxu0 0.0
        %2126 = vmatmul.mubr.f32.gmra.mrb[0].mxu0 %v1797
        %v2127 = vpop.f32.mrb[0].mxu0
        %v2128 = vadd.f32 0.0, %v2127
        %v2129 = vpop.f32.mrb[0].mxu0
        %v2130 = vadd.f32 0.0, %v2129
        %2131 = vdwg.mxu0
        %v2132 = vadd.f32 %v1970, %v2045
        %v2133 = vadd.f32 %v1971, %v2047
        %v2134 = vadd.f32 %v1972, %v2122
        %v2135 = vadd.f32 %v1973, %v2124
        %v2136 = vadd.f32 %v1974, %v2051
        %v2137 = vadd.f32 %v1975, %v2053
        %v2138 = vadd.f32 %v1976, %v2128
        %v2139 = vadd.f32 %v1977, %v2130
        %v2140 = vxor.u32 %v1961, 2147483648
        %v2141 = vxor.u32 %v1965, 2147483648
        %v2142 = vmul.f32 %v2140, 1.442695
        %v2143 = vpow.pop %v2142
        %v2144 = vmul.f32 %v2141, 1.442695
        %v2145 = vpow.pop %v2144
        %v2146 = vadd.f32 %v2143, 1.0
        %v2147 = vadd.f32 %v2145, 1.0
        %v2148 = vrcp.pop %v2146
        %v2149 = vmul.f32 1.0, %v2148
        %v2150 = vrcp.pop %v2147
        %v2151 = vmul.f32 1.0, %v2150
        %v2152 = vxor.u32 %v1962, 2147483648
        %v2153 = vxor.u32 %v1966, 2147483648
        %v2154 = vmul.f32 %v2152, 1.442695
        %v2155 = vpow.pop %v2154
        %v2156 = vmul.f32 %v2153, 1.442695
        %v2157 = vpow.pop %v2156
        %v2158 = vadd.f32 %v2155, 1.0
        %v2159 = vadd.f32 %v2157, 1.0
        %v2160 = vrcp.pop %v2158
        %v2161 = vmul.f32 1.0, %v2160
        %v2162 = vrcp.pop %v2159
        %v2163 = vmul.f32 1.0, %v2162
        %v2164 = vtanh.pop %v1963
        %v2165 = vtanh.pop %v1967
        %v2166 = vxor.u32 %v1964, 2147483648
        %v2167 = vxor.u32 %v1968, 2147483648
        %v2168 = vmul.f32 %v2166, 1.442695
        %v2169 = vpow.pop %v2168
        %v2170 = vmul.f32 %v2167, 1.442695
        %v2171 = vpow.pop %v2170
        %v2172 = vadd.f32 %v2169, 1.0
        %v2173 = vadd.f32 %v2171, 1.0
        %v2174 = vrcp.pop %v2172
        %v2175 = vmul.f32 1.0, %v2174
        %v2176 = vrcp.pop %v2173
        %v2177 = vmul.f32 1.0, %v2176
        %v2178 = vmul.f32 %v2161, %v1744
        %v2179 = vmul.f32 %v2163, %v1745
        %v2180 = vmul.f32 %v2149, %v2164
        %v2181 = vmul.f32 %v2151, %v2165
        %v2182 = vadd.f32 %v2178, %v2180
        %v2183 = vadd.f32 %v2179, %v2181
        %v2184 = vtanh.pop %v2182
        %v2185 = vtanh.pop %v2183
        %v2186 = vmul.f32 %v2175, %v2184
        %v2187 = vmul.f32 %v2177, %v2185
        %v2188 = vxor.u32 %v2132, 2147483648
        %v2189 = vxor.u32 %v2136, 2147483648
        %v2190 = vmul.f32 %v2188, 1.442695
        %v2191 = vpow.pop %v2190
        %v2192 = vmul.f32 %v2189, 1.442695
        %v2193 = vpow.pop %v2192
        %v2194 = vadd.f32 %v2191, 1.0
        %v2195 = vadd.f32 %v2193, 1.0
        %v2196 = vrcp.pop %v2194
        %v2197 = vmul.f32 1.0, %v2196
        %v2198 = vrcp.pop %v2195
        %v2199 = vmul.f32 1.0, %v2198
        %v2200 = vxor.u32 %v2133, 2147483648
        %v2201 = vxor.u32 %v2137, 2147483648
        %v2202 = vmul.f32 %v2200, 1.442695
        %v2203 = vpow.pop %v2202
        %v2204 = vmul.f32 %v2201, 1.442695
        %v2205 = vpow.pop %v2204
        %v2206 = vadd.f32 %v2203, 1.0
        %v2207 = vadd.f32 %v2205, 1.0
        %v2208 = vrcp.pop %v2206
        %v2209 = vmul.f32 1.0, %v2208
        %v2210 = vrcp.pop %v2207
        %v2211 = vmul.f32 1.0, %v2210
        %v2212 = vtanh.pop %v2134
        %v2213 = vtanh.pop %v2138
        %v2214 = vxor.u32 %v2135, 2147483648
        %v2215 = vxor.u32 %v2139, 2147483648
        %v2216 = vmul.f32 %v2214, 1.442695
        %v2217 = vpow.pop %v2216
        %v2218 = vmul.f32 %v2215, 1.442695
        %v2219 = vpow.pop %v2218
        %v2220 = vadd.f32 %v2217, 1.0
        %v2221 = vadd.f32 %v2219, 1.0
        %v2222 = vrcp.pop %v2220
        %v2223 = vmul.f32 1.0, %v2222
        %v2224 = vrcp.pop %v2221
        %v2225 = vmul.f32 1.0, %v2224
        %v2226 = vmul.f32 %v2209, %v1792
        %v2227 = vmul.f32 %v2211, %v1793
        %v2228 = vmul.f32 %v2197, %v2212
        %v2229 = vmul.f32 %v2199, %v2213
        %v2230 = vadd.f32 %v2226, %v2228
        %v2231 = vadd.f32 %v2227, %v2229
        %v2232 = vtanh.pop %v2230
        %v2233 = vtanh.pop %v2231
        %v2234 = vmul.f32 %v2223, %v2232
        %v2235 = vmul.f32 %v2225, %v2233
        %s2236 = scalar_lea.vmem [#allocation2], 128
        %v2237 = vld [vmem:[%s2236] sm:$0xff]
        %v2238 = vld [vmem:[%s2236 + $0x8] sm:$0xff]
        %v2239 = vld [vmem:[%s2236 + $0x10] sm:$0xff]
        %v2240 = vld [vmem:[%s2236 + $0x18] sm:$0xff]
        %v2241 = vld [vmem:[%s2236 + $0x20] sm:$0xff]
        %v2242 = vld [vmem:[%s2236 + $0x28] sm:$0xff]
        %v2243 = vld [vmem:[%s2236 + $0x30] sm:$0xff]
        %v2244 = vld [vmem:[%s2236 + $0x38] sm:$0xff]
        %2245 = vmatprep.subr.mxu0 %v1226
        %2246 = vmatpush1.msra.mxu0 %v1225
        %2247 = vmatprep.subr.mxu0 %v1230
        %2248 = vmatpush1.msra.mxu0 %v1229
        %2249 = vmatprep.subr.mxu0 %v1234
        %2250 = vmatpush1.msra.mxu0 %v1233
        %2251 = vmatprep.subr.mxu0 %v1238
        %2252 = vmatpush1.msra.mxu0 %v1237
        %2253 = vmatprep.subr.mxu0 %v1242
        %2254 = vmatpush1.msra.mxu0 %v1241
        %2255 = vmatprep.subr.mxu0 %v1246
        %2256 = vmatpush1.msra.mxu0 %v1245
        %2257 = vmatprep.subr.mxu0 %v1250
        %2258 = vmatpush1.msra.mxu0 %v1249
        %2259 = vmatprep.subr.mxu0 %v1254
        %2260 = vmatpush1.msra.mxu0 %v1253
        %2261 = vmatprep.subr.mxu0 %v1258
        %2262 = vmatpush1.msra.mxu0 %v1257
        %2263 = vmatprep.subr.mxu0 %v1262
        %2264 = vmatpush1.msra.mxu0 %v1261
        %2265 = vmatprep.subr.mxu0 %v1266
        %2266 = vmatpush1.msra.mxu0 %v1265
        %2267 = vmatprep.subr.mxu0 %v1270
        %2268 = vmatpush1.msra.mxu0 %v1269
        %2269 = vmatprep.subr.mxu0 %v1274
        %2270 = vmatpush1.msra.mxu0 %v1273
        %2271 = vmatprep.subr.mxu0 %v1278
        %2272 = vmatpush1.msra.mxu0 %v1277
        %2273 = vmatprep.subr.mxu0 %v1282
        %2274 = vmatpush1.msra.mxu0 %v1281
        %2275 = vmatprep.subr.mxu0 %v1286
        %2276 = vmatpush1.msra.mxu0 %v1285
        %2277 = vmatprep.subr.mxu0 0.0
        %2278 = vmatpush1.msra.mxu0 0.0
        %2279 = vmatprep.subr.mxu0 0.0
        %2280 = vmatpush1.msra.mxu0 0.0
        %2281 = vmatprep.subr.mxu0 0.0
        %2282 = vmatpush1.msra.mxu0 0.0
        %2283 = vmatprep.subr.mxu0 0.0
        %2284 = vmatpush1.msra.mxu0 0.0
        %2285 = vmatprep.subr.mxu0 0.0
        %2286 = vmatpush1.msra.mxu0 0.0
        %2287 = vmatprep.subr.mxu0 0.0
        %2288 = vmatpush1.msra.mxu0 0.0
        %2289 = vmatprep.subr.mxu0 0.0
        %2290 = vmatpush1.msra.mxu0 0.0
        %2291 = vmatprep.subr.mxu0 0.0
        %2292 = vmatpush1.msra.mxu0 0.0
        %2293 = vmatprep.subr.mxu0 0.0
        %2294 = vmatpush1.msra.mxu0 0.0
        %2295 = vmatprep.subr.mxu0 0.0
        %2296 = vmatpush1.msra.mxu0 0.0
        %2297 = vmatprep.subr.mxu0 0.0
        %2298 = vmatpush1.msra.mxu0 0.0
        %2299 = vmatprep.subr.mxu0 0.0
        %2300 = vmatpush1.msra.mxu0 0.0
        %2301 = vmatprep.subr.mxu0 0.0
        %2302 = vmatpush1.msra.mxu0 0.0
        %2303 = vmatprep.subr.mxu0 0.0
        %2304 = vmatpush1.msra.mxu0 0.0
        %2305 = vmatprep.subr.mxu0 0.0
        %2306 = vmatpush1.msra.mxu0 0.0
        %2307 = vmatprep.subr.mxu0 0.0
        %2308 = vmatpush1.msra.mxu0 0.0
        %2309 = vmatprep.mubr.f32.mxu0 0.0
        %2310 = vmatmul.mubr.f32.gmra.mrb[0].mxu0 %v2186
        %v2311 = vpop.f32.mrb[0].mxu0
        %v2312 = vadd.f32 0.0, %v2311
        %v2313 = vpop.f32.mrb[0].mxu0
        %v2314 = vadd.f32 0.0, %v2313
        %2315 = vmatprep.mubr.f32.mxu0 0.0
        %2316 = vmatmul.mubr.f32.gmra.mrb[0].mxu0 %v2187
        %v2317 = vpop.f32.mrb[0].mxu0
        %v2318 = vadd.f32 0.0, %v2317
        %v2319 = vpop.f32.mrb[0].mxu0
        %v2320 = vadd.f32 0.0, %v2319
        %2321 = vdwg.mxu0
        %2322 = vmatprep.subr.mxu0 %v1228
        %2323 = vmatpush1.msra.mxu0 %v1227
        %2324 = vmatprep.subr.mxu0 %v1232
        %2325 = vmatpush1.msra.mxu0 %v1231
        %2326 = vmatprep.subr.mxu0 %v1236
        %2327 = vmatpush1.msra.mxu0 %v1235
        %2328 = vmatprep.subr.mxu0 %v1240
        %2329 = vmatpush1.msra.mxu0 %v1239
        %2330 = vmatprep.subr.mxu0 %v1244
        %2331 = vmatpush1.msra.mxu0 %v1243
        %2332 = vmatprep.subr.mxu0 %v1248
        %2333 = vmatpush1.msra.mxu0 %v1247
        %2334 = vmatprep.subr.mxu0 %v1252
        %2335 = vmatpush1.msra.mxu0 %v1251
        %2336 = vmatprep.subr.mxu0 %v1256
        %2337 = vmatpush1.msra.mxu0 %v1255
        %2338 = vmatprep.subr.mxu0 %v1260
        %2339 = vmatpush1.msra.mxu0 %v1259
        %2340 = vmatprep.subr.mxu0 %v1264
        %2341 = vmatpush1.msra.mxu0 %v1263
        %2342 = vmatprep.subr.mxu0 %v1268
        %2343 = vmatpush1.msra.mxu0 %v1267
        %2344 = vmatprep.subr.mxu0 %v1272
        %2345 = vmatpush1.msra.mxu0 %v1271
        %2346 = vmatprep.subr.mxu0 %v1276
        %2347 = vmatpush1.msra.mxu0 %v1275
        %2348 = vmatprep.subr.mxu0 %v1280
        %2349 = vmatpush1.msra.mxu0 %v1279
        %2350 = vmatprep.subr.mxu0 %v1284
        %2351 = vmatpush1.msra.mxu0 %v1283
        %2352 = vmatprep.subr.mxu0 %v1288
        %2353 = vmatpush1.msra.mxu0 %v1287
        %2354 = vmatprep.subr.mxu0 0.0
        %2355 = vmatpush1.msra.mxu0 0.0
        %2356 = vmatprep.subr.mxu0 0.0
        %2357 = vmatpush1.msra.mxu0 0.0
        %2358 = vmatprep.subr.mxu0 0.0
        %2359 = vmatpush1.msra.mxu0 0.0
        %2360 = vmatprep.subr.mxu0 0.0
        %2361 = vmatpush1.msra.mxu0 0.0
        %2362 = vmatprep.subr.mxu0 0.0
        %2363 = vmatpush1.msra.mxu0 0.0
        %2364 = vmatprep.subr.mxu0 0.0
        %2365 = vmatpush1.msra.mxu0 0.0
        %2366 = vmatprep.subr.mxu0 0.0
        %2367 = vmatpush1.msra.mxu0 0.0
        %2368 = vmatprep.subr.mxu0 0.0
        %2369 = vmatpush1.msra.mxu0 0.0
        %2370 = vmatprep.subr.mxu0 0.0
        %2371 = vmatpush1.msra.mxu0 0.0
        %2372 = vmatprep.subr.mxu0 0.0
        %2373 = vmatpush1.msra.mxu0 0.0
        %2374 = vmatprep.subr.mxu0 0.0
        %2375 = vmatpush1.msra.mxu0 0.0
        %2376 = vmatprep.subr.mxu0 0.0
        %2377 = vmatpush1.msra.mxu0 0.0
        %2378 = vmatprep.subr.mxu0 0.0
        %2379 = vmatpush1.msra.mxu0 0.0
        %2380 = vmatprep.subr.mxu0 0.0
        %2381 = vmatpush1.msra.mxu0 0.0
        %2382 = vmatprep.subr.mxu0 0.0
        %2383 = vmatpush1.msra.mxu0 0.0
        %2384 = vmatprep.subr.mxu0 0.0
        %2385 = vmatpush1.msra.mxu0 0.0
        %2386 = vmatprep.mubr.f32.mxu0 0.0
        %2387 = vmatmul.mubr.f32.gmra.mrb[0].mxu0 %v2186
        %v2388 = vpop.f32.mrb[0].mxu0
        %v2389 = vadd.f32 0.0, %v2388
        %v2390 = vpop.f32.mrb[0].mxu0
        %v2391 = vadd.f32 0.0, %v2390
        %2392 = vmatprep.mubr.f32.mxu0 0.0
        %2393 = vmatmul.mubr.f32.gmra.mrb[0].mxu0 %v2187
        %v2394 = vpop.f32.mrb[0].mxu0
        %v2395 = vadd.f32 0.0, %v2394
        %v2396 = vpop.f32.mrb[0].mxu0
        %v2397 = vadd.f32 0.0, %v2396
        %2398 = vdwg.mxu0
        %v2399 = vadd.f32 %v2237, %v2312
        %v2400 = vadd.f32 %v2238, %v2314
        %v2401 = vadd.f32 %v2239, %v2389
        %v2402 = vadd.f32 %v2240, %v2391
        %v2403 = vadd.f32 %v2241, %v2318
        %v2404 = vadd.f32 %v2242, %v2320
        %v2405 = vadd.f32 %v2243, %v2395
        %v2406 = vadd.f32 %v2244, %v2397
        %s2407 = scalar_lea.vmem [#allocation3], 64
        %v2408 = vld [vmem:[%s2407] sm:$0xff]
        %v2409 = vld [vmem:[%s2407 + $0x8] sm:$0xff]
        %v2410 = vld [vmem:[%s2407 + $0x10] sm:$0xff]
        %v2411 = vld [vmem:[%s2407 + $0x18] sm:$0xff]
        %v2412 = vld [vmem:[%s2407 + $0x20] sm:$0xff]
        %v2413 = vld [vmem:[%s2407 + $0x28] sm:$0xff]
        %v2414 = vld [vmem:[%s2407 + $0x30] sm:$0xff]
        %v2415 = vld [vmem:[%s2407 + $0x38] sm:$0xff]
        %2416 = vmatprep.subr.mxu0 %v1290
        %2417 = vmatpush1.msra.mxu0 %v1289
        %2418 = vmatprep.subr.mxu0 %v1294
        %2419 = vmatpush1.msra.mxu0 %v1293
        %2420 = vmatprep.subr.mxu0 %v1298
        %2421 = vmatpush1.msra.mxu0 %v1297
        %2422 = vmatprep.subr.mxu0 %v1302
        %2423 = vmatpush1.msra.mxu0 %v1301
        %2424 = vmatprep.subr.mxu0 %v1306
        %2425 = vmatpush1.msra.mxu0 %v1305
        %2426 = vmatprep.subr.mxu0 %v1310
        %2427 = vmatpush1.msra.mxu0 %v1309
        %2428 = vmatprep.subr.mxu0 %v1314
        %2429 = vmatpush1.msra.mxu0 %v1313
        %2430 = vmatprep.subr.mxu0 %v1318
        %2431 = vmatpush1.msra.mxu0 %v1317
        %2432 = vmatprep.subr.mxu0 %v1322
        %2433 = vmatpush1.msra.mxu0 %v1321
        %2434 = vmatprep.subr.mxu0 %v1326
        %2435 = vmatpush1.msra.mxu0 %v1325
        %2436 = vmatprep.subr.mxu0 %v1330
        %2437 = vmatpush1.msra.mxu0 %v1329
        %2438 = vmatprep.subr.mxu0 %v1334
        %2439 = vmatpush1.msra.mxu0 %v1333
        %2440 = vmatprep.subr.mxu0 %v1338
        %2441 = vmatpush1.msra.mxu0 %v1337
        %2442 = vmatprep.subr.mxu0 %v1342
        %2443 = vmatpush1.msra.mxu0 %v1341
        %2444 = vmatprep.subr.mxu0 %v1346
        %2445 = vmatpush1.msra.mxu0 %v1345
        %2446 = vmatprep.subr.mxu0 %v1350
        %2447 = vmatpush1.msra.mxu0 %v1349
        %2448 = vmatprep.subr.mxu0 0.0
        %2449 = vmatpush1.msra.mxu0 0.0
        %2450 = vmatprep.subr.mxu0 0.0
        %2451 = vmatpush1.msra.mxu0 0.0
        %2452 = vmatprep.subr.mxu0 0.0
        %2453 = vmatpush1.msra.mxu0 0.0
        %2454 = vmatprep.subr.mxu0 0.0
        %2455 = vmatpush1.msra.mxu0 0.0
        %2456 = vmatprep.subr.mxu0 0.0
        %2457 = vmatpush1.msra.mxu0 0.0
        %2458 = vmatprep.subr.mxu0 0.0
        %2459 = vmatpush1.msra.mxu0 0.0
        %2460 = vmatprep.subr.mxu0 0.0
        %2461 = vmatpush1.msra.mxu0 0.0
        %2462 = vmatprep.subr.mxu0 0.0
        %2463 = vmatpush1.msra.mxu0 0.0
        %2464 = vmatprep.subr.mxu0 0.0
        %2465 = vmatpush1.msra.mxu0 0.0
        %2466 = vmatprep.subr.mxu0 0.0
        %2467 = vmatpush1.msra.mxu0 0.0
        %2468 = vmatprep.subr.mxu0 0.0
        %2469 = vmatpush1.msra.mxu0 0.0
        %2470 = vmatprep.subr.mxu0 0.0
        %2471 = vmatpush1.msra.mxu0 0.0
        %2472 = vmatprep.subr.mxu0 0.0
        %2473 = vmatpush1.msra.mxu0 0.0
        %2474 = vmatprep.subr.mxu0 0.0
        %2475 = vmatpush1.msra.mxu0 0.0
        %2476 = vmatprep.subr.mxu0 0.0
        %2477 = vmatpush1.msra.mxu0 0.0
        %2478 = vmatprep.subr.mxu0 0.0
        %2479 = vmatpush1.msra.mxu0 0.0
        %2480 = vmatprep.mubr.f32.mxu0 0.0
        %2481 = vmatmul.mubr.f32.gmra.mrb[0].mxu0 %v2234
        %v2482 = vpop.f32.mrb[0].mxu0
        %v2483 = vadd.f32 0.0, %v2482
        %v2484 = vpop.f32.mrb[0].mxu0
        %v2485 = vadd.f32 0.0, %v2484
        %2486 = vmatprep.mubr.f32.mxu0 0.0
        %2487 = vmatmul.mubr.f32.gmra.mrb[0].mxu0 %v2235
        %v2488 = vpop.f32.mrb[0].mxu0
        %v2489 = vadd.f32 0.0, %v2488
        %v2490 = vpop.f32.mrb[0].mxu0
        %v2491 = vadd.f32 0.0, %v2490
        %2492 = vdwg.mxu0
        %2493 = vmatprep.subr.mxu0 %v1292
        %2494 = vmatpush1.msra.mxu0 %v1291
        %2495 = vmatprep.subr.mxu0 %v1296
        %2496 = vmatpush1.msra.mxu0 %v1295
        %2497 = vmatprep.subr.mxu0 %v1300
        %2498 = vmatpush1.msra.mxu0 %v1299
        %2499 = vmatprep.subr.mxu0 %v1304
        %2500 = vmatpush1.msra.mxu0 %v1303
        %2501 = vmatprep.subr.mxu0 %v1308
        %2502 = vmatpush1.msra.mxu0 %v1307
        %2503 = vmatprep.subr.mxu0 %v1312
        %2504 = vmatpush1.msra.mxu0 %v1311
        %2505 = vmatprep.subr.mxu0 %v1316
        %2506 = vmatpush1.msra.mxu0 %v1315
        %2507 = vmatprep.subr.mxu0 %v1320
        %2508 = vmatpush1.msra.mxu0 %v1319
        %2509 = vmatprep.subr.mxu0 %v1324
        %2510 = vmatpush1.msra.mxu0 %v1323
        %2511 = vmatprep.subr.mxu0 %v1328
        %2512 = vmatpush1.msra.mxu0 %v1327
        %2513 = vmatprep.subr.mxu0 %v1332
        %2514 = vmatpush1.msra.mxu0 %v1331
        %2515 = vmatprep.subr.mxu0 %v1336
        %2516 = vmatpush1.msra.mxu0 %v1335
        %2517 = vmatprep.subr.mxu0 %v1340
        %2518 = vmatpush1.msra.mxu0 %v1339
        %2519 = vmatprep.subr.mxu0 %v1344
        %2520 = vmatpush1.msra.mxu0 %v1343
        %2521 = vmatprep.subr.mxu0 %v1348
        %2522 = vmatpush1.msra.mxu0 %v1347
        %2523 = vmatprep.subr.mxu0 %v1352
        %2524 = vmatpush1.msra.mxu0 %v1351
        %2525 = vmatprep.subr.mxu0 0.0
        %2526 = vmatpush1.msra.mxu0 0.0
        %2527 = vmatprep.subr.mxu0 0.0
        %2528 = vmatpush1.msra.mxu0 0.0
        %2529 = vmatprep.subr.mxu0 0.0
        %2530 = vmatpush1.msra.mxu0 0.0
        %2531 = vmatprep.subr.mxu0 0.0
        %2532 = vmatpush1.msra.mxu0 0.0
        %2533 = vmatprep.subr.mxu0 0.0
        %2534 = vmatpush1.msra.mxu0 0.0
        %2535 = vmatprep.subr.mxu0 0.0
        %2536 = vmatpush1.msra.mxu0 0.0
        %2537 = vmatprep.subr.mxu0 0.0
        %2538 = vmatpush1.msra.mxu0 0.0
        %2539 = vmatprep.subr.mxu0 0.0
        %2540 = vmatpush1.msra.mxu0 0.0
        %2541 = vmatprep.subr.mxu0 0.0
        %2542 = vmatpush1.msra.mxu0 0.0
        %2543 = vmatprep.subr.mxu0 0.0
        %2544 = vmatpush1.msra.mxu0 0.0
        %2545 = vmatprep.subr.mxu0 0.0
        %2546 = vmatpush1.msra.mxu0 0.0
        %2547 = vmatprep.subr.mxu0 0.0
        %2548 = vmatpush1.msra.mxu0 0.0
        %2549 = vmatprep.subr.mxu0 0.0
        %2550 = vmatpush1.msra.mxu0 0.0
        %2551 = vmatprep.subr.mxu0 0.0
        %2552 = vmatpush1.msra.mxu0 0.0
        %2553 = vmatprep.subr.mxu0 0.0
        %2554 = vmatpush1.msra.mxu0 0.0
        %2555 = vmatprep.subr.mxu0 0.0
        %2556 = vmatpush1.msra.mxu0 0.0
        %2557 = vmatprep.mubr.f32.mxu0 0.0
        %2558 = vmatmul.mubr.f32.gmra.mrb[0].mxu0 %v2234
        %v2559 = vpop.f32.mrb[0].mxu0
        %v2560 = vadd.f32 0.0, %v2559
        %v2561 = vpop.f32.mrb[0].mxu0
        %v2562 = vadd.f32 0.0, %v2561
        %2563 = vmatprep.mubr.f32.mxu0 0.0
        %2564 = vmatmul.mubr.f32.gmra.mrb[0].mxu0 %v2235
        %v2565 = vpop.f32.mrb[0].mxu0
        %v2566 = vadd.f32 0.0, %v2565
        %v2567 = vpop.f32.mrb[0].mxu0
        %v2568 = vadd.f32 0.0, %v2567
        %2569 = vdwg.mxu0
        %v2570 = vadd.f32 %v2408, %v2483
        %v2571 = vadd.f32 %v2409, %v2485
        %v2572 = vadd.f32 %v2410, %v2560
        %v2573 = vadd.f32 %v2411, %v2562
        %v2574 = vadd.f32 %v2412, %v2489
        %v2575 = vadd.f32 %v2413, %v2491
        %v2576 = vadd.f32 %v2414, %v2566
        %v2577 = vadd.f32 %v2415, %v2568
        %v2578 = vxor.u32 %v2399, 2147483648
        %v2579 = vxor.u32 %v2403, 2147483648
        %v2580 = vmul.f32 %v2578, 1.442695
        %v2581 = vpow.pop %v2580
        %v2582 = vmul.f32 %v2579, 1.442695
        %v2583 = vpow.pop %v2582
        %v2584 = vadd.f32 %v2581, 1.0
        %v2585 = vadd.f32 %v2583, 1.0
        %v2586 = vrcp.pop %v2584
        %v2587 = vmul.f32 1.0, %v2586
        %v2588 = vrcp.pop %v2585
        %v2589 = vmul.f32 1.0, %v2588
        %v2590 = vxor.u32 %v2400, 2147483648
        %v2591 = vxor.u32 %v2404, 2147483648
        %v2592 = vmul.f32 %v2590, 1.442695
        %v2593 = vpow.pop %v2592
        %v2594 = vmul.f32 %v2591, 1.442695
        %v2595 = vpow.pop %v2594
        %v2596 = vadd.f32 %v2593, 1.0
        %v2597 = vadd.f32 %v2595, 1.0
        %v2598 = vrcp.pop %v2596
        %v2599 = vmul.f32 1.0, %v2598
        %v2600 = vrcp.pop %v2597
        %v2601 = vmul.f32 1.0, %v2600
        %v2602 = vtanh.pop %v2401
        %v2603 = vtanh.pop %v2405
        %v2604 = vxor.u32 %v2402, 2147483648
        %v2605 = vxor.u32 %v2406, 2147483648
        %v2606 = vmul.f32 %v2604, 1.442695
        %v2607 = vpow.pop %v2606
        %v2608 = vmul.f32 %v2605, 1.442695
        %v2609 = vpow.pop %v2608
        %v2610 = vadd.f32 %v2607, 1.0
        %v2611 = vadd.f32 %v2609, 1.0
        %v2612 = vrcp.pop %v2610
        %v2613 = vmul.f32 1.0, %v2612
        %v2614 = vrcp.pop %v2611
        %v2615 = vmul.f32 1.0, %v2614
        %v2616 = vmul.f32 %v2599, %v2182
        %v2617 = vmul.f32 %v2601, %v2183
        %v2618 = vmul.f32 %v2587, %v2602
        %v2619 = vmul.f32 %v2589, %v2603
        %v2620 = vadd.f32 %v2616, %v2618
        %v2621 = vadd.f32 %v2617, %v2619
        %v2622 = vtanh.pop %v2620
        %v2623 = vtanh.pop %v2621
        %v2624 = vmul.f32 %v2613, %v2622
        %v2625 = vmul.f32 %v2615, %v2623
        %v2626 = vxor.u32 %v2570, 2147483648
        %v2627 = vxor.u32 %v2574, 2147483648
        %v2628 = vmul.f32 %v2626, 1.442695
        %v2629 = vpow.pop %v2628
        %v2630 = vmul.f32 %v2627, 1.442695
        %v2631 = vpow.pop %v2630
        %v2632 = vadd.f32 %v2629, 1.0
        %v2633 = vadd.f32 %v2631, 1.0
        %v2634 = vrcp.pop %v2632
        %v2635 = vmul.f32 1.0, %v2634
        %v2636 = vrcp.pop %v2633
        %v2637 = vmul.f32 1.0, %v2636
        %v2638 = vxor.u32 %v2571, 2147483648
        %v2639 = vxor.u32 %v2575, 2147483648
        %v2640 = vmul.f32 %v2638, 1.442695
        %v2641 = vpow.pop %v2640
        %v2642 = vmul.f32 %v2639, 1.442695
        %v2643 = vpow.pop %v2642
        %v2644 = vadd.f32 %v2641, 1.0
        %v2645 = vadd.f32 %v2643, 1.0
        %v2646 = vrcp.pop %v2644
        %v2647 = vmul.f32 1.0, %v2646
        %v2648 = vrcp.pop %v2645
        %v2649 = vmul.f32 1.0, %v2648
        %v2650 = vtanh.pop %v2572
        %v2651 = vtanh.pop %v2576
        %v2652 = vxor.u32 %v2573, 2147483648
        %v2653 = vxor.u32 %v2577, 2147483648
        %v2654 = vmul.f32 %v2652, 1.442695
        %v2655 = vpow.pop %v2654
        %v2656 = vmul.f32 %v2653, 1.442695
        %v2657 = vpow.pop %v2656
        %v2658 = vadd.f32 %v2655, 1.0
        %v2659 = vadd.f32 %v2657, 1.0
        %v2660 = vrcp.pop %v2658
        %v2661 = vmul.f32 1.0, %v2660
        %v2662 = vrcp.pop %v2659
        %v2663 = vmul.f32 1.0, %v2662
        %v2664 = vmul.f32 %v2647, %v2230
        %v2665 = vmul.f32 %v2649, %v2231
        %v2666 = vmul.f32 %v2635, %v2650
        %v2667 = vmul.f32 %v2637, %v2651
        %v2668 = vadd.f32 %v2664, %v2666
        %v2669 = vadd.f32 %v2665, %v2667
        %v2670 = vtanh.pop %v2668
        %v2671 = vtanh.pop %v2669
        %v2672 = vmul.f32 %v2661, %v2670
        %v2673 = vmul.f32 %v2663, %v2671
        %s2674 = scalar_lea.vmem [#allocation2], 192
        %v2675 = vld [vmem:[%s2674] sm:$0xff]
        %v2676 = vld [vmem:[%s2674 + $0x8] sm:$0xff]
        %v2677 = vld [vmem:[%s2674 + $0x10] sm:$0xff]
        %v2678 = vld [vmem:[%s2674 + $0x18] sm:$0xff]
        %v2679 = vld [vmem:[%s2674 + $0x20] sm:$0xff]
        %v2680 = vld [vmem:[%s2674 + $0x28] sm:$0xff]
        %v2681 = vld [vmem:[%s2674 + $0x30] sm:$0xff]
        %v2682 = vld [vmem:[%s2674 + $0x38] sm:$0xff]
        %2683 = vmatprep.subr.mxu0 %v1226
        %2684 = vmatpush1.msra.mxu0 %v1225
        %2685 = vmatprep.subr.mxu0 %v1230
        %2686 = vmatpush1.msra.mxu0 %v1229
        %2687 = vmatprep.subr.mxu0 %v1234
        %2688 = vmatpush1.msra.mxu0 %v1233
        %2689 = vmatprep.subr.mxu0 %v1238
        %2690 = vmatpush1.msra.mxu0 %v1237
        %2691 = vmatprep.subr.mxu0 %v1242
        %2692 = vmatpush1.msra.mxu0 %v1241
        %2693 = vmatprep.subr.mxu0 %v1246
        %2694 = vmatpush1.msra.mxu0 %v1245
        %2695 = vmatprep.subr.mxu0 %v1250
        %2696 = vmatpush1.msra.mxu0 %v1249
        %2697 = vmatprep.subr.mxu0 %v1254
        %2698 = vmatpush1.msra.mxu0 %v1253
        %2699 = vmatprep.subr.mxu0 %v1258
        %2700 = vmatpush1.msra.mxu0 %v1257
        %2701 = vmatprep.subr.mxu0 %v1262
        %2702 = vmatpush1.msra.mxu0 %v1261
        %2703 = vmatprep.subr.mxu0 %v1266
        %2704 = vmatpush1.msra.mxu0 %v1265
        %2705 = vmatprep.subr.mxu0 %v1270
        %2706 = vmatpush1.msra.mxu0 %v1269
        %2707 = vmatprep.subr.mxu0 %v1274
        %2708 = vmatpush1.msra.mxu0 %v1273
        %2709 = vmatprep.subr.mxu0 %v1278
        %2710 = vmatpush1.msra.mxu0 %v1277
        %2711 = vmatprep.subr.mxu0 %v1282
        %2712 = vmatpush1.msra.mxu0 %v1281
        %2713 = vmatprep.subr.mxu0 %v1286
        %2714 = vmatpush1.msra.mxu0 %v1285
        %2715 = vmatprep.subr.mxu0 0.0
        %2716 = vmatpush1.msra.mxu0 0.0
        %2717 = vmatprep.subr.mxu0 0.0
        %2718 = vmatpush1.msra.mxu0 0.0
        %2719 = vmatprep.subr.mxu0 0.0
        %2720 = vmatpush1.msra.mxu0 0.0
        %2721 = vmatprep.subr.mxu0 0.0
        %2722 = vmatpush1.msra.mxu0 0.0
        %2723 = vmatprep.subr.mxu0 0.0
        %2724 = vmatpush1.msra.mxu0 0.0
        %2725 = vmatprep.subr.mxu0 0.0
        %2726 = vmatpush1.msra.mxu0 0.0
        %2727 = vmatprep.subr.mxu0 0.0
        %2728 = vmatpush1.msra.mxu0 0.0
        %2729 = vmatprep.subr.mxu0 0.0
        %2730 = vmatpush1.msra.mxu0 0.0
        %2731 = vmatprep.subr.mxu0 0.0
        %2732 = vmatpush1.msra.mxu0 0.0
        %2733 = vmatprep.subr.mxu0 0.0
        %2734 = vmatpush1.msra.mxu0 0.0
        %2735 = vmatprep.subr.mxu0 0.0
        %2736 = vmatpush1.msra.mxu0 0.0
        %2737 = vmatprep.subr.mxu0 0.0
        %2738 = vmatpush1.msra.mxu0 0.0
        %2739 = vmatprep.subr.mxu0 0.0
        %2740 = vmatpush1.msra.mxu0 0.0
        %2741 = vmatprep.subr.mxu0 0.0
        %2742 = vmatpush1.msra.mxu0 0.0
        %2743 = vmatprep.subr.mxu0 0.0
        %2744 = vmatpush1.msra.mxu0 0.0
        %2745 = vmatprep.subr.mxu0 0.0
        %2746 = vmatpush1.msra.mxu0 0.0
        %2747 = vmatprep.mubr.f32.mxu0 0.0
        %2748 = vmatmul.mubr.f32.gmra.mrb[0].mxu0 %v2624
        %v2749 = vpop.f32.mrb[0].mxu0
        %v2750 = vadd.f32 0.0, %v2749
        %v2751 = vpop.f32.mrb[0].mxu0
        %v2752 = vadd.f32 0.0, %v2751
        %2753 = vmatprep.mubr.f32.mxu0 0.0
        %2754 = vmatmul.mubr.f32.gmra.mrb[0].mxu0 %v2625
        %v2755 = vpop.f32.mrb[0].mxu0
        %v2756 = vadd.f32 0.0, %v2755
        %v2757 = vpop.f32.mrb[0].mxu0
        %v2758 = vadd.f32 0.0, %v2757
        %2759 = vdwg.mxu0
        %2760 = vmatprep.subr.mxu0 %v1228
        %2761 = vmatpush1.msra.mxu0 %v1227
        %2762 = vmatprep.subr.mxu0 %v1232
        %2763 = vmatpush1.msra.mxu0 %v1231
        %2764 = vmatprep.subr.mxu0 %v1236
        %2765 = vmatpush1.msra.mxu0 %v1235
        %2766 = vmatprep.subr.mxu0 %v1240
        %2767 = vmatpush1.msra.mxu0 %v1239
        %2768 = vmatprep.subr.mxu0 %v1244
        %2769 = vmatpush1.msra.mxu0 %v1243
        %2770 = vmatprep.subr.mxu0 %v1248
        %2771 = vmatpush1.msra.mxu0 %v1247
        %2772 = vmatprep.subr.mxu0 %v1252
        %2773 = vmatpush1.msra.mxu0 %v1251
        %2774 = vmatprep.subr.mxu0 %v1256
        %2775 = vmatpush1.msra.mxu0 %v1255
        %2776 = vmatprep.subr.mxu0 %v1260
        %2777 = vmatpush1.msra.mxu0 %v1259
        %2778 = vmatprep.subr.mxu0 %v1264
        %2779 = vmatpush1.msra.mxu0 %v1263
        %2780 = vmatprep.subr.mxu0 %v1268
        %2781 = vmatpush1.msra.mxu0 %v1267
        %2782 = vmatprep.subr.mxu0 %v1272
        %2783 = vmatpush1.msra.mxu0 %v1271
        %2784 = vmatprep.subr.mxu0 %v1276
        %2785 = vmatpush1.msra.mxu0 %v1275
        %2786 = vmatprep.subr.mxu0 %v1280
        %2787 = vmatpush1.msra.mxu0 %v1279
        %2788 = vmatprep.subr.mxu0 %v1284
        %2789 = vmatpush1.msra.mxu0 %v1283
        %2790 = vmatprep.subr.mxu0 %v1288
        %2791 = vmatpush1.msra.mxu0 %v1287
        %2792 = vmatprep.subr.mxu0 0.0
        %2793 = vmatpush1.msra.mxu0 0.0
        %2794 = vmatprep.subr.mxu0 0.0
        %2795 = vmatpush1.msra.mxu0 0.0
        %2796 = vmatprep.subr.mxu0 0.0
        %2797 = vmatpush1.msra.mxu0 0.0
        %2798 = vmatprep.subr.mxu0 0.0
        %2799 = vmatpush1.msra.mxu0 0.0
        %2800 = vmatprep.subr.mxu0 0.0
        %2801 = vmatpush1.msra.mxu0 0.0
        %2802 = vmatprep.subr.mxu0 0.0
        %2803 = vmatpush1.msra.mxu0 0.0
        %2804 = vmatprep.subr.mxu0 0.0
        %2805 = vmatpush1.msra.mxu0 0.0
        %2806 = vmatprep.subr.mxu0 0.0
        %2807 = vmatpush1.msra.mxu0 0.0
        %2808 = vmatprep.subr.mxu0 0.0
        %2809 = vmatpush1.msra.mxu0 0.0
        %2810 = vmatprep.subr.mxu0 0.0
        %2811 = vmatpush1.msra.mxu0 0.0
        %2812 = vmatprep.subr.mxu0 0.0
        %2813 = vmatpush1.msra.mxu0 0.0
        %2814 = vmatprep.subr.mxu0 0.0
        %2815 = vmatpush1.msra.mxu0 0.0
        %2816 = vmatprep.subr.mxu0 0.0
        %2817 = vmatpush1.msra.mxu0 0.0
        %2818 = vmatprep.subr.mxu0 0.0
        %2819 = vmatpush1.msra.mxu0 0.0
        %2820 = vmatprep.subr.mxu0 0.0
        %2821 = vmatpush1.msra.mxu0 0.0
        %2822 = vmatprep.subr.mxu0 0.0
        %2823 = vmatpush1.msra.mxu0 0.0
        %2824 = vmatprep.mubr.f32.mxu0 0.0
        %2825 = vmatmul.mubr.f32.gmra.mrb[0].mxu0 %v2624
        %v2826 = vpop.f32.mrb[0].mxu0
        %v2827 = vadd.f32 0.0, %v2826
        %v2828 = vpop.f32.mrb[0].mxu0
        %v2829 = vadd.f32 0.0, %v2828
        %2830 = vmatprep.mubr.f32.mxu0 0.0
        %2831 = vmatmul.mubr.f32.gmra.mrb[0].mxu0 %v2625
        %v2832 = vpop.f32.mrb[0].mxu0
        %v2833 = vadd.f32 0.0, %v2832
        %v2834 = vpop.f32.mrb[0].mxu0
        %v2835 = vadd.f32 0.0, %v2834
        %2836 = vdwg.mxu0
        %v2837 = vadd.f32 %v2675, %v2750
        %v2838 = vadd.f32 %v2676, %v2752
        %v2839 = vadd.f32 %v2677, %v2827
        %v2840 = vadd.f32 %v2678, %v2829
        %v2841 = vadd.f32 %v2679, %v2756
        %v2842 = vadd.f32 %v2680, %v2758
        %v2843 = vadd.f32 %v2681, %v2833
        %v2844 = vadd.f32 %v2682, %v2835
        %v2845 = vld [vmem:[#allocation3] sm:$0xff]
        %v2846 = vld [vmem:[#allocation3 + $0x8] sm:$0xff]
        %v2847 = vld [vmem:[#allocation3 + $0x10] sm:$0xff]
        %v2848 = vld [vmem:[#allocation3 + $0x18] sm:$0xff]
        %v2849 = vld [vmem:[#allocation3 + $0x20] sm:$0xff]
        %v2850 = vld [vmem:[#allocation3 + $0x28] sm:$0xff]
        %v2851 = vld [vmem:[#allocation3 + $0x30] sm:$0xff]
        %v2852 = vld [vmem:[#allocation3 + $0x38] sm:$0xff]
        %2853 = vmatprep.subr.mxu0 %v1290
        %2854 = vmatpush1.msra.mxu0 %v1289
        %2855 = vmatprep.subr.mxu0 %v1294
        %2856 = vmatpush1.msra.mxu0 %v1293
        %2857 = vmatprep.subr.mxu0 %v1298
        %2858 = vmatpush1.msra.mxu0 %v1297
        %2859 = vmatprep.subr.mxu0 %v1302
        %2860 = vmatpush1.msra.mxu0 %v1301
        %2861 = vmatprep.subr.mxu0 %v1306
        %2862 = vmatpush1.msra.mxu0 %v1305
        %2863 = vmatprep.subr.mxu0 %v1310
        %2864 = vmatpush1.msra.mxu0 %v1309
        %2865 = vmatprep.subr.mxu0 %v1314
        %2866 = vmatpush1.msra.mxu0 %v1313
        %2867 = vmatprep.subr.mxu0 %v1318
        %2868 = vmatpush1.msra.mxu0 %v1317
        %2869 = vmatprep.subr.mxu0 %v1322
        %2870 = vmatpush1.msra.mxu0 %v1321
        %2871 = vmatprep.subr.mxu0 %v1326
        %2872 = vmatpush1.msra.mxu0 %v1325
        %2873 = vmatprep.subr.mxu0 %v1330
        %2874 = vmatpush1.msra.mxu0 %v1329
        %2875 = vmatprep.subr.mxu0 %v1334
        %2876 = vmatpush1.msra.mxu0 %v1333
        %2877 = vmatprep.subr.mxu0 %v1338
        %2878 = vmatpush1.msra.mxu0 %v1337
        %2879 = vmatprep.subr.mxu0 %v1342
        %2880 = vmatpush1.msra.mxu0 %v1341
        %2881 = vmatprep.subr.mxu0 %v1346
        %2882 = vmatpush1.msra.mxu0 %v1345
        %2883 = vmatprep.subr.mxu0 %v1350
        %2884 = vmatpush1.msra.mxu0 %v1349
        %2885 = vmatprep.subr.mxu0 0.0
        %2886 = vmatpush1.msra.mxu0 0.0
        %2887 = vmatprep.subr.mxu0 0.0
        %2888 = vmatpush1.msra.mxu0 0.0
        %2889 = vmatprep.subr.mxu0 0.0
        %2890 = vmatpush1.msra.mxu0 0.0
        %2891 = vmatprep.subr.mxu0 0.0
        %2892 = vmatpush1.msra.mxu0 0.0
        %2893 = vmatprep.subr.mxu0 0.0
        %2894 = vmatpush1.msra.mxu0 0.0
        %2895 = vmatprep.subr.mxu0 0.0
        %2896 = vmatpush1.msra.mxu0 0.0
        %2897 = vmatprep.subr.mxu0 0.0
        %2898 = vmatpush1.msra.mxu0 0.0
        %2899 = vmatprep.subr.mxu0 0.0
        %2900 = vmatpush1.msra.mxu0 0.0
        %2901 = vmatprep.subr.mxu0 0.0
        %2902 = vmatpush1.msra.mxu0 0.0
        %2903 = vmatprep.subr.mxu0 0.0
        %2904 = vmatpush1.msra.mxu0 0.0
        %2905 = vmatprep.subr.mxu0 0.0
        %2906 = vmatpush1.msra.mxu0 0.0
        %2907 = vmatprep.subr.mxu0 0.0
        %2908 = vmatpush1.msra.mxu0 0.0
        %2909 = vmatprep.subr.mxu0 0.0
        %2910 = vmatpush1.msra.mxu0 0.0
        %2911 = vmatprep.subr.mxu0 0.0
        %2912 = vmatpush1.msra.mxu0 0.0
        %2913 = vmatprep.subr.mxu0 0.0
        %2914 = vmatpush1.msra.mxu0 0.0
        %2915 = vmatprep.subr.mxu0 0.0
        %2916 = vmatpush1.msra.mxu0 0.0
        %2917 = vmatprep.mubr.f32.mxu0 0.0
        %2918 = vmatmul.mubr.f32.gmra.mrb[0].mxu0 %v2672
        %v2919 = vpop.f32.mrb[0].mxu0
        %v2920 = vadd.f32 0.0, %v2919
        %v2921 = vpop.f32.mrb[0].mxu0
        %v2922 = vadd.f32 0.0, %v2921
        %2923 = vmatprep.mubr.f32.mxu0 0.0
        %2924 = vmatmul.mubr.f32.gmra.mrb[0].mxu0 %v2673
        %v2925 = vpop.f32.mrb[0].mxu0
        %v2926 = vadd.f32 0.0, %v2925
        %v2927 = vpop.f32.mrb[0].mxu0
        %v2928 = vadd.f32 0.0, %v2927
        %2929 = vdwg.mxu0
        %2930 = vmatprep.subr.mxu0 %v1292
        %2931 = vmatpush1.msra.mxu0 %v1291
        %2932 = vmatprep.subr.mxu0 %v1296
        %2933 = vmatpush1.msra.mxu0 %v1295
        %2934 = vmatprep.subr.mxu0 %v1300
        %2935 = vmatpush1.msra.mxu0 %v1299
        %2936 = vmatprep.subr.mxu0 %v1304
        %2937 = vmatpush1.msra.mxu0 %v1303
        %2938 = vmatprep.subr.mxu0 %v1308
        %2939 = vmatpush1.msra.mxu0 %v1307
        %2940 = vmatprep.subr.mxu0 %v1312
        %2941 = vmatpush1.msra.mxu0 %v1311
        %2942 = vmatprep.subr.mxu0 %v1316
        %2943 = vmatpush1.msra.mxu0 %v1315
        %2944 = vmatprep.subr.mxu0 %v1320
        %2945 = vmatpush1.msra.mxu0 %v1319
        %2946 = vmatprep.subr.mxu0 %v1324
        %2947 = vmatpush1.msra.mxu0 %v1323
        %2948 = vmatprep.subr.mxu0 %v1328
        %2949 = vmatpush1.msra.mxu0 %v1327
        %2950 = vmatprep.subr.mxu0 %v1332
        %2951 = vmatpush1.msra.mxu0 %v1331
        %2952 = vmatprep.subr.mxu0 %v1336
        %2953 = vmatpush1.msra.mxu0 %v1335
        %2954 = vmatprep.subr.mxu0 %v1340
        %2955 = vmatpush1.msra.mxu0 %v1339
        %2956 = vmatprep.subr.mxu0 %v1344
        %2957 = vmatpush1.msra.mxu0 %v1343
        %2958 = vmatprep.subr.mxu0 %v1348
        %2959 = vmatpush1.msra.mxu0 %v1347
        %2960 = vmatprep.subr.mxu0 %v1352
        %2961 = vmatpush1.msra.mxu0 %v1351
        %2962 = vmatprep.subr.mxu0 0.0
        %2963 = vmatpush1.msra.mxu0 0.0
        %2964 = vmatprep.subr.mxu0 0.0
        %2965 = vmatpush1.msra.mxu0 0.0
        %2966 = vmatprep.subr.mxu0 0.0
        %2967 = vmatpush1.msra.mxu0 0.0
        %2968 = vmatprep.subr.mxu0 0.0
        %2969 = vmatpush1.msra.mxu0 0.0
        %2970 = vmatprep.subr.mxu0 0.0
        %2971 = vmatpush1.msra.mxu0 0.0
        %2972 = vmatprep.subr.mxu0 0.0
        %2973 = vmatpush1.msra.mxu0 0.0
        %2974 = vmatprep.subr.mxu0 0.0
        %2975 = vmatpush1.msra.mxu0 0.0
        %2976 = vmatprep.subr.mxu0 0.0
        %2977 = vmatpush1.msra.mxu0 0.0
        %2978 = vmatprep.subr.mxu0 0.0
        %2979 = vmatpush1.msra.mxu0 0.0
        %2980 = vmatprep.subr.mxu0 0.0
        %2981 = vmatpush1.msra.mxu0 0.0
        %2982 = vmatprep.subr.mxu0 0.0
        %2983 = vmatpush1.msra.mxu0 0.0
        %2984 = vmatprep.subr.mxu0 0.0
        %2985 = vmatpush1.msra.mxu0 0.0
        %2986 = vmatprep.subr.mxu0 0.0
        %2987 = vmatpush1.msra.mxu0 0.0
        %2988 = vmatprep.subr.mxu0 0.0
        %2989 = vmatpush1.msra.mxu0 0.0
        %2990 = vmatprep.subr.mxu0 0.0
        %2991 = vmatpush1.msra.mxu0 0.0
        %2992 = vmatprep.subr.mxu0 0.0
        %2993 = vmatpush1.msra.mxu0 0.0
        %2994 = vmatprep.mubr.f32.mxu0 0.0
        %2995 = vmatmul.mubr.f32.gmra.mrb[0].mxu0 %v2672
        %v2996 = vpop.f32.mrb[0].mxu0
        %v2997 = vadd.f32 0.0, %v2996
        %v2998 = vpop.f32.mrb[0].mxu0
        %v2999 = vadd.f32 0.0, %v2998
        %3000 = vmatprep.mubr.f32.mxu0 0.0
        %3001 = vmatmul.mubr.f32.gmra.mrb[0].mxu0 %v2673
        %v3002 = vpop.f32.mrb[0].mxu0
        %v3003 = vadd.f32 0.0, %v3002
        %v3004 = vpop.f32.mrb[0].mxu0
        %v3005 = vadd.f32 0.0, %v3004
        %3006 = vdwg.mxu0
        %v3007 = vadd.f32 %v2845, %v2920
        %v3008 = vadd.f32 %v2846, %v2922
        %v3009 = vadd.f32 %v2847, %v2997
        %v3010 = vadd.f32 %v2848, %v2999
        %v3011 = vadd.f32 %v2849, %v2926
        %v3012 = vadd.f32 %v2850, %v2928
        %v3013 = vadd.f32 %v2851, %v3003
        %v3014 = vadd.f32 %v2852, %v3005
        %v3015 = vxor.u32 %v2837, 2147483648
        %v3016 = vxor.u32 %v2841, 2147483648
        %v3017 = vmul.f32 %v3015, 1.442695
        %v3018 = vpow.pop %v3017
        %v3019 = vmul.f32 %v3016, 1.442695
        %v3020 = vpow.pop %v3019
        %v3021 = vadd.f32 %v3018, 1.0
        %v3022 = vadd.f32 %v3020, 1.0
        %v3023 = vrcp.pop %v3021
        %v3024 = vmul.f32 1.0, %v3023
        %v3025 = vrcp.pop %v3022
        %v3026 = vmul.f32 1.0, %v3025
        %v3027 = vxor.u32 %v2838, 2147483648
        %v3028 = vxor.u32 %v2842, 2147483648
        %v3029 = vmul.f32 %v3027, 1.442695
        %v3030 = vpow.pop %v3029
        %v3031 = vmul.f32 %v3028, 1.442695
        %v3032 = vpow.pop %v3031
        %v3033 = vadd.f32 %v3030, 1.0
        %v3034 = vadd.f32 %v3032, 1.0
        %v3035 = vrcp.pop %v3033
        %v3036 = vmul.f32 1.0, %v3035
        %v3037 = vrcp.pop %v3034
        %v3038 = vmul.f32 1.0, %v3037
        %v3039 = vtanh.pop %v2839
        %v3040 = vtanh.pop %v2843
        %v3041 = vxor.u32 %v2840, 2147483648
        %v3042 = vxor.u32 %v2844, 2147483648
        %v3043 = vmul.f32 %v3041, 1.442695
        %v3044 = vpow.pop %v3043
        %v3045 = vmul.f32 %v3042, 1.442695
        %v3046 = vpow.pop %v3045
        %v3047 = vadd.f32 %v3044, 1.0
        %v3048 = vadd.f32 %v3046, 1.0
        %v3049 = vrcp.pop %v3047
        %v3050 = vmul.f32 1.0, %v3049
        %v3051 = vrcp.pop %v3048
        %v3052 = vmul.f32 1.0, %v3051
        %v3053 = vmul.f32 %v3036, %v2620
        %v3054 = vmul.f32 %v3038, %v2621
        %v3055 = vmul.f32 %v3024, %v3039
        %v3056 = vmul.f32 %v3026, %v3040
        %v3057 = vadd.f32 %v3053, %v3055
        %v3058 = vadd.f32 %v3054, %v3056
        %v3059 = vtanh.pop %v3057
        %v3060 = vtanh.pop %v3058
        %v3061 = vmul.f32 %v3050, %v3059
        %v3062 = vmul.f32 %v3052, %v3060
        %v3063 = vxor.u32 %v3007, 2147483648
        %v3064 = vxor.u32 %v3011, 2147483648
        %v3065 = vmul.f32 %v3063, 1.442695
        %v3066 = vpow.pop %v3065
        %v3067 = vmul.f32 %v3064, 1.442695
        %v3068 = vpow.pop %v3067
        %v3069 = vadd.f32 %v3066, 1.0
        %v3070 = vadd.f32 %v3068, 1.0
        %v3071 = vrcp.pop %v3069
        %v3072 = vmul.f32 1.0, %v3071
        %v3073 = vrcp.pop %v3070
        %v3074 = vmul.f32 1.0, %v3073
        %v3075 = vxor.u32 %v3008, 2147483648
        %v3076 = vxor.u32 %v3012, 2147483648
        %v3077 = vmul.f32 %v3075, 1.442695
        %v3078 = vpow.pop %v3077
        %v3079 = vmul.f32 %v3076, 1.442695
        %v3080 = vpow.pop %v3079
        %v3081 = vadd.f32 %v3078, 1.0
        %v3082 = vadd.f32 %v3080, 1.0
        %v3083 = vrcp.pop %v3081
        %v3084 = vmul.f32 1.0, %v3083
        %v3085 = vrcp.pop %v3082
        %v3086 = vmul.f32 1.0, %v3085
        %v3087 = vtanh.pop %v3009
        %v3088 = vtanh.pop %v3013
        %v3089 = vxor.u32 %v3010, 2147483648
        %v3090 = vxor.u32 %v3014, 2147483648
        %v3091 = vmul.f32 %v3089, 1.442695
        %v3092 = vpow.pop %v3091
        %v3093 = vmul.f32 %v3090, 1.442695
        %v3094 = vpow.pop %v3093
        %v3095 = vadd.f32 %v3092, 1.0
        %v3096 = vadd.f32 %v3094, 1.0
        %v3097 = vrcp.pop %v3095
        %v3098 = vmul.f32 1.0, %v3097
        %v3099 = vrcp.pop %v3096
        %v3100 = vmul.f32 1.0, %v3099
        %v3101 = vmul.f32 %v3084, %v2668
        %v3102 = vmul.f32 %v3086, %v2669
        %v3103 = vmul.f32 %v3072, %v3087
        %v3104 = vmul.f32 %v3074, %v3088
        %v3105 = vadd.f32 %v3101, %v3103
        %v3106 = vadd.f32 %v3102, %v3104
        %v3107 = vtanh.pop %v3105
        %v3108 = vtanh.pop %v3106
        %v3109 = vmul.f32 %v3098, %v3107
        %v3110 = vmul.f32 %v3100, %v3108
        %3111 = vst [vmem:[#allocation4] sm:$0xff] %v3061
        %3112 = vst [vmem:[#allocation4 + $0x8] sm:$0xff] %v3062
        %3113 = vst [vmem:[#allocation5] sm:$0xff] %v3057
        %3114 = vst [vmem:[#allocation5 + $0x8] sm:$0xff] %v3058
        %3115 = vst [vmem:[#allocation6] sm:$0xff] %v3109
        %3116 = vst [vmem:[#allocation6 + $0x8] sm:$0xff] %v3110
        %3117 = vst [vmem:[#allocation7] sm:$0xff] %v3105
        %3118 = vst [vmem:[#allocation7 + $0x8] sm:$0xff] %v3106
        %p3119 = scmp.eq.s32.totalorder %s37, 1
        // Predicated region
        $region101: #{tpu_custom_call.1} parent=63 // pred_check
          %p3120 = pneg %p3119
        $region102: #{tpu_custom_call.1} parent=63 // pred_check_branch
          %3122 = sbr.rel (%p3120) target = $region104
        $region103: #{tpu_custom_call.1} parent=63 // pred_region
          %v3123 = vld [vmem:[#allocation19] sm:$0xff]
          %v3124 = vld [vmem:[#allocation19 + $0x8] sm:$0xff]
          %v3125 = vld [vmem:[#allocation19 + $0x10] sm:$0xff]
          %v3126 = vld [vmem:[#allocation19 + $0x18] sm:$0xff]
          %v3127 = vld [vmem:[#allocation19 + $0x20] sm:$0xff]
          %v3128 = vld [vmem:[#allocation19 + $0x28] sm:$0xff]
          %v3129 = vld [vmem:[#allocation19 + $0x30] sm:$0xff]
          %v3130 = vld [vmem:[#allocation19 + $0x38] sm:$0xff]
          %v3131 = vld [vmem:[#allocation19 + $0x40] sm:$0xff]
          %v3132 = vld [vmem:[#allocation19 + $0x48] sm:$0xff]
          %v3133 = vld [vmem:[#allocation19 + $0x50] sm:$0xff]
          %v3134 = vld [vmem:[#allocation19 + $0x58] sm:$0xff]
          %v3135 = vld [vmem:[#allocation19 + $0x60] sm:$0xff]
          %v3136 = vld [vmem:[#allocation19 + $0x68] sm:$0xff]
          %v3137 = vld [vmem:[#allocation19 + $0x70] sm:$0xff]
          %v3138 = vld [vmem:[#allocation19 + $0x78] sm:$0xff]
          %v3139 = vld [vmem:[#allocation20] sm:$0xff]
          %v3140 = vld [vmem:[#allocation20 + $0x8] sm:$0xff]
          %v3141 = vld [vmem:[#allocation20 + $0x10] sm:$0xff]
          %v3142 = vld [vmem:[#allocation20 + $0x18] sm:$0xff]
          %v3143 = vld [vmem:[#allocation20 + $0x20] sm:$0xff]
          %v3144 = vld [vmem:[#allocation20 + $0x28] sm:$0xff]
          %v3145 = vld [vmem:[#allocation20 + $0x30] sm:$0xff]
          %v3146 = vld [vmem:[#allocation20 + $0x38] sm:$0xff]
          %v3147 = vld [vmem:[#allocation20 + $0x40] sm:$0xff]
          %v3148 = vld [vmem:[#allocation20 + $0x48] sm:$0xff]
          %v3149 = vld [vmem:[#allocation20 + $0x50] sm:$0xff]
          %v3150 = vld [vmem:[#allocation20 + $0x58] sm:$0xff]
          %v3151 = vld [vmem:[#allocation20 + $0x60] sm:$0xff]
          %v3152 = vld [vmem:[#allocation20 + $0x68] sm:$0xff]
          %v3153 = vld [vmem:[#allocation20 + $0x70] sm:$0xff]
          %v3154 = vld [vmem:[#allocation20 + $0x78] sm:$0xff]
          %3155 = vmatprep.subr.mxu0 0.0
          %3156 = vmatpush1.msra.mxu0 %v3139
          %3157 = vmatprep.subr.mxu0 0.0
          %3158 = vmatpush1.msra.mxu0 %v3140
          %3159 = vmatprep.subr.mxu0 0.0
          %3160 = vmatpush1.msra.mxu0 %v3141
          %3161 = vmatprep.subr.mxu0 0.0
          %3162 = vmatpush1.msra.mxu0 %v3142
          %3163 = vmatprep.subr.mxu0 0.0
          %3164 = vmatpush1.msra.mxu0 %v3143
          %3165 = vmatprep.subr.mxu0 0.0
          %3166 = vmatpush1.msra.mxu0 %v3144
          %3167 = vmatprep.subr.mxu0 0.0
          %3168 = vmatpush1.msra.mxu0 %v3145
          %3169 = vmatprep.subr.mxu0 0.0
          %3170 = vmatpush1.msra.mxu0 %v3146
          %3171 = vmatprep.subr.mxu0 0.0
          %3172 = vmatpush1.msra.mxu0 %v3147
          %3173 = vmatprep.subr.mxu0 0.0
          %3174 = vmatpush1.msra.mxu0 %v3148
          %3175 = vmatprep.subr.mxu0 0.0
          %3176 = vmatpush1.msra.mxu0 %v3149
          %3177 = vmatprep.subr.mxu0 0.0
          %3178 = vmatpush1.msra.mxu0 %v3150
          %3179 = vmatprep.subr.mxu0 0.0
          %3180 = vmatpush1.msra.mxu0 %v3151
          %3181 = vmatprep.subr.mxu0 0.0
          %3182 = vmatpush1.msra.mxu0 %v3152
          %3183 = vmatprep.subr.mxu0 0.0
          %3184 = vmatpush1.msra.mxu0 %v3153
          %3185 = vmatprep.subr.mxu0 0.0
          %3186 = vmatpush1.msra.mxu0 %v3154
          %3187 = vmatprep.subr.mxu0 0.0
          %3188 = vmatpush1.msra.mxu0 0.0
          %3189 = vmatprep.subr.mxu0 0.0
          %3190 = vmatpush1.msra.mxu0 0.0
          %3191 = vmatprep.subr.mxu0 0.0
          %3192 = vmatpush1.msra.mxu0 0.0
          %3193 = vmatprep.subr.mxu0 0.0
          %3194 = vmatpush1.msra.mxu0 0.0
          %3195 = vmatprep.subr.mxu0 0.0
          %3196 = vmatpush1.msra.mxu0 0.0
          %3197 = vmatprep.subr.mxu0 0.0
          %3198 = vmatpush1.msra.mxu0 0.0
          %3199 = vmatprep.subr.mxu0 0.0
          %3200 = vmatpush1.msra.mxu0 0.0
          %3201 = vmatprep.subr.mxu0 0.0
          %3202 = vmatpush1.msra.mxu0 0.0
          %3203 = vmatprep.subr.mxu0 0.0
          %3204 = vmatpush1.msra.mxu0 0.0
          %3205 = vmatprep.subr.mxu0 0.0
          %3206 = vmatpush1.msra.mxu0 0.0
          %3207 = vmatprep.subr.mxu0 0.0
          %3208 = vmatpush1.msra.mxu0 0.0
          %3209 = vmatprep.subr.mxu0 0.0
          %3210 = vmatpush1.msra.mxu0 0.0
          %3211 = vmatprep.subr.mxu0 0.0
          %3212 = vmatpush1.msra.mxu0 0.0
          %3213 = vmatprep.subr.mxu0 0.0
          %3214 = vmatpush1.msra.mxu0 0.0
          %3215 = vmatprep.subr.mxu0 0.0
          %3216 = vmatpush1.msra.mxu0 0.0
          %3217 = vmatprep.subr.mxu0 0.0
          %3218 = vmatpush1.msra.mxu0 0.0
          %3219 = vmatprep.mubr.f32.mxu0 0.0
          %3220 = vmatmul.mubr.f32.gmra.mrb[0].mxu0 %v3109
          %v3221 = vpop.f32.mrb[0].mxu0
          %v3222 = vadd.f32 0.0, %v3221
          %v3223 = vpop.f32.mrb[0].mxu0
          %3224 = vmatprep.mubr.f32.mxu0 0.0
          %3225 = vmatmul.mubr.f32.gmra.mrb[0].mxu0 %v3110
          %v3226 = vpop.f32.mrb[0].mxu0
          %v3227 = vadd.f32 0.0, %v3226
          %v3228 = vpop.f32.mrb[0].mxu0
          %3229 = vdwg.mxu0
          %3230 = vmatprep.subr.mxu0 0.0
          %3231 = vmatpush1.msra.mxu0 %v3123
          %3232 = vmatprep.subr.mxu0 0.0
          %3233 = vmatpush1.msra.mxu0 %v3124
          %3234 = vmatprep.subr.mxu0 0.0
          %3235 = vmatpush1.msra.mxu0 %v3125
          %3236 = vmatprep.subr.mxu0 0.0
          %3237 = vmatpush1.msra.mxu0 %v3126
          %3238 = vmatprep.subr.mxu0 0.0
          %3239 = vmatpush1.msra.mxu0 %v3127
          %3240 = vmatprep.subr.mxu0 0.0
          %3241 = vmatpush1.msra.mxu0 %v3128
          %3242 = vmatprep.subr.mxu0 0.0
          %3243 = vmatpush1.msra.mxu0 %v3129
          %3244 = vmatprep.subr.mxu0 0.0
          %3245 = vmatpush1.msra.mxu0 %v3130
          %3246 = vmatprep.subr.mxu0 0.0
          %3247 = vmatpush1.msra.mxu0 %v3131
          %3248 = vmatprep.subr.mxu0 0.0
          %3249 = vmatpush1.msra.mxu0 %v3132
          %3250 = vmatprep.subr.mxu0 0.0
          %3251 = vmatpush1.msra.mxu0 %v3133
          %3252 = vmatprep.subr.mxu0 0.0
          %3253 = vmatpush1.msra.mxu0 %v3134
          %3254 = vmatprep.subr.mxu0 0.0
          %3255 = vmatpush1.msra.mxu0 %v3135
          %3256 = vmatprep.subr.mxu0 0.0
          %3257 = vmatpush1.msra.mxu0 %v3136
          %3258 = vmatprep.subr.mxu0 0.0
          %3259 = vmatpush1.msra.mxu0 %v3137
          %3260 = vmatprep.subr.mxu0 0.0
          %3261 = vmatpush1.msra.mxu0 %v3138
          %3262 = vmatprep.subr.mxu0 0.0
          %3263 = vmatpush1.msra.mxu0 0.0
          %3264 = vmatprep.subr.mxu0 0.0
          %3265 = vmatpush1.msra.mxu0 0.0
          %3266 = vmatprep.subr.mxu0 0.0
          %3267 = vmatpush1.msra.mxu0 0.0
          %3268 = vmatprep.subr.mxu0 0.0
          %3269 = vmatpush1.msra.mxu0 0.0
          %3270 = vmatprep.subr.mxu0 0.0
          %3271 = vmatpush1.msra.mxu0 0.0
          %3272 = vmatprep.subr.mxu0 0.0
          %3273 = vmatpush1.msra.mxu0 0.0
          %3274 = vmatprep.subr.mxu0 0.0
          %3275 = vmatpush1.msra.mxu0 0.0
          %3276 = vmatprep.subr.mxu0 0.0
          %3277 = vmatpush1.msra.mxu0 0.0
          %3278 = vmatprep.subr.mxu0 0.0
          %3279 = vmatpush1.msra.mxu0 0.0
          %3280 = vmatprep.subr.mxu0 0.0
          %3281 = vmatpush1.msra.mxu0 0.0
          %3282 = vmatprep.subr.mxu0 0.0
          %3283 = vmatpush1.msra.mxu0 0.0
          %3284 = vmatprep.subr.mxu0 0.0
          %3285 = vmatpush1.msra.mxu0 0.0
          %3286 = vmatprep.subr.mxu0 0.0
          %3287 = vmatpush1.msra.mxu0 0.0
          %3288 = vmatprep.subr.mxu0 0.0
          %3289 = vmatpush1.msra.mxu0 0.0
          %3290 = vmatprep.subr.mxu0 0.0
          %3291 = vmatpush1.msra.mxu0 0.0
          %3292 = vmatprep.subr.mxu0 0.0
          %3293 = vmatpush1.msra.mxu0 0.0
          %3294 = vmatprep.mubr.f32.mxu0 0.0
          %3295 = vmatmul.mubr.f32.gmra.mrb[0].mxu0 %v3061
          %v3296 = vpop.f32.mrb[0].mxu0
          %v3297 = vadd.f32 %v3222, %v3296
          %v3298 = vpop.f32.mrb[0].mxu0
          %3299 = vmatprep.mubr.f32.mxu0 0.0
          %3300 = vmatmul.mubr.f32.gmra.mrb[0].mxu0 %v3062
          %v3301 = vpop.f32.mrb[0].mxu0
          %v3302 = vadd.f32 %v3227, %v3301
          %v3303 = vpop.f32.mrb[0].mxu0
          %3304 = vdwg.mxu0
          %v3305 = vld [vmem:[%s10] sm:$0x1]
          %v3307 = vlaneseq
          %v3308 = vshrl.u32 %v3307, 7
          %v3309 = vsub.s32 0, %v3308
          %v3310 = vrot.slane %v3305, %v3309
          %v3312 = vadd.f32 %v3297, %v3310
          %v3313 = vadd.f32 %v3302, %v3310
          %3314 = vst [vmem:[#allocation22] sm:$0xff] %v3312
          %3315 = vst [vmem:[#allocation22 + $0x8] sm:$0xff] %v3313
        $region104: #{tpu_custom_call.1} parent=63 // pred_fallthru
          _
        // Predicated region
        $region105: #{tpu_custom_call.1} parent=63 // pred_check
          %p3316 = pneg %p309
        $region106: #{tpu_custom_call.1} parent=63 // pred_check_branch
          %3318 = sbr.rel (%p3316) target = $region108
        $region107: #{tpu_custom_call.1} parent=63 // pred_region
          %s3319 = smul.u32 2, %s36
          %s3321 = ssub.s32 256, 256
          %3322 = vsyncadd [#allocation10], %s3321
          %s3323 = smul.addr %s3319, 128
          %s3324 = scalar_lea.hbm %s11, %s3323
          %s3325 = sshll.u32 [#allocation22], 4
          %s3326 = int_to_ptr.vmem [resolvable:$true] %s3325
          %3331 = dma.vmem_to_hbm [thread:$0]  %s3326, 256, %s3324, [#allocation10], 128, 128, 8
        $region108: #{tpu_custom_call.1} parent=63 // pred_fallthru
          _
        // Predicated region
        $region109: #{tpu_custom_call.1} parent=63 // pred_check
          %p3332 = pneg %p309
        $region110: #{tpu_custom_call.1} parent=63 // pred_check_branch
          %3334 = sbr.rel (%p3332) target = $region112
        $region111: #{tpu_custom_call.1} parent=63 // pred_region
          %3335 = dma.done [#allocation10], 256
        $region112: #{tpu_custom_call.1} parent=63 // pred_fallthru
          _
      $region64: #{tpu_custom_call.1} parent=5 // pred_fallthru
        _
      %p3336 = scmp.le.s32.totalorder 2, %s27
      // Predicated region
      $region113: #{tpu_custom_call.1} parent=5 // pred_check
        %p3337 = pneg %p3336
      $region114: #{tpu_custom_call.1} parent=5 // pred_check_branch
        %3339 = sbr.rel (%p3337) target = $region116
      $region115: #{tpu_custom_call.1} parent=5 // pred_region
        %s3340 = ssub.s32 %s27, 2
      $region116: #{tpu_custom_call.1} parent=5 // pred_fallthru
        _
    $region6: #{tpu_custom_call.1} parent=1 // loop_footer
      %s31 = sadd.s32 1, %s27
    $region7: #{tpu_custom_call.1} parent=1 // loop_footer_branch
      %26 = sbr.rel target = $region3
    $region8: #{tpu_custom_call.1} parent=1 // loop_exit
      _
    %3341 = vsyncpa [#allocation9], 1
    %s3342 = scalar_lea.sflag [#allocation9], 1
    %3343 = vsyncpa %s3342, 1
    %3344 = vsyncpa [#allocation12], 1
    %s3345 = scalar_lea.sflag [#allocation12], 1
    %3346 = vsyncpa %s3345, 1
    %3347 = vsyncpa [#allocation15], 1
    %3348 = vsyncpa [#allocation18], 1
    %3349 = vsyncpa [#allocation21], 1
    %3350 = vsyncpa [#allocation10], 1
    %s3351 = scalar_lea.sflag [#allocation10], 1
    %3352 = vsyncpa %s3351, 1

</llo_original>
